<compile_context>
chip_gen: v7x
topology: tpu7x:2x2x1
jax: 0.10.0
libtpu: 0.0.40
codegen_flags: <defaults>
</compile_context>

<pallas_src>
import jax
import jax.numpy as jnp
from jax import lax
from jax.experimental import pallas as pl
from jax.experimental.pallas import tpu as pltpu


def seq2seq_kernel(tokens_ref, sos_ref, emb_ref,
                   wx_ref, bx_ref, wh_ref, bh_ref,
                   wih_ref, whh_ref, bdec_ref,
                   wout_ref, bout_ref,
                   pred_ref, prob_ref):
    S = tokens_ref.shape[0]
    V, E = emb_ref.shape
    H = whh_ref.shape[0]
    H3 = wh_ref.shape[1]        # 3 * H

    # ------------------------------------------------------------------
    # Encoder input path (no dependence on h): batched, outside the loop.
    #   X  = relu(onehot(tokens) @ emb)            (S, E)
    #   GX = X @ W_x + b_x                         (S, 3H)
    # ------------------------------------------------------------------
    ids_sv = lax.broadcasted_iota(jnp.int32, (S, V), 1)
    onehot = (ids_sv == tokens_ref[...]).astype(jnp.float32)          # (S, V)
    x_all = jnp.maximum(
        jnp.dot(onehot, emb_ref[...], preferred_element_type=jnp.float32), 0.0)
    gx_all = (jnp.dot(x_all, wx_ref[...], preferred_element_type=jnp.float32)
              + bx_ref[...])                                           # (S, 3H)

    # ------------------------------------------------------------------
    # Encoder recurrence: nn.GRU (gate order r, z, n), fully unrolled.
    # Only the h-side fused matmul sits on the serial chain.
    # ------------------------------------------------------------------
    wh = wh_ref[...]
    bh = bh_ref[...]
    h = jnp.zeros((1, H), jnp.float32)
    for i in range(S):
        gx = gx_all[i:i + 1, :]                                        # (1, 3H)
        gh = jnp.dot(h, wh, preferred_element_type=jnp.float32) + bh   # (1, 3H)
        rz = jax.nn.sigmoid(gx[:, :2 * H] + gh[:, :2 * H])             # one EUP push
        r = rz[:, :H]
        z = rz[:, H:]
        n = jnp.tanh(gx[:, 2 * H:] + r * gh[:, 2 * H:])
        h = (1.0 - z) * n + z * h

    # ------------------------------------------------------------------
    # Decoder: nn.RNN (tanh) + Linear + ReLU, greedy argmax feedback.
    # ------------------------------------------------------------------
    wih = wih_ref[...]
    whh = whh_ref[...]
    bdec = bdec_ref[...]
    wout = wout_ref[...]
    bout = bout_ref[...]
    lane_ids = lax.broadcasted_iota(jnp.int32, (1, V), 1)

    pred_ref[0] = sos_ref[0]
    rows = []
    for di in range(S):
        tok = pred_ref[di]                              # scalar (SMEM)
        x = emb_ref[pl.ds(tok, 1), :]                   # (1, E) dynamic row load
        h = jnp.tanh(jnp.dot(x, wih, preferred_element_type=jnp.float32)
                     + jnp.dot(h, whh, preferred_element_type=jnp.float32)
                     + bdec)
        out = jnp.maximum(
            jnp.dot(h, wout, preferred_element_type=jnp.float32) + bout, 0.0)
        rows.append(out)
        # topk(1) on the ReLU'd logits: first index of the max (tie -> lowest).
        m = jnp.max(out, axis=-1, keepdims=True)
        idx = jnp.min(jnp.where(out >= m, lane_ids, V), axis=-1)[0]
        pred_ref[di + 1] = idx

    prob_ref[...] = jnp.concatenate(rows, axis=0)       # single (S, V) store


def seq2seq_forward(tokens, sos_id, params):
    """tokens: (B=1, S) int32; returns (pred (1, S+1) int32, pred_prob (1, S, V) f32)."""
    B, S = tokens.shape
    assert B == 1, "Seq2SeqModel's .view(1, 1, -1) implies batch size 1"
    V, _ = params["emb"].shape

    # Host-side gate fusion (PyTorch GRU gate order r, z, n), input-major.
    wx = jnp.concatenate([params["wir"], params["wiz"], params["win"]], axis=1)
    wh = jnp.concatenate([params["whr"], params["whz"], params["whn"]], axis=1)
    bx = jnp.concatenate([params["bir"], params["biz"], params["bin"]], axis=1)
    bh = jnp.concatenate([params["bhr"], params["bhz"], params["bhn"]], axis=1)
    bdec = params["bihd"] + params["bhhd"]

    smem = pl.BlockSpec(memory_space=pltpu.MemorySpace.SMEM)
    vmem = pl.BlockSpec(memory_space=pltpu.MemorySpace.VMEM)

    vmem_args = [params["emb"], wx, bx, wh, bh,
                 params["wihd"], params["whhd"], bdec,
                 params["wout"], params["bout"]]

    pred, prob = pl.pallas_call(
        seq2seq_kernel,
        out_shape=(jax.ShapeDtypeStruct((S + 1,), jnp.int32),
                   jax.ShapeDtypeStruct((S, V), jnp.float32)),
        in_specs=[vmem, smem] + [vmem] * len(vmem_args),
        out_specs=(smem, vmem),
    )(tokens.reshape(S, 1).astype(jnp.int32),
      jnp.array([sos_id], dtype=jnp.int32),
      *vmem_args)

    return pred.reshape(B, S + 1), prob.reshape(B, S, V)


def init_params(key, vocab_size, embed_dim, hidden_dim):
    ks = iter(jax.random.split(key, 32))

    def init(shape, scale=0.1):
        return jax.random.normal(next(ks), shape, jnp.float32) * scale

    V, E, H = vocab_size, embed_dim, hidden_dim
    return dict(
        emb=init((V, E)),
        # Encoder GRU gates (PyTorch order r, z, n), stored input-major.
        wir=init((E, H)), wiz=init((E, H)), win=init((E, H)),
        whr=init((H, H)), whz=init((H, H)), whn=init((H, H)),
        bir=init((1, H)), biz=init((1, H)), bin=init((1, H)),
        bhr=init((1, H)), bhz=init((1, H)), bhn=init((1, H)),
        # Decoder tanh RNN.
        wihd=init((E, H)), whhd=init((H, H)),
        bihd=init((1, H)), bhhd=init((1, H)),
        # Output Linear hidden -> vocab.
        wout=init((H, V)), bout=init((1, V)),
    )


if __name__ == "__main__":
    # Small shapes consistent with the module: B=1 (forced by .view(1,1,-1)),
    # seq=8, embed_dim=32, hidden_dim=32, vocab_size=128, <SOS> id = 1.
    B, S, V, E, H = 1, 8, 128, 32, 32
    SOS_ID = 1

    key = jax.random.PRNGKey(0)
    pkey, tkey = jax.random.split(key)
    params = init_params(pkey, V, E, H)
    tokens = jax.random.randint(tkey, (B, S), 0, V, dtype=jnp.int32)
    # lengths analogue: inputs[1][0] == S (full sequence used in both loops).
    # TODO(synk): dropout (p=0.05) is defined but never applied in the reference
    # forward, so it is intentionally omitted here as well.

    pred, pred_prob = seq2seq_forward(tokens, SOS_ID, params)
    jax.block_until_ready((pred, pred_prob))

    assert pred.shape == (B, S + 1) and pred.dtype == jnp.int32
    assert pred_prob.shape == (B, S, V) and pred_prob.dtype == jnp.float32
    assert int(pred[0, 0]) == SOS_ID
    print("KERNEL_OK")
</pallas_src>

<mosaic_0001>
module attributes {stable_mosaic.version = 11 : i64} {
  func.func @seq2seq_kernel(%arg0: memref<8x1xi32, #tpu.memory_space<vmem>>, %arg1: memref<1xi32, #tpu.memory_space<smem>>, %arg2: memref<128x32xf32, #tpu.memory_space<vmem>>, %arg3: memref<32x96xf32, #tpu.memory_space<vmem>>, %arg4: memref<1x96xf32, #tpu.memory_space<vmem>>, %arg5: memref<32x96xf32, #tpu.memory_space<vmem>>, %arg6: memref<1x96xf32, #tpu.memory_space<vmem>>, %arg7: memref<32x32xf32, #tpu.memory_space<vmem>>, %arg8: memref<32x32xf32, #tpu.memory_space<vmem>>, %arg9: memref<1x32xf32, #tpu.memory_space<vmem>>, %arg10: memref<32x128xf32, #tpu.memory_space<vmem>>, %arg11: memref<1x128xf32, #tpu.memory_space<vmem>>, %arg12: memref<9xi32, #tpu.memory_space<smem>>, %arg13: memref<8x128xf32, #tpu.memory_space<vmem>>) attributes {dimension_semantics = [], scalar_prefetch = 0 : i64, scratch_operands = 0 : i64, tpu.core_type = #tpu.core_type<tc>} {
    %0 = tpu.iota {dimensions = array<i32: 1>} : vector<8x128xi32>
    %c0 = arith.constant 0 : index
    %c0_0 = arith.constant 0 : index
    %1 = vector.load %arg0[%c0, %c0_0] : memref<8x1xi32, #tpu.memory_space<vmem>>, vector<8x1xi32>
    %2 = vector.broadcast %1 : vector<8x1xi32> to vector<8x128xi32>
    %3 = arith.cmpi eq, %0, %2 : vector<8x128xi32>
    %4 = arith.extui %3 : vector<8x128xi1> to vector<8x128xi32>
    %5 = arith.sitofp %4 : vector<8x128xi32> to vector<8x128xf32>
    %c0_1 = arith.constant 0 : index
    %c0_2 = arith.constant 0 : index
    %6 = vector.load %arg2[%c0_1, %c0_2] : memref<128x32xf32, #tpu.memory_space<vmem>>, vector<128x32xf32>
    %cst = arith.constant dense<0.000000e+00> : vector<8x32xf32>
    %7 = tpu.matmul %5, %6, %cst {dimension_numbers = #tpu.dot_dimension_numbers<[1], [0], [0], [1], [0, 0, 1, 1], [], []>} : vector<8x128xf32>, vector<128x32xf32>, vector<8x32xf32> -> vector<8x32xf32>
    %cst_3 = arith.constant 0.000000e+00 : f32
    %8 = vector.broadcast %cst_3 : f32 to vector<8x32xf32>
    %9 = arith.maximumf %7, %8 : vector<8x32xf32>
    %c0_4 = arith.constant 0 : index
    %c0_5 = arith.constant 0 : index
    %10 = vector.load %arg3[%c0_4, %c0_5] : memref<32x96xf32, #tpu.memory_space<vmem>>, vector<32x96xf32>
    %cst_6 = arith.constant dense<0.000000e+00> : vector<8x96xf32>
    %11 = tpu.matmul %9, %10, %cst_6 {dimension_numbers = #tpu.dot_dimension_numbers<[1], [0], [0], [1], [0, 0, 1, 1], [], []>} : vector<8x32xf32>, vector<32x96xf32>, vector<8x96xf32> -> vector<8x96xf32>
    %c0_7 = arith.constant 0 : index
    %c0_8 = arith.constant 0 : index
    %12 = vector.load %arg4[%c0_7, %c0_8] : memref<1x96xf32, #tpu.memory_space<vmem>>, vector<1x96xf32>
    %13 = vector.broadcast %12 : vector<1x96xf32> to vector<8x96xf32>
    %14 = arith.addf %11, %13 : vector<8x96xf32>
    %c0_9 = arith.constant 0 : index
    %c0_10 = arith.constant 0 : index
    %15 = vector.load %arg5[%c0_9, %c0_10] : memref<32x96xf32, #tpu.memory_space<vmem>>, vector<32x96xf32>
    %c0_11 = arith.constant 0 : index
    %c0_12 = arith.constant 0 : index
    %16 = vector.load %arg6[%c0_11, %c0_12] : memref<1x96xf32, #tpu.memory_space<vmem>>, vector<1x96xf32>
    %cst_13 = arith.constant 0.000000e+00 : f32
    %17 = vector.broadcast %cst_13 : f32 to vector<1x32xf32>
    %18 = vector.extract_strided_slice %14 {offsets = [0, 0], sizes = [1, 96], strides = [1, 1]} : vector<8x96xf32> to vector<1x96xf32>
    %cst_14 = arith.constant dense<0.000000e+00> : vector<1x96xf32>
    %19 = tpu.matmul %17, %15, %cst_14 {dimension_numbers = #tpu.dot_dimension_numbers<[1], [0], [0], [1], [0, 0, 1, 1], [], []>} : vector<1x32xf32>, vector<32x96xf32>, vector<1x96xf32> -> vector<1x96xf32>
    %20 = arith.addf %19, %16 : vector<1x96xf32>
    %21 = vector.extract_strided_slice %18 {offsets = [0, 0], sizes = [1, 64], strides = [1, 1]} : vector<1x96xf32> to vector<1x64xf32>
    %22 = vector.extract_strided_slice %20 {offsets = [0, 0], sizes = [1, 64], strides = [1, 1]} : vector<1x96xf32> to vector<1x64xf32>
    %23 = arith.addf %21, %22 : vector<1x64xf32>
    %24 = arith.negf %23 : vector<1x64xf32>
    %25 = math.exp %24 : vector<1x64xf32>
    %cst_15 = arith.constant 1.000000e+00 : f32
    %26 = vector.broadcast %cst_15 : f32 to vector<1x64xf32>
    %27 = arith.addf %26, %25 : vector<1x64xf32>
    %28 = arith.divf %26, %27 : vector<1x64xf32>
    %29 = vector.extract_strided_slice %28 {offsets = [0, 0], sizes = [1, 32], strides = [1, 1]} : vector<1x64xf32> to vector<1x32xf32>
    %30 = vector.extract_strided_slice %28 {offsets = [0, 32], sizes = [1, 32], strides = [1, 1]} : vector<1x64xf32> to vector<1x32xf32>
    %31 = vector.extract_strided_slice %18 {offsets = [0, 64], sizes = [1, 32], strides = [1, 1]} : vector<1x96xf32> to vector<1x32xf32>
    %32 = vector.extract_strided_slice %20 {offsets = [0, 64], sizes = [1, 32], strides = [1, 1]} : vector<1x96xf32> to vector<1x32xf32>
    %33 = arith.mulf %29, %32 : vector<1x32xf32>
    %34 = arith.addf %31, %33 : vector<1x32xf32>
    %35 = math.tanh %34 : vector<1x32xf32>
    %cst_16 = arith.constant 1.000000e+00 : f32
    %36 = vector.broadcast %cst_16 : f32 to vector<1x32xf32>
    %37 = arith.subf %36, %30 : vector<1x32xf32>
    %38 = arith.mulf %37, %35 : vector<1x32xf32>
    %39 = arith.mulf %30, %17 : vector<1x32xf32>
    %40 = arith.addf %38, %39 : vector<1x32xf32>
    %41 = vector.extract_strided_slice %14 {offsets = [1, 0], sizes = [1, 96], strides = [1, 1]} : vector<8x96xf32> to vector<1x96xf32>
    %cst_17 = arith.constant dense<0.000000e+00> : vector<1x96xf32>
    %42 = tpu.matmul %40, %15, %cst_17 {dimension_numbers = #tpu.dot_dimension_numbers<[1], [0], [0], [1], [0, 0, 1, 1], [], []>} : vector<1x32xf32>, vector<32x96xf32>, vector<1x96xf32> -> vector<1x96xf32>
    %43 = arith.addf %42, %16 : vector<1x96xf32>
    %44 = vector.extract_strided_slice %41 {offsets = [0, 0], sizes = [1, 64], strides = [1, 1]} : vector<1x96xf32> to vector<1x64xf32>
    %45 = vector.extract_strided_slice %43 {offsets = [0, 0], sizes = [1, 64], strides = [1, 1]} : vector<1x96xf32> to vector<1x64xf32>
    %46 = arith.addf %44, %45 : vector<1x64xf32>
    %47 = arith.negf %46 : vector<1x64xf32>
    %48 = math.exp %47 : vector<1x64xf32>
    %cst_18 = arith.constant 1.000000e+00 : f32
    %49 = vector.broadcast %cst_18 : f32 to vector<1x64xf32>
    %50 = arith.addf %49, %48 : vector<1x64xf32>
    %51 = arith.divf %49, %50 : vector<1x64xf32>
    %52 = vector.extract_strided_slice %51 {offsets = [0, 0], sizes = [1, 32], strides = [1, 1]} : vector<1x64xf32> to vector<1x32xf32>
    %53 = vector.extract_strided_slice %51 {offsets = [0, 32], sizes = [1, 32], strides = [1, 1]} : vector<1x64xf32> to vector<1x32xf32>
    %54 = vector.extract_strided_slice %41 {offsets = [0, 64], sizes = [1, 32], strides = [1, 1]} : vector<1x96xf32> to vector<1x32xf32>
    %55 = vector.extract_strided_slice %43 {offsets = [0, 64], sizes = [1, 32], strides = [1, 1]} : vector<1x96xf32> to vector<1x32xf32>
    %56 = arith.mulf %52, %55 : vector<1x32xf32>
    %57 = arith.addf %54, %56 : vector<1x32xf32>
    %58 = math.tanh %57 : vector<1x32xf32>
    %cst_19 = arith.constant 1.000000e+00 : f32
    %59 = vector.broadcast %cst_19 : f32 to vector<1x32xf32>
    %60 = arith.subf %59, %53 : vector<1x32xf32>
    %61 = arith.mulf %60, %58 : vector<1x32xf32>
    %62 = arith.mulf %53, %40 : vector<1x32xf32>
    %63 = arith.addf %61, %62 : vector<1x32xf32>
    %64 = vector.extract_strided_slice %14 {offsets = [2, 0], sizes = [1, 96], strides = [1, 1]} : vector<8x96xf32> to vector<1x96xf32>
    %cst_20 = arith.constant dense<0.000000e+00> : vector<1x96xf32>
    %65 = tpu.matmul %63, %15, %cst_20 {dimension_numbers = #tpu.dot_dimension_numbers<[1], [0], [0], [1], [0, 0, 1, 1], [], []>} : vector<1x32xf32>, vector<32x96xf32>, vector<1x96xf32> -> vector<1x96xf32>
    %66 = arith.addf %65, %16 : vector<1x96xf32>
    %67 = vector.extract_strided_slice %64 {offsets = [0, 0], sizes = [1, 64], strides = [1, 1]} : vector<1x96xf32> to vector<1x64xf32>
    %68 = vector.extract_strided_slice %66 {offsets = [0, 0], sizes = [1, 64], strides = [1, 1]} : vector<1x96xf32> to vector<1x64xf32>
    %69 = arith.addf %67, %68 : vector<1x64xf32>
    %70 = arith.negf %69 : vector<1x64xf32>
    %71 = math.exp %70 : vector<1x64xf32>
    %cst_21 = arith.constant 1.000000e+00 : f32
    %72 = vector.broadcast %cst_21 : f32 to vector<1x64xf32>
    %73 = arith.addf %72, %71 : vector<1x64xf32>
    %74 = arith.divf %72, %73 : vector<1x64xf32>
    %75 = vector.extract_strided_slice %74 {offsets = [0, 0], sizes = [1, 32], strides = [1, 1]} : vector<1x64xf32> to vector<1x32xf32>
    %76 = vector.extract_strided_slice %74 {offsets = [0, 32], sizes = [1, 32], strides = [1, 1]} : vector<1x64xf32> to vector<1x32xf32>
    %77 = vector.extract_strided_slice %64 {offsets = [0, 64], sizes = [1, 32], strides = [1, 1]} : vector<1x96xf32> to vector<1x32xf32>
    %78 = vector.extract_strided_slice %66 {offsets = [0, 64], sizes = [1, 32], strides = [1, 1]} : vector<1x96xf32> to vector<1x32xf32>
    %79 = arith.mulf %75, %78 : vector<1x32xf32>
    %80 = arith.addf %77, %79 : vector<1x32xf32>
    %81 = math.tanh %80 : vector<1x32xf32>
    %cst_22 = arith.constant 1.000000e+00 : f32
    %82 = vector.broadcast %cst_22 : f32 to vector<1x32xf32>
    %83 = arith.subf %82, %76 : vector<1x32xf32>
    %84 = arith.mulf %83, %81 : vector<1x32xf32>
    %85 = arith.mulf %76, %63 : vector<1x32xf32>
    %86 = arith.addf %84, %85 : vector<1x32xf32>
    %87 = vector.extract_strided_slice %14 {offsets = [3, 0], sizes = [1, 96], strides = [1, 1]} : vector<8x96xf32> to vector<1x96xf32>
    %cst_23 = arith.constant dense<0.000000e+00> : vector<1x96xf32>
    %88 = tpu.matmul %86, %15, %cst_23 {dimension_numbers = #tpu.dot_dimension_numbers<[1], [0], [0], [1], [0, 0, 1, 1], [], []>} : vector<1x32xf32>, vector<32x96xf32>, vector<1x96xf32> -> vector<1x96xf32>
    %89 = arith.addf %88, %16 : vector<1x96xf32>
    %90 = vector.extract_strided_slice %87 {offsets = [0, 0], sizes = [1, 64], strides = [1, 1]} : vector<1x96xf32> to vector<1x64xf32>
    %91 = vector.extract_strided_slice %89 {offsets = [0, 0], sizes = [1, 64], strides = [1, 1]} : vector<1x96xf32> to vector<1x64xf32>
    %92 = arith.addf %90, %91 : vector<1x64xf32>
    %93 = arith.negf %92 : vector<1x64xf32>
    %94 = math.exp %93 : vector<1x64xf32>
    %cst_24 = arith.constant 1.000000e+00 : f32
    %95 = vector.broadcast %cst_24 : f32 to vector<1x64xf32>
    %96 = arith.addf %95, %94 : vector<1x64xf32>
    %97 = arith.divf %95, %96 : vector<1x64xf32>
    %98 = vector.extract_strided_slice %97 {offsets = [0, 0], sizes = [1, 32], strides = [1, 1]} : vector<1x64xf32> to vector<1x32xf32>
    %99 = vector.extract_strided_slice %97 {offsets = [0, 32], sizes = [1, 32], strides = [1, 1]} : vector<1x64xf32> to vector<1x32xf32>
    %100 = vector.extract_strided_slice %87 {offsets = [0, 64], sizes = [1, 32], strides = [1, 1]} : vector<1x96xf32> to vector<1x32xf32>
    %101 = vector.extract_strided_slice %89 {offsets = [0, 64], sizes = [1, 32], strides = [1, 1]} : vector<1x96xf32> to vector<1x32xf32>
    %102 = arith.mulf %98, %101 : vector<1x32xf32>
    %103 = arith.addf %100, %102 : vector<1x32xf32>
    %104 = math.tanh %103 : vector<1x32xf32>
    %cst_25 = arith.constant 1.000000e+00 : f32
    %105 = vector.broadcast %cst_25 : f32 to vector<1x32xf32>
    %106 = arith.subf %105, %99 : vector<1x32xf32>
    %107 = arith.mulf %106, %104 : vector<1x32xf32>
    %108 = arith.mulf %99, %86 : vector<1x32xf32>
    %109 = arith.addf %107, %108 : vector<1x32xf32>
    %110 = vector.extract_strided_slice %14 {offsets = [4, 0], sizes = [1, 96], strides = [1, 1]} : vector<8x96xf32> to vector<1x96xf32>
    %cst_26 = arith.constant dense<0.000000e+00> : vector<1x96xf32>
    %111 = tpu.matmul %109, %15, %cst_26 {dimension_numbers = #tpu.dot_dimension_numbers<[1], [0], [0], [1], [0, 0, 1, 1], [], []>} : vector<1x32xf32>, vector<32x96xf32>, vector<1x96xf32> -> vector<1x96xf32>
    %112 = arith.addf %111, %16 : vector<1x96xf32>
    %113 = vector.extract_strided_slice %110 {offsets = [0, 0], sizes = [1, 64], strides = [1, 1]} : vector<1x96xf32> to vector<1x64xf32>
    %114 = vector.extract_strided_slice %112 {offsets = [0, 0], sizes = [1, 64], strides = [1, 1]} : vector<1x96xf32> to vector<1x64xf32>
    %115 = arith.addf %113, %114 : vector<1x64xf32>
    %116 = arith.negf %115 : vector<1x64xf32>
    %117 = math.exp %116 : vector<1x64xf32>
    %cst_27 = arith.constant 1.000000e+00 : f32
    %118 = vector.broadcast %cst_27 : f32 to vector<1x64xf32>
    %119 = arith.addf %118, %117 : vector<1x64xf32>
    %120 = arith.divf %118, %119 : vector<1x64xf32>
    %121 = vector.extract_strided_slice %120 {offsets = [0, 0], sizes = [1, 32], strides = [1, 1]} : vector<1x64xf32> to vector<1x32xf32>
    %122 = vector.extract_strided_slice %120 {offsets = [0, 32], sizes = [1, 32], strides = [1, 1]} : vector<1x64xf32> to vector<1x32xf32>
    %123 = vector.extract_strided_slice %110 {offsets = [0, 64], sizes = [1, 32], strides = [1, 1]} : vector<1x96xf32> to vector<1x32xf32>
    %124 = vector.extract_strided_slice %112 {offsets = [0, 64], sizes = [1, 32], strides = [1, 1]} : vector<1x96xf32> to vector<1x32xf32>
    %125 = arith.mulf %121, %124 : vector<1x32xf32>
    %126 = arith.addf %123, %125 : vector<1x32xf32>
    %127 = math.tanh %126 : vector<1x32xf32>
    %cst_28 = arith.constant 1.000000e+00 : f32
    %128 = vector.broadcast %cst_28 : f32 to vector<1x32xf32>
    %129 = arith.subf %128, %122 : vector<1x32xf32>
    %130 = arith.mulf %129, %127 : vector<1x32xf32>
    %131 = arith.mulf %122, %109 : vector<1x32xf32>
    %132 = arith.addf %130, %131 : vector<1x32xf32>
    %133 = vector.extract_strided_slice %14 {offsets = [5, 0], sizes = [1, 96], strides = [1, 1]} : vector<8x96xf32> to vector<1x96xf32>
    %cst_29 = arith.constant dense<0.000000e+00> : vector<1x96xf32>
    %134 = tpu.matmul %132, %15, %cst_29 {dimension_numbers = #tpu.dot_dimension_numbers<[1], [0], [0], [1], [0, 0, 1, 1], [], []>} : vector<1x32xf32>, vector<32x96xf32>, vector<1x96xf32> -> vector<1x96xf32>
    %135 = arith.addf %134, %16 : vector<1x96xf32>
    %136 = vector.extract_strided_slice %133 {offsets = [0, 0], sizes = [1, 64], strides = [1, 1]} : vector<1x96xf32> to vector<1x64xf32>
    %137 = vector.extract_strided_slice %135 {offsets = [0, 0], sizes = [1, 64], strides = [1, 1]} : vector<1x96xf32> to vector<1x64xf32>
    %138 = arith.addf %136, %137 : vector<1x64xf32>
    %139 = arith.negf %138 : vector<1x64xf32>
    %140 = math.exp %139 : vector<1x64xf32>
    %cst_30 = arith.constant 1.000000e+00 : f32
    %141 = vector.broadcast %cst_30 : f32 to vector<1x64xf32>
    %142 = arith.addf %141, %140 : vector<1x64xf32>
    %143 = arith.divf %141, %142 : vector<1x64xf32>
    %144 = vector.extract_strided_slice %143 {offsets = [0, 0], sizes = [1, 32], strides = [1, 1]} : vector<1x64xf32> to vector<1x32xf32>
    %145 = vector.extract_strided_slice %143 {offsets = [0, 32], sizes = [1, 32], strides = [1, 1]} : vector<1x64xf32> to vector<1x32xf32>
    %146 = vector.extract_strided_slice %133 {offsets = [0, 64], sizes = [1, 32], strides = [1, 1]} : vector<1x96xf32> to vector<1x32xf32>
    %147 = vector.extract_strided_slice %135 {offsets = [0, 64], sizes = [1, 32], strides = [1, 1]} : vector<1x96xf32> to vector<1x32xf32>
    %148 = arith.mulf %144, %147 : vector<1x32xf32>
    %149 = arith.addf %146, %148 : vector<1x32xf32>
    %150 = math.tanh %149 : vector<1x32xf32>
    %cst_31 = arith.constant 1.000000e+00 : f32
    %151 = vector.broadcast %cst_31 : f32 to vector<1x32xf32>
    %152 = arith.subf %151, %145 : vector<1x32xf32>
    %153 = arith.mulf %152, %150 : vector<1x32xf32>
    %154 = arith.mulf %145, %132 : vector<1x32xf32>
    %155 = arith.addf %153, %154 : vector<1x32xf32>
    %156 = vector.extract_strided_slice %14 {offsets = [6, 0], sizes = [1, 96], strides = [1, 1]} : vector<8x96xf32> to vector<1x96xf32>
    %cst_32 = arith.constant dense<0.000000e+00> : vector<1x96xf32>
    %157 = tpu.matmul %155, %15, %cst_32 {dimension_numbers = #tpu.dot_dimension_numbers<[1], [0], [0], [1], [0, 0, 1, 1], [], []>} : vector<1x32xf32>, vector<32x96xf32>, vector<1x96xf32> -> vector<1x96xf32>
    %158 = arith.addf %157, %16 : vector<1x96xf32>
    %159 = vector.extract_strided_slice %156 {offsets = [0, 0], sizes = [1, 64], strides = [1, 1]} : vector<1x96xf32> to vector<1x64xf32>
    %160 = vector.extract_strided_slice %158 {offsets = [0, 0], sizes = [1, 64], strides = [1, 1]} : vector<1x96xf32> to vector<1x64xf32>
    %161 = arith.addf %159, %160 : vector<1x64xf32>
    %162 = arith.negf %161 : vector<1x64xf32>
    %163 = math.exp %162 : vector<1x64xf32>
    %cst_33 = arith.constant 1.000000e+00 : f32
    %164 = vector.broadcast %cst_33 : f32 to vector<1x64xf32>
    %165 = arith.addf %164, %163 : vector<1x64xf32>
    %166 = arith.divf %164, %165 : vector<1x64xf32>
    %167 = vector.extract_strided_slice %166 {offsets = [0, 0], sizes = [1, 32], strides = [1, 1]} : vector<1x64xf32> to vector<1x32xf32>
    %168 = vector.extract_strided_slice %166 {offsets = [0, 32], sizes = [1, 32], strides = [1, 1]} : vector<1x64xf32> to vector<1x32xf32>
    %169 = vector.extract_strided_slice %156 {offsets = [0, 64], sizes = [1, 32], strides = [1, 1]} : vector<1x96xf32> to vector<1x32xf32>
    %170 = vector.extract_strided_slice %158 {offsets = [0, 64], sizes = [1, 32], strides = [1, 1]} : vector<1x96xf32> to vector<1x32xf32>
    %171 = arith.mulf %167, %170 : vector<1x32xf32>
    %172 = arith.addf %169, %171 : vector<1x32xf32>
    %173 = math.tanh %172 : vector<1x32xf32>
    %cst_34 = arith.constant 1.000000e+00 : f32
    %174 = vector.broadcast %cst_34 : f32 to vector<1x32xf32>
    %175 = arith.subf %174, %168 : vector<1x32xf32>
    %176 = arith.mulf %175, %173 : vector<1x32xf32>
    %177 = arith.mulf %168, %155 : vector<1x32xf32>
    %178 = arith.addf %176, %177 : vector<1x32xf32>
    %179 = vector.extract_strided_slice %14 {offsets = [7, 0], sizes = [1, 96], strides = [1, 1]} : vector<8x96xf32> to vector<1x96xf32>
    %cst_35 = arith.constant dense<0.000000e+00> : vector<1x96xf32>
    %180 = tpu.matmul %178, %15, %cst_35 {dimension_numbers = #tpu.dot_dimension_numbers<[1], [0], [0], [1], [0, 0, 1, 1], [], []>} : vector<1x32xf32>, vector<32x96xf32>, vector<1x96xf32> -> vector<1x96xf32>
    %181 = arith.addf %180, %16 : vector<1x96xf32>
    %182 = vector.extract_strided_slice %179 {offsets = [0, 0], sizes = [1, 64], strides = [1, 1]} : vector<1x96xf32> to vector<1x64xf32>
    %183 = vector.extract_strided_slice %181 {offsets = [0, 0], sizes = [1, 64], strides = [1, 1]} : vector<1x96xf32> to vector<1x64xf32>
    %184 = arith.addf %182, %183 : vector<1x64xf32>
    %185 = arith.negf %184 : vector<1x64xf32>
    %186 = math.exp %185 : vector<1x64xf32>
    %cst_36 = arith.constant 1.000000e+00 : f32
    %187 = vector.broadcast %cst_36 : f32 to vector<1x64xf32>
    %188 = arith.addf %187, %186 : vector<1x64xf32>
    %189 = arith.divf %187, %188 : vector<1x64xf32>
    %190 = vector.extract_strided_slice %189 {offsets = [0, 0], sizes = [1, 32], strides = [1, 1]} : vector<1x64xf32> to vector<1x32xf32>
    %191 = vector.extract_strided_slice %189 {offsets = [0, 32], sizes = [1, 32], strides = [1, 1]} : vector<1x64xf32> to vector<1x32xf32>
    %192 = vector.extract_strided_slice %179 {offsets = [0, 64], sizes = [1, 32], strides = [1, 1]} : vector<1x96xf32> to vector<1x32xf32>
    %193 = vector.extract_strided_slice %181 {offsets = [0, 64], sizes = [1, 32], strides = [1, 1]} : vector<1x96xf32> to vector<1x32xf32>
    %194 = arith.mulf %190, %193 : vector<1x32xf32>
    %195 = arith.addf %192, %194 : vector<1x32xf32>
    %196 = math.tanh %195 : vector<1x32xf32>
    %cst_37 = arith.constant 1.000000e+00 : f32
    %197 = vector.broadcast %cst_37 : f32 to vector<1x32xf32>
    %198 = arith.subf %197, %191 : vector<1x32xf32>
    %199 = arith.mulf %198, %196 : vector<1x32xf32>
    %200 = arith.mulf %191, %178 : vector<1x32xf32>
    %201 = arith.addf %199, %200 : vector<1x32xf32>
    %c0_38 = arith.constant 0 : index
    %c0_39 = arith.constant 0 : index
    %202 = vector.load %arg7[%c0_38, %c0_39] : memref<32x32xf32, #tpu.memory_space<vmem>>, vector<32x32xf32>
    %c0_40 = arith.constant 0 : index
    %c0_41 = arith.constant 0 : index
    %203 = vector.load %arg8[%c0_40, %c0_41] : memref<32x32xf32, #tpu.memory_space<vmem>>, vector<32x32xf32>
    %c0_42 = arith.constant 0 : index
    %c0_43 = arith.constant 0 : index
    %204 = vector.load %arg9[%c0_42, %c0_43] : memref<1x32xf32, #tpu.memory_space<vmem>>, vector<1x32xf32>
    %c0_44 = arith.constant 0 : index
    %c0_45 = arith.constant 0 : index
    %205 = vector.load %arg10[%c0_44, %c0_45] : memref<32x128xf32, #tpu.memory_space<vmem>>, vector<32x128xf32>
    %c0_46 = arith.constant 0 : index
    %c0_47 = arith.constant 0 : index
    %206 = vector.load %arg11[%c0_46, %c0_47] : memref<1x128xf32, #tpu.memory_space<vmem>>, vector<1x128xf32>
    %207 = tpu.iota {dimensions = array<i32: 1>} : vector<1x128xi32>
    %c0_48 = arith.constant 0 : index
    %208 = memref.load %arg1[%c0_48] : memref<1xi32, #tpu.memory_space<smem>>
    %c0_49 = arith.constant 0 : index
    %209 = memref.load %arg12[%c0_49] : memref<9xi32, #tpu.memory_space<smem>>
    memref.store %208, %arg12[%c0_49] : memref<9xi32, #tpu.memory_space<smem>>
    %c0_50 = arith.constant 0 : index
    %210 = memref.load %arg12[%c0_50] : memref<9xi32, #tpu.memory_space<smem>>
    %211 = arith.index_cast %210 : i32 to index
    %c0_51 = arith.constant 0 : index
    %212 = vector.load %arg2[%211, %c0_51] : memref<128x32xf32, #tpu.memory_space<vmem>>, vector<1x32xf32>
    %cst_52 = arith.constant dense<0.000000e+00> : vector<1x32xf32>
    %213 = tpu.matmul %212, %202, %cst_52 {dimension_numbers = #tpu.dot_dimension_numbers<[1], [0], [0], [1], [0, 0, 1, 1], [], []>} : vector<1x32xf32>, vector<32x32xf32>, vector<1x32xf32> -> vector<1x32xf32>
    %cst_53 = arith.constant dense<0.000000e+00> : vector<1x32xf32>
    %214 = tpu.matmul %201, %203, %cst_53 {dimension_numbers = #tpu.dot_dimension_numbers<[1], [0], [0], [1], [0, 0, 1, 1], [], []>} : vector<1x32xf32>, vector<32x32xf32>, vector<1x32xf32> -> vector<1x32xf32>
    %215 = arith.addf %213, %214 : vector<1x32xf32>
    %216 = arith.addf %215, %204 : vector<1x32xf32>
    %217 = math.tanh %216 : vector<1x32xf32>
    %cst_54 = arith.constant dense<0.000000e+00> : vector<1x128xf32>
    %218 = tpu.matmul %217, %205, %cst_54 {dimension_numbers = #tpu.dot_dimension_numbers<[1], [0], [0], [1], [0, 0, 1, 1], [], []>} : vector<1x32xf32>, vector<32x128xf32>, vector<1x128xf32> -> vector<1x128xf32>
    %219 = arith.addf %218, %206 : vector<1x128xf32>
    %cst_55 = arith.constant 0.000000e+00 : f32
    %220 = vector.broadcast %cst_55 : f32 to vector<1x128xf32>
    %221 = arith.maximumf %219, %220 : vector<1x128xf32>
    %cst_56 = arith.constant dense<0xFF800000> : vector<1xf32>
    %222 = vector.multi_reduction <maximumf>, %221, %cst_56 [1] : vector<1x128xf32> to vector<1xf32>
    %223 = vector.shape_cast %222 : vector<1xf32> to vector<1x1xf32>
    %224 = vector.broadcast %223 : vector<1x1xf32> to vector<1x128xf32>
    %225 = arith.cmpf oge, %221, %224 : vector<1x128xf32>
    %c128_i32 = arith.constant 128 : i32
    %226 = vector.broadcast %c128_i32 : i32 to vector<1x128xi32>
    %227 = arith.select %225, %207, %226 : vector<1x128xi1>, vector<1x128xi32>
    %cst_57 = arith.constant dense<2147483647> : vector<1xi32>
    %228 = vector.multi_reduction <minsi>, %227, %cst_57 [1] : vector<1x128xi32> to vector<1xi32>
    %229 = vector.extract %228[0] : i32 from vector<1xi32>
    %c1 = arith.constant 1 : index
    %230 = memref.load %arg12[%c1] : memref<9xi32, #tpu.memory_space<smem>>
    memref.store %229, %arg12[%c1] : memref<9xi32, #tpu.memory_space<smem>>
    %c1_58 = arith.constant 1 : index
    %231 = memref.load %arg12[%c1_58] : memref<9xi32, #tpu.memory_space<smem>>
    %232 = arith.index_cast %231 : i32 to index
    %c0_59 = arith.constant 0 : index
    %233 = vector.load %arg2[%232, %c0_59] : memref<128x32xf32, #tpu.memory_space<vmem>>, vector<1x32xf32>
    %cst_60 = arith.constant dense<0.000000e+00> : vector<1x32xf32>
    %234 = tpu.matmul %233, %202, %cst_60 {dimension_numbers = #tpu.dot_dimension_numbers<[1], [0], [0], [1], [0, 0, 1, 1], [], []>} : vector<1x32xf32>, vector<32x32xf32>, vector<1x32xf32> -> vector<1x32xf32>
    %cst_61 = arith.constant dense<0.000000e+00> : vector<1x32xf32>
    %235 = tpu.matmul %217, %203, %cst_61 {dimension_numbers = #tpu.dot_dimension_numbers<[1], [0], [0], [1], [0, 0, 1, 1], [], []>} : vector<1x32xf32>, vector<32x32xf32>, vector<1x32xf32> -> vector<1x32xf32>
    %236 = arith.addf %234, %235 : vector<1x32xf32>
    %237 = arith.addf %236, %204 : vector<1x32xf32>
    %238 = math.tanh %237 : vector<1x32xf32>
    %cst_62 = arith.constant dense<0.000000e+00> : vector<1x128xf32>
    %239 = tpu.matmul %238, %205, %cst_62 {dimension_numbers = #tpu.dot_dimension_numbers<[1], [0], [0], [1], [0, 0, 1, 1], [], []>} : vector<1x32xf32>, vector<32x128xf32>, vector<1x128xf32> -> vector<1x128xf32>
    %240 = arith.addf %239, %206 : vector<1x128xf32>
    %cst_63 = arith.constant 0.000000e+00 : f32
    %241 = vector.broadcast %cst_63 : f32 to vector<1x128xf32>
    %242 = arith.maximumf %240, %241 : vector<1x128xf32>
    %cst_64 = arith.constant dense<0xFF800000> : vector<1xf32>
    %243 = vector.multi_reduction <maximumf>, %242, %cst_64 [1] : vector<1x128xf32> to vector<1xf32>
    %244 = vector.shape_cast %243 : vector<1xf32> to vector<1x1xf32>
    %245 = vector.broadcast %244 : vector<1x1xf32> to vector<1x128xf32>
    %246 = arith.cmpf oge, %242, %245 : vector<1x128xf32>
    %c128_i32_65 = arith.constant 128 : i32
    %247 = vector.broadcast %c128_i32_65 : i32 to vector<1x128xi32>
    %248 = arith.select %246, %207, %247 : vector<1x128xi1>, vector<1x128xi32>
    %cst_66 = arith.constant dense<2147483647> : vector<1xi32>
    %249 = vector.multi_reduction <minsi>, %248, %cst_66 [1] : vector<1x128xi32> to vector<1xi32>
    %250 = vector.extract %249[0] : i32 from vector<1xi32>
    %c2 = arith.constant 2 : index
    %251 = memref.load %arg12[%c2] : memref<9xi32, #tpu.memory_space<smem>>
    memref.store %250, %arg12[%c2] : memref<9xi32, #tpu.memory_space<smem>>
    %c2_67 = arith.constant 2 : index
    %252 = memref.load %arg12[%c2_67] : memref<9xi32, #tpu.memory_space<smem>>
    %253 = arith.index_cast %252 : i32 to index
    %c0_68 = arith.constant 0 : index
    %254 = vector.load %arg2[%253, %c0_68] : memref<128x32xf32, #tpu.memory_space<vmem>>, vector<1x32xf32>
    %cst_69 = arith.constant dense<0.000000e+00> : vector<1x32xf32>
    %255 = tpu.matmul %254, %202, %cst_69 {dimension_numbers = #tpu.dot_dimension_numbers<[1], [0], [0], [1], [0, 0, 1, 1], [], []>} : vector<1x32xf32>, vector<32x32xf32>, vector<1x32xf32> -> vector<1x32xf32>
    %cst_70 = arith.constant dense<0.000000e+00> : vector<1x32xf32>
    %256 = tpu.matmul %238, %203, %cst_70 {dimension_numbers = #tpu.dot_dimension_numbers<[1], [0], [0], [1], [0, 0, 1, 1], [], []>} : vector<1x32xf32>, vector<32x32xf32>, vector<1x32xf32> -> vector<1x32xf32>
    %257 = arith.addf %255, %256 : vector<1x32xf32>
    %258 = arith.addf %257, %204 : vector<1x32xf32>
    %259 = math.tanh %258 : vector<1x32xf32>
    %cst_71 = arith.constant dense<0.000000e+00> : vector<1x128xf32>
    %260 = tpu.matmul %259, %205, %cst_71 {dimension_numbers = #tpu.dot_dimension_numbers<[1], [0], [0], [1], [0, 0, 1, 1], [], []>} : vector<1x32xf32>, vector<32x128xf32>, vector<1x128xf32> -> vector<1x128xf32>
    %261 = arith.addf %260, %206 : vector<1x128xf32>
    %cst_72 = arith.constant 0.000000e+00 : f32
    %262 = vector.broadcast %cst_72 : f32 to vector<1x128xf32>
    %263 = arith.maximumf %261, %262 : vector<1x128xf32>
    %cst_73 = arith.constant dense<0xFF800000> : vector<1xf32>
    %264 = vector.multi_reduction <maximumf>, %263, %cst_73 [1] : vector<1x128xf32> to vector<1xf32>
    %265 = vector.shape_cast %264 : vector<1xf32> to vector<1x1xf32>
    %266 = vector.broadcast %265 : vector<1x1xf32> to vector<1x128xf32>
    %267 = arith.cmpf oge, %263, %266 : vector<1x128xf32>
    %c128_i32_74 = arith.constant 128 : i32
    %268 = vector.broadcast %c128_i32_74 : i32 to vector<1x128xi32>
    %269 = arith.select %267, %207, %268 : vector<1x128xi1>, vector<1x128xi32>
    %cst_75 = arith.constant dense<2147483647> : vector<1xi32>
    %270 = vector.multi_reduction <minsi>, %269, %cst_75 [1] : vector<1x128xi32> to vector<1xi32>
    %271 = vector.extract %270[0] : i32 from vector<1xi32>
    %c3 = arith.constant 3 : index
    %272 = memref.load %arg12[%c3] : memref<9xi32, #tpu.memory_space<smem>>
    memref.store %271, %arg12[%c3] : memref<9xi32, #tpu.memory_space<smem>>
    %c3_76 = arith.constant 3 : index
    %273 = memref.load %arg12[%c3_76] : memref<9xi32, #tpu.memory_space<smem>>
    %274 = arith.index_cast %273 : i32 to index
    %c0_77 = arith.constant 0 : index
    %275 = vector.load %arg2[%274, %c0_77] : memref<128x32xf32, #tpu.memory_space<vmem>>, vector<1x32xf32>
    %cst_78 = arith.constant dense<0.000000e+00> : vector<1x32xf32>
    %276 = tpu.matmul %275, %202, %cst_78 {dimension_numbers = #tpu.dot_dimension_numbers<[1], [0], [0], [1], [0, 0, 1, 1], [], []>} : vector<1x32xf32>, vector<32x32xf32>, vector<1x32xf32> -> vector<1x32xf32>
    %cst_79 = arith.constant dense<0.000000e+00> : vector<1x32xf32>
    %277 = tpu.matmul %259, %203, %cst_79 {dimension_numbers = #tpu.dot_dimension_numbers<[1], [0], [0], [1], [0, 0, 1, 1], [], []>} : vector<1x32xf32>, vector<32x32xf32>, vector<1x32xf32> -> vector<1x32xf32>
    %278 = arith.addf %276, %277 : vector<1x32xf32>
    %279 = arith.addf %278, %204 : vector<1x32xf32>
    %280 = math.tanh %279 : vector<1x32xf32>
    %cst_80 = arith.constant dense<0.000000e+00> : vector<1x128xf32>
    %281 = tpu.matmul %280, %205, %cst_80 {dimension_numbers = #tpu.dot_dimension_numbers<[1], [0], [0], [1], [0, 0, 1, 1], [], []>} : vector<1x32xf32>, vector<32x128xf32>, vector<1x128xf32> -> vector<1x128xf32>
    %282 = arith.addf %281, %206 : vector<1x128xf32>
    %cst_81 = arith.constant 0.000000e+00 : f32
    %283 = vector.broadcast %cst_81 : f32 to vector<1x128xf32>
    %284 = arith.maximumf %282, %283 : vector<1x128xf32>
    %cst_82 = arith.constant dense<0xFF800000> : vector<1xf32>
    %285 = vector.multi_reduction <maximumf>, %284, %cst_82 [1] : vector<1x128xf32> to vector<1xf32>
    %286 = vector.shape_cast %285 : vector<1xf32> to vector<1x1xf32>
    %287 = vector.broadcast %286 : vector<1x1xf32> to vector<1x128xf32>
    %288 = arith.cmpf oge, %284, %287 : vector<1x128xf32>
    %c128_i32_83 = arith.constant 128 : i32
    %289 = vector.broadcast %c128_i32_83 : i32 to vector<1x128xi32>
    %290 = arith.select %288, %207, %289 : vector<1x128xi1>, vector<1x128xi32>
    %cst_84 = arith.constant dense<2147483647> : vector<1xi32>
    %291 = vector.multi_reduction <minsi>, %290, %cst_84 [1] : vector<1x128xi32> to vector<1xi32>
    %292 = vector.extract %291[0] : i32 from vector<1xi32>
    %c4 = arith.constant 4 : index
    %293 = memref.load %arg12[%c4] : memref<9xi32, #tpu.memory_space<smem>>
    memref.store %292, %arg12[%c4] : memref<9xi32, #tpu.memory_space<smem>>
    %c4_85 = arith.constant 4 : index
    %294 = memref.load %arg12[%c4_85] : memref<9xi32, #tpu.memory_space<smem>>
    %295 = arith.index_cast %294 : i32 to index
    %c0_86 = arith.constant 0 : index
    %296 = vector.load %arg2[%295, %c0_86] : memref<128x32xf32, #tpu.memory_space<vmem>>, vector<1x32xf32>
    %cst_87 = arith.constant dense<0.000000e+00> : vector<1x32xf32>
    %297 = tpu.matmul %296, %202, %cst_87 {dimension_numbers = #tpu.dot_dimension_numbers<[1], [0], [0], [1], [0, 0, 1, 1], [], []>} : vector<1x32xf32>, vector<32x32xf32>, vector<1x32xf32> -> vector<1x32xf32>
    %cst_88 = arith.constant dense<0.000000e+00> : vector<1x32xf32>
    %298 = tpu.matmul %280, %203, %cst_88 {dimension_numbers = #tpu.dot_dimension_numbers<[1], [0], [0], [1], [0, 0, 1, 1], [], []>} : vector<1x32xf32>, vector<32x32xf32>, vector<1x32xf32> -> vector<1x32xf32>
    %299 = arith.addf %297, %298 : vector<1x32xf32>
    %300 = arith.addf %299, %204 : vector<1x32xf32>
    %301 = math.tanh %300 : vector<1x32xf32>
    %cst_89 = arith.constant dense<0.000000e+00> : vector<1x128xf32>
    %302 = tpu.matmul %301, %205, %cst_89 {dimension_numbers = #tpu.dot_dimension_numbers<[1], [0], [0], [1], [0, 0, 1, 1], [], []>} : vector<1x32xf32>, vector<32x128xf32>, vector<1x128xf32> -> vector<1x128xf32>
    %303 = arith.addf %302, %206 : vector<1x128xf32>
    %cst_90 = arith.constant 0.000000e+00 : f32
    %304 = vector.broadcast %cst_90 : f32 to vector<1x128xf32>
    %305 = arith.maximumf %303, %304 : vector<1x128xf32>
    %cst_91 = arith.constant dense<0xFF800000> : vector<1xf32>
    %306 = vector.multi_reduction <maximumf>, %305, %cst_91 [1] : vector<1x128xf32> to vector<1xf32>
    %307 = vector.shape_cast %306 : vector<1xf32> to vector<1x1xf32>
    %308 = vector.broadcast %307 : vector<1x1xf32> to vector<1x128xf32>
    %309 = arith.cmpf oge, %305, %308 : vector<1x128xf32>
    %c128_i32_92 = arith.constant 128 : i32
    %310 = vector.broadcast %c128_i32_92 : i32 to vector<1x128xi32>
    %311 = arith.select %309, %207, %310 : vector<1x128xi1>, vector<1x128xi32>
    %cst_93 = arith.constant dense<2147483647> : vector<1xi32>
    %312 = vector.multi_reduction <minsi>, %311, %cst_93 [1] : vector<1x128xi32> to vector<1xi32>
    %313 = vector.extract %312[0] : i32 from vector<1xi32>
    %c5 = arith.constant 5 : index
    %314 = memref.load %arg12[%c5] : memref<9xi32, #tpu.memory_space<smem>>
    memref.store %313, %arg12[%c5] : memref<9xi32, #tpu.memory_space<smem>>
    %c5_94 = arith.constant 5 : index
    %315 = memref.load %arg12[%c5_94] : memref<9xi32, #tpu.memory_space<smem>>
    %316 = arith.index_cast %315 : i32 to index
    %c0_95 = arith.constant 0 : index
    %317 = vector.load %arg2[%316, %c0_95] : memref<128x32xf32, #tpu.memory_space<vmem>>, vector<1x32xf32>
    %cst_96 = arith.constant dense<0.000000e+00> : vector<1x32xf32>
    %318 = tpu.matmul %317, %202, %cst_96 {dimension_numbers = #tpu.dot_dimension_numbers<[1], [0], [0], [1], [0, 0, 1, 1], [], []>} : vector<1x32xf32>, vector<32x32xf32>, vector<1x32xf32> -> vector<1x32xf32>
    %cst_97 = arith.constant dense<0.000000e+00> : vector<1x32xf32>
    %319 = tpu.matmul %301, %203, %cst_97 {dimension_numbers = #tpu.dot_dimension_numbers<[1], [0], [0], [1], [0, 0, 1, 1], [], []>} : vector<1x32xf32>, vector<32x32xf32>, vector<1x32xf32> -> vector<1x32xf32>
    %320 = arith.addf %318, %319 : vector<1x32xf32>
    %321 = arith.addf %320, %204 : vector<1x32xf32>
    %322 = math.tanh %321 : vector<1x32xf32>
    %cst_98 = arith.constant dense<0.000000e+00> : vector<1x128xf32>
    %323 = tpu.matmul %322, %205, %cst_98 {dimension_numbers = #tpu.dot_dimension_numbers<[1], [0], [0], [1], [0, 0, 1, 1], [], []>} : vector<1x32xf32>, vector<32x128xf32>, vector<1x128xf32> -> vector<1x128xf32>
    %324 = arith.addf %323, %206 : vector<1x128xf32>
    %cst_99 = arith.constant 0.000000e+00 : f32
    %325 = vector.broadcast %cst_99 : f32 to vector<1x128xf32>
    %326 = arith.maximumf %324, %325 : vector<1x128xf32>
    %cst_100 = arith.constant dense<0xFF800000> : vector<1xf32>
    %327 = vector.multi_reduction <maximumf>, %326, %cst_100 [1] : vector<1x128xf32> to vector<1xf32>
    %328 = vector.shape_cast %327 : vector<1xf32> to vector<1x1xf32>
    %329 = vector.broadcast %328 : vector<1x1xf32> to vector<1x128xf32>
    %330 = arith.cmpf oge, %326, %329 : vector<1x128xf32>
    %c128_i32_101 = arith.constant 128 : i32
    %331 = vector.broadcast %c128_i32_101 : i32 to vector<1x128xi32>
    %332 = arith.select %330, %207, %331 : vector<1x128xi1>, vector<1x128xi32>
    %cst_102 = arith.constant dense<2147483647> : vector<1xi32>
    %333 = vector.multi_reduction <minsi>, %332, %cst_102 [1] : vector<1x128xi32> to vector<1xi32>
    %334 = vector.extract %333[0] : i32 from vector<1xi32>
    %c6 = arith.constant 6 : index
    %335 = memref.load %arg12[%c6] : memref<9xi32, #tpu.memory_space<smem>>
    memref.store %334, %arg12[%c6] : memref<9xi32, #tpu.memory_space<smem>>
    %c6_103 = arith.constant 6 : index
    %336 = memref.load %arg12[%c6_103] : memref<9xi32, #tpu.memory_space<smem>>
    %337 = arith.index_cast %336 : i32 to index
    %c0_104 = arith.constant 0 : index
    %338 = vector.load %arg2[%337, %c0_104] : memref<128x32xf32, #tpu.memory_space<vmem>>, vector<1x32xf32>
    %cst_105 = arith.constant dense<0.000000e+00> : vector<1x32xf32>
    %339 = tpu.matmul %338, %202, %cst_105 {dimension_numbers = #tpu.dot_dimension_numbers<[1], [0], [0], [1], [0, 0, 1, 1], [], []>} : vector<1x32xf32>, vector<32x32xf32>, vector<1x32xf32> -> vector<1x32xf32>
    %cst_106 = arith.constant dense<0.000000e+00> : vector<1x32xf32>
    %340 = tpu.matmul %322, %203, %cst_106 {dimension_numbers = #tpu.dot_dimension_numbers<[1], [0], [0], [1], [0, 0, 1, 1], [], []>} : vector<1x32xf32>, vector<32x32xf32>, vector<1x32xf32> -> vector<1x32xf32>
    %341 = arith.addf %339, %340 : vector<1x32xf32>
    %342 = arith.addf %341, %204 : vector<1x32xf32>
    %343 = math.tanh %342 : vector<1x32xf32>
    %cst_107 = arith.constant dense<0.000000e+00> : vector<1x128xf32>
    %344 = tpu.matmul %343, %205, %cst_107 {dimension_numbers = #tpu.dot_dimension_numbers<[1], [0], [0], [1], [0, 0, 1, 1], [], []>} : vector<1x32xf32>, vector<32x128xf32>, vector<1x128xf32> -> vector<1x128xf32>
    %345 = arith.addf %344, %206 : vector<1x128xf32>
    %cst_108 = arith.constant 0.000000e+00 : f32
    %346 = vector.broadcast %cst_108 : f32 to vector<1x128xf32>
    %347 = arith.maximumf %345, %346 : vector<1x128xf32>
    %cst_109 = arith.constant dense<0xFF800000> : vector<1xf32>
    %348 = vector.multi_reduction <maximumf>, %347, %cst_109 [1] : vector<1x128xf32> to vector<1xf32>
    %349 = vector.shape_cast %348 : vector<1xf32> to vector<1x1xf32>
    %350 = vector.broadcast %349 : vector<1x1xf32> to vector<1x128xf32>
    %351 = arith.cmpf oge, %347, %350 : vector<1x128xf32>
    %c128_i32_110 = arith.constant 128 : i32
    %352 = vector.broadcast %c128_i32_110 : i32 to vector<1x128xi32>
    %353 = arith.select %351, %207, %352 : vector<1x128xi1>, vector<1x128xi32>
    %cst_111 = arith.constant dense<2147483647> : vector<1xi32>
    %354 = vector.multi_reduction <minsi>, %353, %cst_111 [1] : vector<1x128xi32> to vector<1xi32>
    %355 = vector.extract %354[0] : i32 from vector<1xi32>
    %c7 = arith.constant 7 : index
    %356 = memref.load %arg12[%c7] : memref<9xi32, #tpu.memory_space<smem>>
    memref.store %355, %arg12[%c7] : memref<9xi32, #tpu.memory_space<smem>>
    %c7_112 = arith.constant 7 : index
    %357 = memref.load %arg12[%c7_112] : memref<9xi32, #tpu.memory_space<smem>>
    %358 = arith.index_cast %357 : i32 to index
    %c0_113 = arith.constant 0 : index
    %359 = vector.load %arg2[%358, %c0_113] : memref<128x32xf32, #tpu.memory_space<vmem>>, vector<1x32xf32>
    %cst_114 = arith.constant dense<0.000000e+00> : vector<1x32xf32>
    %360 = tpu.matmul %359, %202, %cst_114 {dimension_numbers = #tpu.dot_dimension_numbers<[1], [0], [0], [1], [0, 0, 1, 1], [], []>} : vector<1x32xf32>, vector<32x32xf32>, vector<1x32xf32> -> vector<1x32xf32>
    %cst_115 = arith.constant dense<0.000000e+00> : vector<1x32xf32>
    %361 = tpu.matmul %343, %203, %cst_115 {dimension_numbers = #tpu.dot_dimension_numbers<[1], [0], [0], [1], [0, 0, 1, 1], [], []>} : vector<1x32xf32>, vector<32x32xf32>, vector<1x32xf32> -> vector<1x32xf32>
    %362 = arith.addf %360, %361 : vector<1x32xf32>
    %363 = arith.addf %362, %204 : vector<1x32xf32>
    %364 = math.tanh %363 : vector<1x32xf32>
    %cst_116 = arith.constant dense<0.000000e+00> : vector<1x128xf32>
    %365 = tpu.matmul %364, %205, %cst_116 {dimension_numbers = #tpu.dot_dimension_numbers<[1], [0], [0], [1], [0, 0, 1, 1], [], []>} : vector<1x32xf32>, vector<32x128xf32>, vector<1x128xf32> -> vector<1x128xf32>
    %366 = arith.addf %365, %206 : vector<1x128xf32>
    %cst_117 = arith.constant 0.000000e+00 : f32
    %367 = vector.broadcast %cst_117 : f32 to vector<1x128xf32>
    %368 = arith.maximumf %366, %367 : vector<1x128xf32>
    %cst_118 = arith.constant dense<0xFF800000> : vector<1xf32>
    %369 = vector.multi_reduction <maximumf>, %368, %cst_118 [1] : vector<1x128xf32> to vector<1xf32>
    %370 = vector.shape_cast %369 : vector<1xf32> to vector<1x1xf32>
    %371 = vector.broadcast %370 : vector<1x1xf32> to vector<1x128xf32>
    %372 = arith.cmpf oge, %368, %371 : vector<1x128xf32>
    %c128_i32_119 = arith.constant 128 : i32
    %373 = vector.broadcast %c128_i32_119 : i32 to vector<1x128xi32>
    %374 = arith.select %372, %207, %373 : vector<1x128xi1>, vector<1x128xi32>
    %cst_120 = arith.constant dense<2147483647> : vector<1xi32>
    %375 = vector.multi_reduction <minsi>, %374, %cst_120 [1] : vector<1x128xi32> to vector<1xi32>
    %376 = vector.extract %375[0] : i32 from vector<1xi32>
    %c8 = arith.constant 8 : index
    %377 = memref.load %arg12[%c8] : memref<9xi32, #tpu.memory_space<smem>>
    memref.store %376, %arg12[%c8] : memref<9xi32, #tpu.memory_space<smem>>
    %378 = tpu.concatenate %221, %242, %263, %284, %305, %326, %347, %368 in 0 : vector<1x128xf32>, vector<1x128xf32>, vector<1x128xf32>, vector<1x128xf32>, vector<1x128xf32>, vector<1x128xf32>, vector<1x128xf32>, vector<1x128xf32> -> vector<8x128xf32>
    %c0_121 = arith.constant 0 : index
    %c0_122 = arith.constant 0 : index
    %379 = vector.load %arg13[%c0_121, %c0_122] : memref<8x128xf32, #tpu.memory_space<vmem>>, vector<8x128xf32>
    tpu.vector_store %arg13[%c0_121, %c0_122], %378 {strides = array<i32>} : memref<8x128xf32, #tpu.memory_space<vmem>>, vector<8x128xf32>,
    return
  }
}

</mosaic_0001>

<llo_original>
// kernel: tpu_custom_call.1
$region0: #{tpu_custom_call.1}
  #allocation0 [shape = 'u32[]', space=smem, size = 0x4, offset = 0x4, fixed_abs, tag = 'smem constant byte address 0x4 - core index']
  #allocation1 [shape = 'u32[144,128]{1,0:T(1,128)}', space=vmem, size = 0x12000, scoped, tag = 'internal scratch']
  #allocation2 [shape = 's32[1]{0:T(128)S(6)}', space=smem, size = 0x200, scoped, tag = 'scoped memory for tpu_custom_call.1']
  %s0 = inlined_call_operand.vmem [shape: s32[8,1], index: 0, kind: input, shape index: {}]
  %s1 = inlined_call_operand.<no memory space> [shape: s32[1], index: 1, kind: input, shape index: {}]
  %s2 = inlined_call_operand.vmem [shape: f32[128,32], index: 2, kind: input, shape index: {}]
  %s3 = inlined_call_operand.vmem [shape: f32[32,96], index: 3, kind: input, shape index: {}]
  %s4 = inlined_call_operand.vmem [shape: f32[1,96], index: 4, kind: input, shape index: {}]
  %s5 = inlined_call_operand.vmem [shape: f32[32,96], index: 5, kind: input, shape index: {}]
  %s6 = inlined_call_operand.vmem [shape: f32[1,96], index: 6, kind: input, shape index: {}]
  %s7 = inlined_call_operand.vmem [shape: f32[32,32], index: 7, kind: input, shape index: {}]
  %s8 = inlined_call_operand.vmem [shape: f32[32,32], index: 8, kind: input, shape index: {}]
  %s9 = inlined_call_operand.vmem [shape: f32[1,32], index: 9, kind: input, shape index: {}]
  %s10 = inlined_call_operand.vmem [shape: f32[32,128], index: 10, kind: input, shape index: {}]
  %s11 = inlined_call_operand.vmem [shape: f32[1,128], index: 11, kind: input, shape index: {}]
  %s12 = inlined_call_operand.hbm [shape: s32[9], index: 12, kind: output, shape index: {0}]
  %s13 = inlined_call_operand.hbm [shape: f32[8,128], index: 13, kind: output, shape index: {1}]
  %14 = xla_tuple %s12, %s13
  %s15 = sld [smem:[#allocation0]]
  $region66: #{tpu_custom_call.1} parent=0
    _
  %s17 = ssub.s32 1, %s15
  %s18 = scalar_select 0, %s17, %s15
  %19 = sst [smem:[#allocation2]] %s1
  $region1: #{tpu_custom_call.1} parent=0
    #allocation3 [shape = 'u8[512]{0}', space=smem, size = 0x200, scoped, tag = 'output window, operand 0, single buffered']
    #allocation4 [shape = 's32[1]{0}', space=sflag, size = 0x4, scoped, tag = 'scoped memory for tpu_custom_call.1']
    #allocation5 [shape = 's32[1]{0}', space=sflag, size = 0x4, scoped, tag = 'scoped memory for tpu_custom_call.1']
    #allocation6 [shape = 'u8[4096]{0}', space=vmem, size = 0x1000, scoped, tag = 'output window, operand 1, single buffered']
    %20 = vsyncpa [#allocation5], 0
    %21 = vsyncpa [#allocation4], 0
    // Predicated region
    $region2: #{tpu_custom_call.1} parent=1 // pred_check
      _
    $region3: #{tpu_custom_call.1} parent=1 // pred_check_branch
      %23 = sbr.rel (0) target = $region5
    $region4: #{tpu_custom_call.1} parent=1 // pred_region
      _
    $region5: #{tpu_custom_call.1} parent=1 // pred_fallthru
      _
    // Predicated region
    $region6: #{tpu_custom_call.1} parent=1 // pred_check
      _
    $region7: #{tpu_custom_call.1} parent=1 // pred_check_branch
      %25 = sbr.rel (0) target = $region9
    $region8: #{tpu_custom_call.1} parent=1 // pred_region
      _
    $region9: #{tpu_custom_call.1} parent=1 // pred_fallthru
      _
    // Predicated region
    $region10: #{tpu_custom_call.1} parent=1 // pred_check
      _
    $region11: #{tpu_custom_call.1} parent=1 // pred_check_branch
      %27 = sbr.rel (0) target = $region13
    $region12: #{tpu_custom_call.1} parent=1 // pred_region
      _
    $region13: #{tpu_custom_call.1} parent=1 // pred_fallthru
      _
    // Predicated region
    $region14: #{tpu_custom_call.1} parent=1 // pred_check
      _
    $region15: #{tpu_custom_call.1} parent=1 // pred_check_branch
      %29 = sbr.rel (0) target = $region17
    $region16: #{tpu_custom_call.1} parent=1 // pred_region
      _
    $region17: #{tpu_custom_call.1} parent=1 // pred_fallthru
      _
    // Predicated region
    $region18: #{tpu_custom_call.1} parent=1 // pred_check
      _
    $region19: #{tpu_custom_call.1} parent=1 // pred_check_branch
      %31 = sbr.rel (0) target = $region21
    $region20: #{tpu_custom_call.1} parent=1 // pred_region
      _
    $region21: #{tpu_custom_call.1} parent=1 // pred_fallthru
      _
    // Predicated region
    $region22: #{tpu_custom_call.1} parent=1 // pred_check
      _
    $region23: #{tpu_custom_call.1} parent=1 // pred_check_branch
      %33 = sbr.rel (0) target = $region25
    $region24: #{tpu_custom_call.1} parent=1 // pred_region
      _
    $region25: #{tpu_custom_call.1} parent=1 // pred_fallthru
      _
    // Predicated region
    $region26: #{tpu_custom_call.1} parent=1 // pred_check
      _
    $region27: #{tpu_custom_call.1} parent=1 // pred_check_branch
      %35 = sbr.rel (0) target = $region29
    $region28: #{tpu_custom_call.1} parent=1 // pred_region
      _
    $region29: #{tpu_custom_call.1} parent=1 // pred_fallthru
      _
    // Predicated region
    $region30: #{tpu_custom_call.1} parent=1 // pred_check
      _
    $region31: #{tpu_custom_call.1} parent=1 // pred_check_branch
      %37 = sbr.rel (0) target = $region33
    $region32: #{tpu_custom_call.1} parent=1 // pred_region
      _
    $region33: #{tpu_custom_call.1} parent=1 // pred_fallthru
      _
    // Predicated region
    $region34: #{tpu_custom_call.1} parent=1 // pred_check
      _
    $region35: #{tpu_custom_call.1} parent=1 // pred_check_branch
      %39 = sbr.rel (0) target = $region37
    $region36: #{tpu_custom_call.1} parent=1 // pred_region
      _
    $region37: #{tpu_custom_call.1} parent=1 // pred_fallthru
      _
    // Predicated region
    $region38: #{tpu_custom_call.1} parent=1 // pred_check
      _
    $region39: #{tpu_custom_call.1} parent=1 // pred_check_branch
      %41 = sbr.rel (0) target = $region41
    $region40: #{tpu_custom_call.1} parent=1 // pred_region
      _
    $region41: #{tpu_custom_call.1} parent=1 // pred_fallthru
      _
    // Predicated region
    $region42: #{tpu_custom_call.1} parent=1 // pred_check
      _
    $region43: #{tpu_custom_call.1} parent=1 // pred_check_branch
      %43 = sbr.rel (0) target = $region45
    $region44: #{tpu_custom_call.1} parent=1 // pred_region
      _
    $region45: #{tpu_custom_call.1} parent=1 // pred_fallthru
      _
    // Predicated region
    $region46: #{tpu_custom_call.1} parent=1 // pred_check
      _
    $region47: #{tpu_custom_call.1} parent=1 // pred_check_branch
      %45 = sbr.rel (0) target = $region49
    $region48: #{tpu_custom_call.1} parent=1 // pred_region
      _
    $region49: #{tpu_custom_call.1} parent=1 // pred_fallthru
      _
    %v46 = vlaneseq
    %v47 = vand.u32 %v46, 127
    %v48 = vld [vmem:[%s0] sm:$0xff]
    %49 = vset.pattern.permute.xlu0 0
    %50 = vperm.xlu0 %49, %v48
    %v51 = vpop.permute.xlu0 %50
    %vm52 = vcmp.eq.s32.totalorder %v47, %v51
    %v53 = vsel %vm52, 1, 0
    %v54 = vcvt.s32.f32 %v53
    %v55 = vld [vmem:[%s2] sm:$0xff]
    %v56 = vld [vmem:[%s2 + $0x8] sm:$0xff]
    %v57 = vld [vmem:[%s2 + $0x10] sm:$0xff]
    %v58 = vld [vmem:[%s2 + $0x18] sm:$0xff]
    %v59 = vld [vmem:[%s2 + $0x20] sm:$0xff]
    %v60 = vld [vmem:[%s2 + $0x28] sm:$0xff]
    %v61 = vld [vmem:[%s2 + $0x30] sm:$0xff]
    %v62 = vld [vmem:[%s2 + $0x38] sm:$0xff]
    %v63 = vld [vmem:[%s2 + $0x40] sm:$0xff]
    %v64 = vld [vmem:[%s2 + $0x48] sm:$0xff]
    %v65 = vld [vmem:[%s2 + $0x50] sm:$0xff]
    %v66 = vld [vmem:[%s2 + $0x58] sm:$0xff]
    %v67 = vld [vmem:[%s2 + $0x60] sm:$0xff]
    %v68 = vld [vmem:[%s2 + $0x68] sm:$0xff]
    %v69 = vld [vmem:[%s2 + $0x70] sm:$0xff]
    %v70 = vld [vmem:[%s2 + $0x78] sm:$0xff]
    %71 = vmatprep.subr.mxu0 0.0
    %72 = vmatpush1.msra.mxu0 %v55
    %73 = vmatprep.subr.mxu0 0.0
    %74 = vmatpush1.msra.mxu0 %v56
    %75 = vmatprep.subr.mxu0 0.0
    %76 = vmatpush1.msra.mxu0 %v57
    %77 = vmatprep.subr.mxu0 0.0
    %78 = vmatpush1.msra.mxu0 %v58
    %79 = vmatprep.subr.mxu0 0.0
    %80 = vmatpush1.msra.mxu0 %v59
    %81 = vmatprep.subr.mxu0 0.0
    %82 = vmatpush1.msra.mxu0 %v60
    %83 = vmatprep.subr.mxu0 0.0
    %84 = vmatpush1.msra.mxu0 %v61
    %85 = vmatprep.subr.mxu0 0.0
    %86 = vmatpush1.msra.mxu0 %v62
    %87 = vmatprep.subr.mxu0 0.0
    %88 = vmatpush1.msra.mxu0 %v63
    %89 = vmatprep.subr.mxu0 0.0
    %90 = vmatpush1.msra.mxu0 %v64
    %91 = vmatprep.subr.mxu0 0.0
    %92 = vmatpush1.msra.mxu0 %v65
    %93 = vmatprep.subr.mxu0 0.0
    %94 = vmatpush1.msra.mxu0 %v66
    %95 = vmatprep.subr.mxu0 0.0
    %96 = vmatpush1.msra.mxu0 %v67
    %97 = vmatprep.subr.mxu0 0.0
    %98 = vmatpush1.msra.mxu0 %v68
    %99 = vmatprep.subr.mxu0 0.0
    %100 = vmatpush1.msra.mxu0 %v69
    %101 = vmatprep.subr.mxu0 0.0
    %102 = vmatpush1.msra.mxu0 %v70
    %103 = vmatprep.subr.mxu0 0.0
    %104 = vmatpush1.msra.mxu0 0.0
    %105 = vmatprep.subr.mxu0 0.0
    %106 = vmatpush1.msra.mxu0 0.0
    %107 = vmatprep.subr.mxu0 0.0
    %108 = vmatpush1.msra.mxu0 0.0
    %109 = vmatprep.subr.mxu0 0.0
    %110 = vmatpush1.msra.mxu0 0.0
    %111 = vmatprep.subr.mxu0 0.0
    %112 = vmatpush1.msra.mxu0 0.0
    %113 = vmatprep.subr.mxu0 0.0
    %114 = vmatpush1.msra.mxu0 0.0
    %115 = vmatprep.subr.mxu0 0.0
    %116 = vmatpush1.msra.mxu0 0.0
    %117 = vmatprep.subr.mxu0 0.0
    %118 = vmatpush1.msra.mxu0 0.0
    %119 = vmatprep.subr.mxu0 0.0
    %120 = vmatpush1.msra.mxu0 0.0
    %121 = vmatprep.subr.mxu0 0.0
    %122 = vmatpush1.msra.mxu0 0.0
    %123 = vmatprep.subr.mxu0 0.0
    %124 = vmatpush1.msra.mxu0 0.0
    %125 = vmatprep.subr.mxu0 0.0
    %126 = vmatpush1.msra.mxu0 0.0
    %127 = vmatprep.subr.mxu0 0.0
    %128 = vmatpush1.msra.mxu0 0.0
    %129 = vmatprep.subr.mxu0 0.0
    %130 = vmatpush1.msra.mxu0 0.0
    %131 = vmatprep.subr.mxu0 0.0
    %132 = vmatpush1.msra.mxu0 0.0
    %133 = vmatprep.subr.mxu0 0.0
    %134 = vmatpush1.msra.mxu0 0.0
    %135 = vmatprep.mubr.f32.mxu0 0.0
    %136 = vmatmul.mubr.f32.gmra.mrb[0].mxu0 %v54
    %v137 = vpop.f32.mrb[0].mxu0
    %v138 = vadd.f32 0.0, %v137
    %v139 = vpop.f32.mrb[0].mxu0
    %140 = vdwg.mxu0
    %v141 = vmax.f32 %v138, 0.0
    %v142 = vld [vmem:[%s3] sm:$0xff]
    %v143 = vld [vmem:[%s3 + $0x8] sm:$0xff]
    %v144 = vld [vmem:[%s3 + $0x10] sm:$0xff]
    %v145 = vld [vmem:[%s3 + $0x18] sm:$0xff]
    %v146 = vld [vmem:[%s4] sm:$0x1]
    %v148 = vlaneseq
    %v149 = vshrl.u32 %v148, 7
    %v150 = vsub.s32 0, %v149
    %v151 = vrot.slane %v146, %v150
    %vm153 = vcmask 261120
    %v155 = vsel %vm153, %v141, 0
    %157 = vmatprep.subr.mxu0 0.0
    %158 = vmatpush1.msra.mxu0 %v142
    %159 = vmatprep.subr.mxu0 0.0
    %160 = vmatpush1.msra.mxu0 %v143
    %161 = vmatprep.subr.mxu0 0.0
    %162 = vmatpush1.msra.mxu0 %v144
    %163 = vmatprep.subr.mxu0 0.0
    %164 = vmatpush1.msra.mxu0 %v145
    %165 = vmatprep.subr.mxu0 0.0
    %166 = vmatpush1.msra.mxu0 0.0
    %167 = vmatprep.subr.mxu0 0.0
    %168 = vmatpush1.msra.mxu0 0.0
    %169 = vmatprep.subr.mxu0 0.0
    %170 = vmatpush1.msra.mxu0 0.0
    %171 = vmatprep.subr.mxu0 0.0
    %172 = vmatpush1.msra.mxu0 0.0
    %173 = vmatprep.subr.mxu0 0.0
    %174 = vmatpush1.msra.mxu0 0.0
    %175 = vmatprep.subr.mxu0 0.0
    %176 = vmatpush1.msra.mxu0 0.0
    %177 = vmatprep.subr.mxu0 0.0
    %178 = vmatpush1.msra.mxu0 0.0
    %179 = vmatprep.subr.mxu0 0.0
    %180 = vmatpush1.msra.mxu0 0.0
    %181 = vmatprep.subr.mxu0 0.0
    %182 = vmatpush1.msra.mxu0 0.0
    %183 = vmatprep.subr.mxu0 0.0
    %184 = vmatpush1.msra.mxu0 0.0
    %185 = vmatprep.subr.mxu0 0.0
    %186 = vmatpush1.msra.mxu0 0.0
    %187 = vmatprep.subr.mxu0 0.0
    %188 = vmatpush1.msra.mxu0 0.0
    %189 = vmatprep.subr.mxu0 0.0
    %190 = vmatpush1.msra.mxu0 0.0
    %191 = vmatprep.subr.mxu0 0.0
    %192 = vmatpush1.msra.mxu0 0.0
    %193 = vmatprep.subr.mxu0 0.0
    %194 = vmatpush1.msra.mxu0 0.0
    %195 = vmatprep.subr.mxu0 0.0
    %196 = vmatpush1.msra.mxu0 0.0
    %197 = vmatprep.subr.mxu0 0.0
    %198 = vmatpush1.msra.mxu0 0.0
    %199 = vmatprep.subr.mxu0 0.0
    %200 = vmatpush1.msra.mxu0 0.0
    %201 = vmatprep.subr.mxu0 0.0
    %202 = vmatpush1.msra.mxu0 0.0
    %203 = vmatprep.subr.mxu0 0.0
    %204 = vmatpush1.msra.mxu0 0.0
    %205 = vmatprep.subr.mxu0 0.0
    %206 = vmatpush1.msra.mxu0 0.0
    %207 = vmatprep.subr.mxu0 0.0
    %208 = vmatpush1.msra.mxu0 0.0
    %209 = vmatprep.subr.mxu0 0.0
    %210 = vmatpush1.msra.mxu0 0.0
    %211 = vmatprep.subr.mxu0 0.0
    %212 = vmatpush1.msra.mxu0 0.0
    %213 = vmatprep.subr.mxu0 0.0
    %214 = vmatpush1.msra.mxu0 0.0
    %215 = vmatprep.subr.mxu0 0.0
    %216 = vmatpush1.msra.mxu0 0.0
    %217 = vmatprep.subr.mxu0 0.0
    %218 = vmatpush1.msra.mxu0 0.0
    %219 = vmatprep.subr.mxu0 0.0
    %220 = vmatpush1.msra.mxu0 0.0
    %221 = vmatprep.mubr.f32.mxu0 0.0
    %222 = vmatmul.mubr.f32.gmra.mrb[0].mxu0 %v155
    %v223 = vpop.f32.mrb[0].mxu0
    %v224 = vadd.f32 %v151, %v223
    %v225 = vpop.f32.mrb[0].mxu0
    %226 = vdwg.mxu0
    %v227 = vld [vmem:[%s5] sm:$0xff]
    %v228 = vld [vmem:[%s5 + $0x8] sm:$0xff]
    %v229 = vld [vmem:[%s5 + $0x10] sm:$0xff]
    %v230 = vld [vmem:[%s5 + $0x18] sm:$0xff]
    %v231 = vld [vmem:[%s6] sm:$0x1]
    %v233 = vsel %vm153, 0.0, 0
    %235 = vmatprep.subr.mxu0 0.0
    %236 = vmatpush1.msra.mxu0 %v227
    %237 = vmatprep.subr.mxu0 0.0
    %238 = vmatpush1.msra.mxu0 %v228
    %239 = vmatprep.subr.mxu0 0.0
    %240 = vmatpush1.msra.mxu0 %v229
    %241 = vmatprep.subr.mxu0 0.0
    %242 = vmatpush1.msra.mxu0 %v230
    %243 = vmatprep.subr.mxu0 0.0
    %244 = vmatpush1.msra.mxu0 0.0
    %245 = vmatprep.subr.mxu0 0.0
    %246 = vmatpush1.msra.mxu0 0.0
    %247 = vmatprep.subr.mxu0 0.0
    %248 = vmatpush1.msra.mxu0 0.0
    %249 = vmatprep.subr.mxu0 0.0
    %250 = vmatpush1.msra.mxu0 0.0
    %251 = vmatprep.subr.mxu0 0.0
    %252 = vmatpush1.msra.mxu0 0.0
    %253 = vmatprep.subr.mxu0 0.0
    %254 = vmatpush1.msra.mxu0 0.0
    %255 = vmatprep.subr.mxu0 0.0
    %256 = vmatpush1.msra.mxu0 0.0
    %257 = vmatprep.subr.mxu0 0.0
    %258 = vmatpush1.msra.mxu0 0.0
    %259 = vmatprep.subr.mxu0 0.0
    %260 = vmatpush1.msra.mxu0 0.0
    %261 = vmatprep.subr.mxu0 0.0
    %262 = vmatpush1.msra.mxu0 0.0
    %263 = vmatprep.subr.mxu0 0.0
    %264 = vmatpush1.msra.mxu0 0.0
    %265 = vmatprep.subr.mxu0 0.0
    %266 = vmatpush1.msra.mxu0 0.0
    %267 = vmatprep.subr.mxu0 0.0
    %268 = vmatpush1.msra.mxu0 0.0
    %269 = vmatprep.subr.mxu0 0.0
    %270 = vmatpush1.msra.mxu0 0.0
    %271 = vmatprep.subr.mxu0 0.0
    %272 = vmatpush1.msra.mxu0 0.0
    %273 = vmatprep.subr.mxu0 0.0
    %274 = vmatpush1.msra.mxu0 0.0
    %275 = vmatprep.subr.mxu0 0.0
    %276 = vmatpush1.msra.mxu0 0.0
    %277 = vmatprep.subr.mxu0 0.0
    %278 = vmatpush1.msra.mxu0 0.0
    %279 = vmatprep.subr.mxu0 0.0
    %280 = vmatpush1.msra.mxu0 0.0
    %281 = vmatprep.subr.mxu0 0.0
    %282 = vmatpush1.msra.mxu0 0.0
    %283 = vmatprep.subr.mxu0 0.0
    %284 = vmatpush1.msra.mxu0 0.0
    %285 = vmatprep.subr.mxu0 0.0
    %286 = vmatpush1.msra.mxu0 0.0
    %287 = vmatprep.subr.mxu0 0.0
    %288 = vmatpush1.msra.mxu0 0.0
    %289 = vmatprep.subr.mxu0 0.0
    %290 = vmatpush1.msra.mxu0 0.0
    %291 = vmatprep.subr.mxu0 0.0
    %292 = vmatpush1.msra.mxu0 0.0
    %293 = vmatprep.subr.mxu0 0.0
    %294 = vmatpush1.msra.mxu0 0.0
    %295 = vmatprep.subr.mxu0 0.0
    %296 = vmatpush1.msra.mxu0 0.0
    %297 = vmatprep.subr.mxu0 0.0
    %298 = vmatpush1.msra.mxu0 0.0
    %299 = vmatprep.mubr.f32.mxu0 0.0
    %300 = vmatmul.mubr.f32.gmra.mrb[0].mxu0 %v233
    %v301 = vpop.f32.mrb[0].mxu0
    %v302 = vadd.f32 %v231, %v301
    %v303 = vpop.f32.mrb[0].mxu0
    %304 = vdwg.mxu0
    %v305 = vadd.f32 %v224, %v302
    %v306 = vxor.u32 %v305, 2147483648
    %v307 = vmul.f32 %v306, 1.442695
    %v308 = vpow.pop %v307
    %v309 = vadd.f32 %v308, 1.0
    %v310 = vrcp.pop %v309
    %v311 = vmul.f32 1.0, %v310
    %313 = vrot.lane.b32.xlu0 %v302, 64
    %v314 = vpop.permute.xlu0 %313
    %v316 = vmul.f32 %v311, %v314
    %318 = vrot.lane.b32.xlu0 %v316, 64
    %v319 = vpop.permute.xlu0 %318
    %v321 = vadd.f32 %v224, %v319
    %v322 = vtanh.pop %v321
    %v323 = vsub.f32 1.0, %v311
    %325 = vrot.lane.b32.xlu0 %v322, 96
    %v326 = vpop.permute.xlu0 %325
    %v328 = vmul.f32 %v323, %v326
    %v329 = vmul.f32 %v311, 0.0
    %v330 = vadd.f32 %v328, %v329
    %332 = vrot.lane.b32.xlu0 %v330, 96
    %v333 = vpop.permute.xlu0 %332
    %v334 = vsel %vm153, %v333, 0
    %336 = vmatprep.subr.mxu0 0.0
    %337 = vmatpush1.msra.mxu0 %v227
    %338 = vmatprep.subr.mxu0 0.0
    %339 = vmatpush1.msra.mxu0 %v228
    %340 = vmatprep.subr.mxu0 0.0
    %341 = vmatpush1.msra.mxu0 %v229
    %342 = vmatprep.subr.mxu0 0.0
    %343 = vmatpush1.msra.mxu0 %v230
    %344 = vmatprep.subr.mxu0 0.0
    %345 = vmatpush1.msra.mxu0 0.0
    %346 = vmatprep.subr.mxu0 0.0
    %347 = vmatpush1.msra.mxu0 0.0
    %348 = vmatprep.subr.mxu0 0.0
    %349 = vmatpush1.msra.mxu0 0.0
    %350 = vmatprep.subr.mxu0 0.0
    %351 = vmatpush1.msra.mxu0 0.0
    %352 = vmatprep.subr.mxu0 0.0
    %353 = vmatpush1.msra.mxu0 0.0
    %354 = vmatprep.subr.mxu0 0.0
    %355 = vmatpush1.msra.mxu0 0.0
    %356 = vmatprep.subr.mxu0 0.0
    %357 = vmatpush1.msra.mxu0 0.0
    %358 = vmatprep.subr.mxu0 0.0
    %359 = vmatpush1.msra.mxu0 0.0
    %360 = vmatprep.subr.mxu0 0.0
    %361 = vmatpush1.msra.mxu0 0.0
    %362 = vmatprep.subr.mxu0 0.0
    %363 = vmatpush1.msra.mxu0 0.0
    %364 = vmatprep.subr.mxu0 0.0
    %365 = vmatpush1.msra.mxu0 0.0
    %366 = vmatprep.subr.mxu0 0.0
    %367 = vmatpush1.msra.mxu0 0.0
    %368 = vmatprep.subr.mxu0 0.0
    %369 = vmatpush1.msra.mxu0 0.0
    %370 = vmatprep.subr.mxu0 0.0
    %371 = vmatpush1.msra.mxu0 0.0
    %372 = vmatprep.subr.mxu0 0.0
    %373 = vmatpush1.msra.mxu0 0.0
    %374 = vmatprep.subr.mxu0 0.0
    %375 = vmatpush1.msra.mxu0 0.0
    %376 = vmatprep.subr.mxu0 0.0
    %377 = vmatpush1.msra.mxu0 0.0
    %378 = vmatprep.subr.mxu0 0.0
    %379 = vmatpush1.msra.mxu0 0.0
    %380 = vmatprep.subr.mxu0 0.0
    %381 = vmatpush1.msra.mxu0 0.0
    %382 = vmatprep.subr.mxu0 0.0
    %383 = vmatpush1.msra.mxu0 0.0
    %384 = vmatprep.subr.mxu0 0.0
    %385 = vmatpush1.msra.mxu0 0.0
    %386 = vmatprep.subr.mxu0 0.0
    %387 = vmatpush1.msra.mxu0 0.0
    %388 = vmatprep.subr.mxu0 0.0
    %389 = vmatpush1.msra.mxu0 0.0
    %390 = vmatprep.subr.mxu0 0.0
    %391 = vmatpush1.msra.mxu0 0.0
    %392 = vmatprep.subr.mxu0 0.0
    %393 = vmatpush1.msra.mxu0 0.0
    %394 = vmatprep.subr.mxu0 0.0
    %395 = vmatpush1.msra.mxu0 0.0
    %396 = vmatprep.subr.mxu0 0.0
    %397 = vmatpush1.msra.mxu0 0.0
    %398 = vmatprep.subr.mxu0 0.0
    %399 = vmatpush1.msra.mxu0 0.0
    %400 = vmatprep.mubr.f32.mxu0 0.0
    %401 = vmatmul.mubr.f32.gmra.mrb[0].mxu0 %v334
    %v402 = vpop.f32.mrb[0].mxu0
    %v403 = vadd.f32 %v231, %v402
    %v404 = vpop.f32.mrb[0].mxu0
    %405 = vdwg.mxu0
    %v407 = vrot.slane %v403, 7
    %v409 = vadd.f32 %v224, %v407
    %v410 = vxor.u32 %v409, 2147483648
    %v411 = vmul.f32 %v410, 1.442695
    %v412 = vpow.pop %v411
    %v413 = vadd.f32 %v412, 1.0
    %v414 = vrcp.pop %v413
    %v415 = vmul.f32 1.0, %v414
    %416 = vrot.lane.b32.xlu0 %v407, 64
    %v417 = vpop.permute.xlu0 %416
    %v419 = vmul.f32 %v415, %v417
    %421 = vrot.lane.b32.xlu0 %v419, 64
    %v422 = vpop.permute.xlu0 %421
    %v424 = vadd.f32 %v224, %v422
    %v425 = vtanh.pop %v424
    %v426 = vsub.f32 1.0, %v415
    %428 = vrot.lane.b32.xlu0 %v425, 96
    %v429 = vpop.permute.xlu0 %428
    %v431 = vmul.f32 %v426, %v429
    %v432 = vrot.slane %v330, 7
    %v434 = vmul.f32 %v415, %v432
    %v435 = vadd.f32 %v431, %v434
    %v437 = vrot.slane %v435, 1
    %438 = vrot.lane.b32.xlu0 %v437, 96
    %v439 = vpop.permute.xlu0 %438
    %v440 = vsel %vm153, %v439, 0
    %442 = vmatprep.subr.mxu0 0.0
    %443 = vmatpush1.msra.mxu0 %v227
    %444 = vmatprep.subr.mxu0 0.0
    %445 = vmatpush1.msra.mxu0 %v228
    %446 = vmatprep.subr.mxu0 0.0
    %447 = vmatpush1.msra.mxu0 %v229
    %448 = vmatprep.subr.mxu0 0.0
    %449 = vmatpush1.msra.mxu0 %v230
    %450 = vmatprep.subr.mxu0 0.0
    %451 = vmatpush1.msra.mxu0 0.0
    %452 = vmatprep.subr.mxu0 0.0
    %453 = vmatpush1.msra.mxu0 0.0
    %454 = vmatprep.subr.mxu0 0.0
    %455 = vmatpush1.msra.mxu0 0.0
    %456 = vmatprep.subr.mxu0 0.0
    %457 = vmatpush1.msra.mxu0 0.0
    %458 = vmatprep.subr.mxu0 0.0
    %459 = vmatpush1.msra.mxu0 0.0
    %460 = vmatprep.subr.mxu0 0.0
    %461 = vmatpush1.msra.mxu0 0.0
    %462 = vmatprep.subr.mxu0 0.0
    %463 = vmatpush1.msra.mxu0 0.0
    %464 = vmatprep.subr.mxu0 0.0
    %465 = vmatpush1.msra.mxu0 0.0
    %466 = vmatprep.subr.mxu0 0.0
    %467 = vmatpush1.msra.mxu0 0.0
    %468 = vmatprep.subr.mxu0 0.0
    %469 = vmatpush1.msra.mxu0 0.0
    %470 = vmatprep.subr.mxu0 0.0
    %471 = vmatpush1.msra.mxu0 0.0
    %472 = vmatprep.subr.mxu0 0.0
    %473 = vmatpush1.msra.mxu0 0.0
    %474 = vmatprep.subr.mxu0 0.0
    %475 = vmatpush1.msra.mxu0 0.0
    %476 = vmatprep.subr.mxu0 0.0
    %477 = vmatpush1.msra.mxu0 0.0
    %478 = vmatprep.subr.mxu0 0.0
    %479 = vmatpush1.msra.mxu0 0.0
    %480 = vmatprep.subr.mxu0 0.0
    %481 = vmatpush1.msra.mxu0 0.0
    %482 = vmatprep.subr.mxu0 0.0
    %483 = vmatpush1.msra.mxu0 0.0
    %484 = vmatprep.subr.mxu0 0.0
    %485 = vmatpush1.msra.mxu0 0.0
    %486 = vmatprep.subr.mxu0 0.0
    %487 = vmatpush1.msra.mxu0 0.0
    %488 = vmatprep.subr.mxu0 0.0
    %489 = vmatpush1.msra.mxu0 0.0
    %490 = vmatprep.subr.mxu0 0.0
    %491 = vmatpush1.msra.mxu0 0.0
    %492 = vmatprep.subr.mxu0 0.0
    %493 = vmatpush1.msra.mxu0 0.0
    %494 = vmatprep.subr.mxu0 0.0
    %495 = vmatpush1.msra.mxu0 0.0
    %496 = vmatprep.subr.mxu0 0.0
    %497 = vmatpush1.msra.mxu0 0.0
    %498 = vmatprep.subr.mxu0 0.0
    %499 = vmatpush1.msra.mxu0 0.0
    %500 = vmatprep.subr.mxu0 0.0
    %501 = vmatpush1.msra.mxu0 0.0
    %502 = vmatprep.subr.mxu0 0.0
    %503 = vmatpush1.msra.mxu0 0.0
    %504 = vmatprep.subr.mxu0 0.0
    %505 = vmatpush1.msra.mxu0 0.0
    %506 = vmatprep.mubr.f32.mxu0 0.0
    %507 = vmatmul.mubr.f32.gmra.mrb[0].mxu0 %v440
    %v508 = vpop.f32.mrb[0].mxu0
    %v509 = vadd.f32 %v231, %v508
    %v510 = vpop.f32.mrb[0].mxu0
    %511 = vdwg.mxu0
    %v513 = vrot.slane %v509, 6
    %v515 = vadd.f32 %v224, %v513
    %v516 = vxor.u32 %v515, 2147483648
    %v517 = vmul.f32 %v516, 1.442695
    %v518 = vpow.pop %v517
    %v519 = vadd.f32 %v518, 1.0
    %v520 = vrcp.pop %v519
    %v521 = vmul.f32 1.0, %v520
    %522 = vrot.lane.b32.xlu0 %v513, 64
    %v523 = vpop.permute.xlu0 %522
    %v525 = vmul.f32 %v521, %v523
    %527 = vrot.lane.b32.xlu0 %v525, 64
    %v528 = vpop.permute.xlu0 %527
    %v530 = vadd.f32 %v224, %v528
    %v531 = vtanh.pop %v530
    %v532 = vsub.f32 1.0, %v521
    %534 = vrot.lane.b32.xlu0 %v531, 96
    %v535 = vpop.permute.xlu0 %534
    %v537 = vmul.f32 %v532, %v535
    %v538 = vrot.slane %v435, 7
    %v540 = vmul.f32 %v521, %v538
    %v541 = vadd.f32 %v537, %v540
    %v543 = vrot.slane %v541, 2
    %544 = vrot.lane.b32.xlu0 %v543, 96
    %v545 = vpop.permute.xlu0 %544
    %v546 = vsel %vm153, %v545, 0
    %548 = vmatprep.subr.mxu0 0.0
    %549 = vmatpush1.msra.mxu0 %v227
    %550 = vmatprep.subr.mxu0 0.0
    %551 = vmatpush1.msra.mxu0 %v228
    %552 = vmatprep.subr.mxu0 0.0
    %553 = vmatpush1.msra.mxu0 %v229
    %554 = vmatprep.subr.mxu0 0.0
    %555 = vmatpush1.msra.mxu0 %v230
    %556 = vmatprep.subr.mxu0 0.0
    %557 = vmatpush1.msra.mxu0 0.0
    %558 = vmatprep.subr.mxu0 0.0
    %559 = vmatpush1.msra.mxu0 0.0
    %560 = vmatprep.subr.mxu0 0.0
    %561 = vmatpush1.msra.mxu0 0.0
    %562 = vmatprep.subr.mxu0 0.0
    %563 = vmatpush1.msra.mxu0 0.0
    %564 = vmatprep.subr.mxu0 0.0
    %565 = vmatpush1.msra.mxu0 0.0
    %566 = vmatprep.subr.mxu0 0.0
    %567 = vmatpush1.msra.mxu0 0.0
    %568 = vmatprep.subr.mxu0 0.0
    %569 = vmatpush1.msra.mxu0 0.0
    %570 = vmatprep.subr.mxu0 0.0
    %571 = vmatpush1.msra.mxu0 0.0
    %572 = vmatprep.subr.mxu0 0.0
    %573 = vmatpush1.msra.mxu0 0.0
    %574 = vmatprep.subr.mxu0 0.0
    %575 = vmatpush1.msra.mxu0 0.0
    %576 = vmatprep.subr.mxu0 0.0
    %577 = vmatpush1.msra.mxu0 0.0
    %578 = vmatprep.subr.mxu0 0.0
    %579 = vmatpush1.msra.mxu0 0.0
    %580 = vmatprep.subr.mxu0 0.0
    %581 = vmatpush1.msra.mxu0 0.0
    %582 = vmatprep.subr.mxu0 0.0
    %583 = vmatpush1.msra.mxu0 0.0
    %584 = vmatprep.subr.mxu0 0.0
    %585 = vmatpush1.msra.mxu0 0.0
    %586 = vmatprep.subr.mxu0 0.0
    %587 = vmatpush1.msra.mxu0 0.0
    %588 = vmatprep.subr.mxu0 0.0
    %589 = vmatpush1.msra.mxu0 0.0
    %590 = vmatprep.subr.mxu0 0.0
    %591 = vmatpush1.msra.mxu0 0.0
    %592 = vmatprep.subr.mxu0 0.0
    %593 = vmatpush1.msra.mxu0 0.0
    %594 = vmatprep.subr.mxu0 0.0
    %595 = vmatpush1.msra.mxu0 0.0
    %596 = vmatprep.subr.mxu0 0.0
    %597 = vmatpush1.msra.mxu0 0.0
    %598 = vmatprep.subr.mxu0 0.0
    %599 = vmatpush1.msra.mxu0 0.0
    %600 = vmatprep.subr.mxu0 0.0
    %601 = vmatpush1.msra.mxu0 0.0
    %602 = vmatprep.subr.mxu0 0.0
    %603 = vmatpush1.msra.mxu0 0.0
    %604 = vmatprep.subr.mxu0 0.0
    %605 = vmatpush1.msra.mxu0 0.0
    %606 = vmatprep.subr.mxu0 0.0
    %607 = vmatpush1.msra.mxu0 0.0
    %608 = vmatprep.subr.mxu0 0.0
    %609 = vmatpush1.msra.mxu0 0.0
    %610 = vmatprep.subr.mxu0 0.0
    %611 = vmatpush1.msra.mxu0 0.0
    %612 = vmatprep.mubr.f32.mxu0 0.0
    %613 = vmatmul.mubr.f32.gmra.mrb[0].mxu0 %v546
    %v614 = vpop.f32.mrb[0].mxu0
    %v615 = vadd.f32 %v231, %v614
    %v616 = vpop.f32.mrb[0].mxu0
    %617 = vdwg.mxu0
    %v619 = vrot.slane %v615, 5
    %v621 = vadd.f32 %v224, %v619
    %v622 = vxor.u32 %v621, 2147483648
    %v623 = vmul.f32 %v622, 1.442695
    %v624 = vpow.pop %v623
    %v625 = vadd.f32 %v624, 1.0
    %v626 = vrcp.pop %v625
    %v627 = vmul.f32 1.0, %v626
    %628 = vrot.lane.b32.xlu0 %v619, 64
    %v629 = vpop.permute.xlu0 %628
    %v631 = vmul.f32 %v627, %v629
    %633 = vrot.lane.b32.xlu0 %v631, 64
    %v634 = vpop.permute.xlu0 %633
    %v636 = vadd.f32 %v224, %v634
    %v637 = vtanh.pop %v636
    %v638 = vsub.f32 1.0, %v627
    %640 = vrot.lane.b32.xlu0 %v637, 96
    %v641 = vpop.permute.xlu0 %640
    %v643 = vmul.f32 %v638, %v641
    %v644 = vrot.slane %v541, 7
    %v646 = vmul.f32 %v627, %v644
    %v647 = vadd.f32 %v643, %v646
    %v649 = vrot.slane %v647, 3
    %650 = vrot.lane.b32.xlu0 %v649, 96
    %v651 = vpop.permute.xlu0 %650
    %v652 = vsel %vm153, %v651, 0
    %654 = vmatprep.subr.mxu0 0.0
    %655 = vmatpush1.msra.mxu0 %v227
    %656 = vmatprep.subr.mxu0 0.0
    %657 = vmatpush1.msra.mxu0 %v228
    %658 = vmatprep.subr.mxu0 0.0
    %659 = vmatpush1.msra.mxu0 %v229
    %660 = vmatprep.subr.mxu0 0.0
    %661 = vmatpush1.msra.mxu0 %v230
    %662 = vmatprep.subr.mxu0 0.0
    %663 = vmatpush1.msra.mxu0 0.0
    %664 = vmatprep.subr.mxu0 0.0
    %665 = vmatpush1.msra.mxu0 0.0
    %666 = vmatprep.subr.mxu0 0.0
    %667 = vmatpush1.msra.mxu0 0.0
    %668 = vmatprep.subr.mxu0 0.0
    %669 = vmatpush1.msra.mxu0 0.0
    %670 = vmatprep.subr.mxu0 0.0
    %671 = vmatpush1.msra.mxu0 0.0
    %672 = vmatprep.subr.mxu0 0.0
    %673 = vmatpush1.msra.mxu0 0.0
    %674 = vmatprep.subr.mxu0 0.0
    %675 = vmatpush1.msra.mxu0 0.0
    %676 = vmatprep.subr.mxu0 0.0
    %677 = vmatpush1.msra.mxu0 0.0
    %678 = vmatprep.subr.mxu0 0.0
    %679 = vmatpush1.msra.mxu0 0.0
    %680 = vmatprep.subr.mxu0 0.0
    %681 = vmatpush1.msra.mxu0 0.0
    %682 = vmatprep.subr.mxu0 0.0
    %683 = vmatpush1.msra.mxu0 0.0
    %684 = vmatprep.subr.mxu0 0.0
    %685 = vmatpush1.msra.mxu0 0.0
    %686 = vmatprep.subr.mxu0 0.0
    %687 = vmatpush1.msra.mxu0 0.0
    %688 = vmatprep.subr.mxu0 0.0
    %689 = vmatpush1.msra.mxu0 0.0
    %690 = vmatprep.subr.mxu0 0.0
    %691 = vmatpush1.msra.mxu0 0.0
    %692 = vmatprep.subr.mxu0 0.0
    %693 = vmatpush1.msra.mxu0 0.0
    %694 = vmatprep.subr.mxu0 0.0
    %695 = vmatpush1.msra.mxu0 0.0
    %696 = vmatprep.subr.mxu0 0.0
    %697 = vmatpush1.msra.mxu0 0.0
    %698 = vmatprep.subr.mxu0 0.0
    %699 = vmatpush1.msra.mxu0 0.0
    %700 = vmatprep.subr.mxu0 0.0
    %701 = vmatpush1.msra.mxu0 0.0
    %702 = vmatprep.subr.mxu0 0.0
    %703 = vmatpush1.msra.mxu0 0.0
    %704 = vmatprep.subr.mxu0 0.0
    %705 = vmatpush1.msra.mxu0 0.0
    %706 = vmatprep.subr.mxu0 0.0
    %707 = vmatpush1.msra.mxu0 0.0
    %708 = vmatprep.subr.mxu0 0.0
    %709 = vmatpush1.msra.mxu0 0.0
    %710 = vmatprep.subr.mxu0 0.0
    %711 = vmatpush1.msra.mxu0 0.0
    %712 = vmatprep.subr.mxu0 0.0
    %713 = vmatpush1.msra.mxu0 0.0
    %714 = vmatprep.subr.mxu0 0.0
    %715 = vmatpush1.msra.mxu0 0.0
    %716 = vmatprep.subr.mxu0 0.0
    %717 = vmatpush1.msra.mxu0 0.0
    %718 = vmatprep.mubr.f32.mxu0 0.0
    %719 = vmatmul.mubr.f32.gmra.mrb[0].mxu0 %v652
    %v720 = vpop.f32.mrb[0].mxu0
    %v721 = vadd.f32 %v231, %v720
    %v722 = vpop.f32.mrb[0].mxu0
    %723 = vdwg.mxu0
    %v725 = vrot.slane %v721, 4
    %v727 = vadd.f32 %v224, %v725
    %v728 = vxor.u32 %v727, 2147483648
    %v729 = vmul.f32 %v728, 1.442695
    %v730 = vpow.pop %v729
    %v731 = vadd.f32 %v730, 1.0
    %v732 = vrcp.pop %v731
    %v733 = vmul.f32 1.0, %v732
    %734 = vrot.lane.b32.xlu0 %v725, 64
    %v735 = vpop.permute.xlu0 %734
    %v737 = vmul.f32 %v733, %v735
    %739 = vrot.lane.b32.xlu0 %v737, 64
    %v740 = vpop.permute.xlu0 %739
    %v742 = vadd.f32 %v224, %v740
    %v743 = vtanh.pop %v742
    %v744 = vsub.f32 1.0, %v733
    %746 = vrot.lane.b32.xlu0 %v743, 96
    %v747 = vpop.permute.xlu0 %746
    %v749 = vmul.f32 %v744, %v747
    %v750 = vrot.slane %v647, 7
    %v752 = vmul.f32 %v733, %v750
    %v753 = vadd.f32 %v749, %v752
    %v755 = vrot.slane %v753, 4
    %756 = vrot.lane.b32.xlu0 %v755, 96
    %v757 = vpop.permute.xlu0 %756
    %v758 = vsel %vm153, %v757, 0
    %760 = vmatprep.subr.mxu0 0.0
    %761 = vmatpush1.msra.mxu0 %v227
    %762 = vmatprep.subr.mxu0 0.0
    %763 = vmatpush1.msra.mxu0 %v228
    %764 = vmatprep.subr.mxu0 0.0
    %765 = vmatpush1.msra.mxu0 %v229
    %766 = vmatprep.subr.mxu0 0.0
    %767 = vmatpush1.msra.mxu0 %v230
    %768 = vmatprep.subr.mxu0 0.0
    %769 = vmatpush1.msra.mxu0 0.0
    %770 = vmatprep.subr.mxu0 0.0
    %771 = vmatpush1.msra.mxu0 0.0
    %772 = vmatprep.subr.mxu0 0.0
    %773 = vmatpush1.msra.mxu0 0.0
    %774 = vmatprep.subr.mxu0 0.0
    %775 = vmatpush1.msra.mxu0 0.0
    %776 = vmatprep.subr.mxu0 0.0
    %777 = vmatpush1.msra.mxu0 0.0
    %778 = vmatprep.subr.mxu0 0.0
    %779 = vmatpush1.msra.mxu0 0.0
    %780 = vmatprep.subr.mxu0 0.0
    %781 = vmatpush1.msra.mxu0 0.0
    %782 = vmatprep.subr.mxu0 0.0
    %783 = vmatpush1.msra.mxu0 0.0
    %784 = vmatprep.subr.mxu0 0.0
    %785 = vmatpush1.msra.mxu0 0.0
    %786 = vmatprep.subr.mxu0 0.0
    %787 = vmatpush1.msra.mxu0 0.0
    %788 = vmatprep.subr.mxu0 0.0
    %789 = vmatpush1.msra.mxu0 0.0
    %790 = vmatprep.subr.mxu0 0.0
    %791 = vmatpush1.msra.mxu0 0.0
    %792 = vmatprep.subr.mxu0 0.0
    %793 = vmatpush1.msra.mxu0 0.0
    %794 = vmatprep.subr.mxu0 0.0
    %795 = vmatpush1.msra.mxu0 0.0
    %796 = vmatprep.subr.mxu0 0.0
    %797 = vmatpush1.msra.mxu0 0.0
    %798 = vmatprep.subr.mxu0 0.0
    %799 = vmatpush1.msra.mxu0 0.0
    %800 = vmatprep.subr.mxu0 0.0
    %801 = vmatpush1.msra.mxu0 0.0
    %802 = vmatprep.subr.mxu0 0.0
    %803 = vmatpush1.msra.mxu0 0.0
    %804 = vmatprep.subr.mxu0 0.0
    %805 = vmatpush1.msra.mxu0 0.0
    %806 = vmatprep.subr.mxu0 0.0
    %807 = vmatpush1.msra.mxu0 0.0
    %808 = vmatprep.subr.mxu0 0.0
    %809 = vmatpush1.msra.mxu0 0.0
    %810 = vmatprep.subr.mxu0 0.0
    %811 = vmatpush1.msra.mxu0 0.0
    %812 = vmatprep.subr.mxu0 0.0
    %813 = vmatpush1.msra.mxu0 0.0
    %814 = vmatprep.subr.mxu0 0.0
    %815 = vmatpush1.msra.mxu0 0.0
    %816 = vmatprep.subr.mxu0 0.0
    %817 = vmatpush1.msra.mxu0 0.0
    %818 = vmatprep.subr.mxu0 0.0
    %819 = vmatpush1.msra.mxu0 0.0
    %820 = vmatprep.subr.mxu0 0.0
    %821 = vmatpush1.msra.mxu0 0.0
    %822 = vmatprep.subr.mxu0 0.0
    %823 = vmatpush1.msra.mxu0 0.0
    %824 = vmatprep.mubr.f32.mxu0 0.0
    %825 = vmatmul.mubr.f32.gmra.mrb[0].mxu0 %v758
    %v826 = vpop.f32.mrb[0].mxu0
    %v827 = vadd.f32 %v231, %v826
    %v828 = vpop.f32.mrb[0].mxu0
    %829 = vdwg.mxu0
    %v831 = vrot.slane %v827, 3
    %v833 = vadd.f32 %v224, %v831
    %v834 = vxor.u32 %v833, 2147483648
    %v835 = vmul.f32 %v834, 1.442695
    %v836 = vpow.pop %v835
    %v837 = vadd.f32 %v836, 1.0
    %v838 = vrcp.pop %v837
    %v839 = vmul.f32 1.0, %v838
    %840 = vrot.lane.b32.xlu0 %v831, 64
    %v841 = vpop.permute.xlu0 %840
    %v843 = vmul.f32 %v839, %v841
    %845 = vrot.lane.b32.xlu0 %v843, 64
    %v846 = vpop.permute.xlu0 %845
    %v848 = vadd.f32 %v224, %v846
    %v849 = vtanh.pop %v848
    %v850 = vsub.f32 1.0, %v839
    %852 = vrot.lane.b32.xlu0 %v849, 96
    %v853 = vpop.permute.xlu0 %852
    %v855 = vmul.f32 %v850, %v853
    %v856 = vrot.slane %v753, 7
    %v858 = vmul.f32 %v839, %v856
    %v859 = vadd.f32 %v855, %v858
    %v861 = vrot.slane %v859, 5
    %862 = vrot.lane.b32.xlu0 %v861, 96
    %v863 = vpop.permute.xlu0 %862
    %v864 = vsel %vm153, %v863, 0
    %866 = vmatprep.subr.mxu0 0.0
    %867 = vmatpush1.msra.mxu0 %v227
    %868 = vmatprep.subr.mxu0 0.0
    %869 = vmatpush1.msra.mxu0 %v228
    %870 = vmatprep.subr.mxu0 0.0
    %871 = vmatpush1.msra.mxu0 %v229
    %872 = vmatprep.subr.mxu0 0.0
    %873 = vmatpush1.msra.mxu0 %v230
    %874 = vmatprep.subr.mxu0 0.0
    %875 = vmatpush1.msra.mxu0 0.0
    %876 = vmatprep.subr.mxu0 0.0
    %877 = vmatpush1.msra.mxu0 0.0
    %878 = vmatprep.subr.mxu0 0.0
    %879 = vmatpush1.msra.mxu0 0.0
    %880 = vmatprep.subr.mxu0 0.0
    %881 = vmatpush1.msra.mxu0 0.0
    %882 = vmatprep.subr.mxu0 0.0
    %883 = vmatpush1.msra.mxu0 0.0
    %884 = vmatprep.subr.mxu0 0.0
    %885 = vmatpush1.msra.mxu0 0.0
    %886 = vmatprep.subr.mxu0 0.0
    %887 = vmatpush1.msra.mxu0 0.0
    %888 = vmatprep.subr.mxu0 0.0
    %889 = vmatpush1.msra.mxu0 0.0
    %890 = vmatprep.subr.mxu0 0.0
    %891 = vmatpush1.msra.mxu0 0.0
    %892 = vmatprep.subr.mxu0 0.0
    %893 = vmatpush1.msra.mxu0 0.0
    %894 = vmatprep.subr.mxu0 0.0
    %895 = vmatpush1.msra.mxu0 0.0
    %896 = vmatprep.subr.mxu0 0.0
    %897 = vmatpush1.msra.mxu0 0.0
    %898 = vmatprep.subr.mxu0 0.0
    %899 = vmatpush1.msra.mxu0 0.0
    %900 = vmatprep.subr.mxu0 0.0
    %901 = vmatpush1.msra.mxu0 0.0
    %902 = vmatprep.subr.mxu0 0.0
    %903 = vmatpush1.msra.mxu0 0.0
    %904 = vmatprep.subr.mxu0 0.0
    %905 = vmatpush1.msra.mxu0 0.0
    %906 = vmatprep.subr.mxu0 0.0
    %907 = vmatpush1.msra.mxu0 0.0
    %908 = vmatprep.subr.mxu0 0.0
    %909 = vmatpush1.msra.mxu0 0.0
    %910 = vmatprep.subr.mxu0 0.0
    %911 = vmatpush1.msra.mxu0 0.0
    %912 = vmatprep.subr.mxu0 0.0
    %913 = vmatpush1.msra.mxu0 0.0
    %914 = vmatprep.subr.mxu0 0.0
    %915 = vmatpush1.msra.mxu0 0.0
    %916 = vmatprep.subr.mxu0 0.0
    %917 = vmatpush1.msra.mxu0 0.0
    %918 = vmatprep.subr.mxu0 0.0
    %919 = vmatpush1.msra.mxu0 0.0
    %920 = vmatprep.subr.mxu0 0.0
    %921 = vmatpush1.msra.mxu0 0.0
    %922 = vmatprep.subr.mxu0 0.0
    %923 = vmatpush1.msra.mxu0 0.0
    %924 = vmatprep.subr.mxu0 0.0
    %925 = vmatpush1.msra.mxu0 0.0
    %926 = vmatprep.subr.mxu0 0.0
    %927 = vmatpush1.msra.mxu0 0.0
    %928 = vmatprep.subr.mxu0 0.0
    %929 = vmatpush1.msra.mxu0 0.0
    %930 = vmatprep.mubr.f32.mxu0 0.0
    %931 = vmatmul.mubr.f32.gmra.mrb[0].mxu0 %v864
    %v932 = vpop.f32.mrb[0].mxu0
    %v933 = vadd.f32 %v231, %v932
    %v934 = vpop.f32.mrb[0].mxu0
    %935 = vdwg.mxu0
    %v937 = vrot.slane %v933, 2
    %v939 = vadd.f32 %v224, %v937
    %v940 = vxor.u32 %v939, 2147483648
    %v941 = vmul.f32 %v940, 1.442695
    %v942 = vpow.pop %v941
    %v943 = vadd.f32 %v942, 1.0
    %v944 = vrcp.pop %v943
    %v945 = vmul.f32 1.0, %v944
    %946 = vrot.lane.b32.xlu0 %v937, 64
    %v947 = vpop.permute.xlu0 %946
    %v949 = vmul.f32 %v945, %v947
    %951 = vrot.lane.b32.xlu0 %v949, 64
    %v952 = vpop.permute.xlu0 %951
    %v954 = vadd.f32 %v224, %v952
    %v955 = vtanh.pop %v954
    %v956 = vsub.f32 1.0, %v945
    %958 = vrot.lane.b32.xlu0 %v955, 96
    %v959 = vpop.permute.xlu0 %958
    %v961 = vmul.f32 %v956, %v959
    %v962 = vrot.slane %v859, 7
    %v964 = vmul.f32 %v945, %v962
    %v965 = vadd.f32 %v961, %v964
    %v967 = vrot.slane %v965, 6
    %968 = vrot.lane.b32.xlu0 %v967, 96
    %v969 = vpop.permute.xlu0 %968
    %v970 = vsel %vm153, %v969, 0
    %972 = vmatprep.subr.mxu0 0.0
    %973 = vmatpush1.msra.mxu0 %v227
    %974 = vmatprep.subr.mxu0 0.0
    %975 = vmatpush1.msra.mxu0 %v228
    %976 = vmatprep.subr.mxu0 0.0
    %977 = vmatpush1.msra.mxu0 %v229
    %978 = vmatprep.subr.mxu0 0.0
    %979 = vmatpush1.msra.mxu0 %v230
    %980 = vmatprep.subr.mxu0 0.0
    %981 = vmatpush1.msra.mxu0 0.0
    %982 = vmatprep.subr.mxu0 0.0
    %983 = vmatpush1.msra.mxu0 0.0
    %984 = vmatprep.subr.mxu0 0.0
    %985 = vmatpush1.msra.mxu0 0.0
    %986 = vmatprep.subr.mxu0 0.0
    %987 = vmatpush1.msra.mxu0 0.0
    %988 = vmatprep.subr.mxu0 0.0
    %989 = vmatpush1.msra.mxu0 0.0
    %990 = vmatprep.subr.mxu0 0.0
    %991 = vmatpush1.msra.mxu0 0.0
    %992 = vmatprep.subr.mxu0 0.0
    %993 = vmatpush1.msra.mxu0 0.0
    %994 = vmatprep.subr.mxu0 0.0
    %995 = vmatpush1.msra.mxu0 0.0
    %996 = vmatprep.subr.mxu0 0.0
    %997 = vmatpush1.msra.mxu0 0.0
    %998 = vmatprep.subr.mxu0 0.0
    %999 = vmatpush1.msra.mxu0 0.0
    %1000 = vmatprep.subr.mxu0 0.0
    %1001 = vmatpush1.msra.mxu0 0.0
    %1002 = vmatprep.subr.mxu0 0.0
    %1003 = vmatpush1.msra.mxu0 0.0
    %1004 = vmatprep.subr.mxu0 0.0
    %1005 = vmatpush1.msra.mxu0 0.0
    %1006 = vmatprep.subr.mxu0 0.0
    %1007 = vmatpush1.msra.mxu0 0.0
    %1008 = vmatprep.subr.mxu0 0.0
    %1009 = vmatpush1.msra.mxu0 0.0
    %1010 = vmatprep.subr.mxu0 0.0
    %1011 = vmatpush1.msra.mxu0 0.0
    %1012 = vmatprep.subr.mxu0 0.0
    %1013 = vmatpush1.msra.mxu0 0.0
    %1014 = vmatprep.subr.mxu0 0.0
    %1015 = vmatpush1.msra.mxu0 0.0
    %1016 = vmatprep.subr.mxu0 0.0
    %1017 = vmatpush1.msra.mxu0 0.0
    %1018 = vmatprep.subr.mxu0 0.0
    %1019 = vmatpush1.msra.mxu0 0.0
    %1020 = vmatprep.subr.mxu0 0.0
    %1021 = vmatpush1.msra.mxu0 0.0
    %1022 = vmatprep.subr.mxu0 0.0
    %1023 = vmatpush1.msra.mxu0 0.0
    %1024 = vmatprep.subr.mxu0 0.0
    %1025 = vmatpush1.msra.mxu0 0.0
    %1026 = vmatprep.subr.mxu0 0.0
    %1027 = vmatpush1.msra.mxu0 0.0
    %1028 = vmatprep.subr.mxu0 0.0
    %1029 = vmatpush1.msra.mxu0 0.0
    %1030 = vmatprep.subr.mxu0 0.0
    %1031 = vmatpush1.msra.mxu0 0.0
    %1032 = vmatprep.subr.mxu0 0.0
    %1033 = vmatpush1.msra.mxu0 0.0
    %1034 = vmatprep.subr.mxu0 0.0
    %1035 = vmatpush1.msra.mxu0 0.0
    %1036 = vmatprep.mubr.f32.mxu0 0.0
    %1037 = vmatmul.mubr.f32.gmra.mrb[0].mxu0 %v970
    %v1038 = vpop.f32.mrb[0].mxu0
    %v1039 = vadd.f32 %v231, %v1038
    %v1040 = vpop.f32.mrb[0].mxu0
    %1041 = vdwg.mxu0
    %v1043 = vrot.slane %v1039, 1
    %v1045 = vadd.f32 %v224, %v1043
    %v1046 = vxor.u32 %v1045, 2147483648
    %v1047 = vmul.f32 %v1046, 1.442695
    %v1048 = vpow.pop %v1047
    %v1049 = vadd.f32 %v1048, 1.0
    %v1050 = vrcp.pop %v1049
    %v1051 = vmul.f32 1.0, %v1050
    %1052 = vrot.lane.b32.xlu0 %v1043, 64
    %v1053 = vpop.permute.xlu0 %1052
    %v1055 = vmul.f32 %v1051, %v1053
    %1057 = vrot.lane.b32.xlu0 %v1055, 64
    %v1058 = vpop.permute.xlu0 %1057
    %v1060 = vadd.f32 %v224, %v1058
    %v1061 = vtanh.pop %v1060
    %v1062 = vsub.f32 1.0, %v1051
    %1064 = vrot.lane.b32.xlu0 %v1061, 96
    %v1065 = vpop.permute.xlu0 %1064
    %v1067 = vmul.f32 %v1062, %v1065
    %v1068 = vrot.slane %v965, 7
    %v1070 = vmul.f32 %v1051, %v1068
    %v1071 = vadd.f32 %v1067, %v1070
    %v1072 = vld [vmem:[%s7] sm:$0xff]
    %v1073 = vld [vmem:[%s7 + $0x8] sm:$0xff]
    %v1074 = vld [vmem:[%s7 + $0x10] sm:$0xff]
    %v1075 = vld [vmem:[%s7 + $0x18] sm:$0xff]
    %v1076 = vld [vmem:[%s8] sm:$0xff]
    %v1077 = vld [vmem:[%s8 + $0x8] sm:$0xff]
    %v1078 = vld [vmem:[%s8 + $0x10] sm:$0xff]
    %v1079 = vld [vmem:[%s8 + $0x18] sm:$0xff]
    %v1080 = vld [vmem:[%s9] sm:$0x1]
    %v1081 = vld [vmem:[%s10] sm:$0xff]
    %v1082 = vld [vmem:[%s10 + $0x8] sm:$0xff]
    %v1083 = vld [vmem:[%s10 + $0x10] sm:$0xff]
    %v1084 = vld [vmem:[%s10 + $0x18] sm:$0xff]
    %v1085 = vld [vmem:[%s11] sm:$0x1]
    %s1086 = sld [smem:[#allocation2]]
    %s1087 = scalar_lea.smem [#allocation3], 0
    %1088 = sst [smem:[%s1087]] %s1086
    %s1089 = sld [smem:[#allocation3]]
    %s1090 = scalar_lea.vmem %s2, %s1089
    %v1091 = vld [vmem:[%s1090] sm:$0x1]
    %v1093 = vrot.slane %v1071, 7
    %1094 = vrot.lane.b32.xlu0 %v1093, 96
    %v1095 = vpop.permute.xlu0 %1094
    %v1096 = vsel %vm153, %v1095, 0
    %1098 = vmatprep.subr.mxu0 0.0
    %1099 = vmatpush1.msra.mxu0 %v1076
    %1100 = vmatprep.subr.mxu0 0.0
    %1101 = vmatpush1.msra.mxu0 %v1077
    %1102 = vmatprep.subr.mxu0 0.0
    %1103 = vmatpush1.msra.mxu0 %v1078
    %1104 = vmatprep.subr.mxu0 0.0
    %1105 = vmatpush1.msra.mxu0 %v1079
    %1106 = vmatprep.subr.mxu0 0.0
    %1107 = vmatpush1.msra.mxu0 0.0
    %1108 = vmatprep.subr.mxu0 0.0
    %1109 = vmatpush1.msra.mxu0 0.0
    %1110 = vmatprep.subr.mxu0 0.0
    %1111 = vmatpush1.msra.mxu0 0.0
    %1112 = vmatprep.subr.mxu0 0.0
    %1113 = vmatpush1.msra.mxu0 0.0
    %1114 = vmatprep.subr.mxu0 0.0
    %1115 = vmatpush1.msra.mxu0 0.0
    %1116 = vmatprep.subr.mxu0 0.0
    %1117 = vmatpush1.msra.mxu0 0.0
    %1118 = vmatprep.subr.mxu0 0.0
    %1119 = vmatpush1.msra.mxu0 0.0
    %1120 = vmatprep.subr.mxu0 0.0
    %1121 = vmatpush1.msra.mxu0 0.0
    %1122 = vmatprep.subr.mxu0 0.0
    %1123 = vmatpush1.msra.mxu0 0.0
    %1124 = vmatprep.subr.mxu0 0.0
    %1125 = vmatpush1.msra.mxu0 0.0
    %1126 = vmatprep.subr.mxu0 0.0
    %1127 = vmatpush1.msra.mxu0 0.0
    %1128 = vmatprep.subr.mxu0 0.0
    %1129 = vmatpush1.msra.mxu0 0.0
    %1130 = vmatprep.subr.mxu0 0.0
    %1131 = vmatpush1.msra.mxu0 0.0
    %1132 = vmatprep.subr.mxu0 0.0
    %1133 = vmatpush1.msra.mxu0 0.0
    %1134 = vmatprep.subr.mxu0 0.0
    %1135 = vmatpush1.msra.mxu0 0.0
    %1136 = vmatprep.subr.mxu0 0.0
    %1137 = vmatpush1.msra.mxu0 0.0
    %1138 = vmatprep.subr.mxu0 0.0
    %1139 = vmatpush1.msra.mxu0 0.0
    %1140 = vmatprep.subr.mxu0 0.0
    %1141 = vmatpush1.msra.mxu0 0.0
    %1142 = vmatprep.subr.mxu0 0.0
    %1143 = vmatpush1.msra.mxu0 0.0
    %1144 = vmatprep.subr.mxu0 0.0
    %1145 = vmatpush1.msra.mxu0 0.0
    %1146 = vmatprep.subr.mxu0 0.0
    %1147 = vmatpush1.msra.mxu0 0.0
    %1148 = vmatprep.subr.mxu0 0.0
    %1149 = vmatpush1.msra.mxu0 0.0
    %1150 = vmatprep.subr.mxu0 0.0
    %1151 = vmatpush1.msra.mxu0 0.0
    %1152 = vmatprep.subr.mxu0 0.0
    %1153 = vmatpush1.msra.mxu0 0.0
    %1154 = vmatprep.subr.mxu0 0.0
    %1155 = vmatpush1.msra.mxu0 0.0
    %1156 = vmatprep.subr.mxu0 0.0
    %1157 = vmatpush1.msra.mxu0 0.0
    %1158 = vmatprep.subr.mxu0 0.0
    %1159 = vmatpush1.msra.mxu0 0.0
    %1160 = vmatprep.subr.mxu0 0.0
    %1161 = vmatpush1.msra.mxu0 0.0
    %1162 = vmatprep.mubr.f32.mxu0 0.0
    %1163 = vmatmul.mubr.f32.gmra.mrb[0].mxu0 %v1096
    %v1164 = vpop.f32.mrb[0].mxu0
    %v1165 = vadd.f32 0.0, %v1164
    %v1166 = vpop.f32.mrb[0].mxu0
    %1167 = vdwg.mxu0
    %v1169 = vsel %vm153, %v1091, 0
    %1171 = vmatprep.subr.mxu0 0.0
    %1172 = vmatpush1.msra.mxu0 %v1072
    %1173 = vmatprep.subr.mxu0 0.0
    %1174 = vmatpush1.msra.mxu0 %v1073
    %1175 = vmatprep.subr.mxu0 0.0
    %1176 = vmatpush1.msra.mxu0 %v1074
    %1177 = vmatprep.subr.mxu0 0.0
    %1178 = vmatpush1.msra.mxu0 %v1075
    %1179 = vmatprep.subr.mxu0 0.0
    %1180 = vmatpush1.msra.mxu0 0.0
    %1181 = vmatprep.subr.mxu0 0.0
    %1182 = vmatpush1.msra.mxu0 0.0
    %1183 = vmatprep.subr.mxu0 0.0
    %1184 = vmatpush1.msra.mxu0 0.0
    %1185 = vmatprep.subr.mxu0 0.0
    %1186 = vmatpush1.msra.mxu0 0.0
    %1187 = vmatprep.subr.mxu0 0.0
    %1188 = vmatpush1.msra.mxu0 0.0
    %1189 = vmatprep.subr.mxu0 0.0
    %1190 = vmatpush1.msra.mxu0 0.0
    %1191 = vmatprep.subr.mxu0 0.0
    %1192 = vmatpush1.msra.mxu0 0.0
    %1193 = vmatprep.subr.mxu0 0.0
    %1194 = vmatpush1.msra.mxu0 0.0
    %1195 = vmatprep.subr.mxu0 0.0
    %1196 = vmatpush1.msra.mxu0 0.0
    %1197 = vmatprep.subr.mxu0 0.0
    %1198 = vmatpush1.msra.mxu0 0.0
    %1199 = vmatprep.subr.mxu0 0.0
    %1200 = vmatpush1.msra.mxu0 0.0
    %1201 = vmatprep.subr.mxu0 0.0
    %1202 = vmatpush1.msra.mxu0 0.0
    %1203 = vmatprep.subr.mxu0 0.0
    %1204 = vmatpush1.msra.mxu0 0.0
    %1205 = vmatprep.subr.mxu0 0.0
    %1206 = vmatpush1.msra.mxu0 0.0
    %1207 = vmatprep.subr.mxu0 0.0
    %1208 = vmatpush1.msra.mxu0 0.0
    %1209 = vmatprep.subr.mxu0 0.0
    %1210 = vmatpush1.msra.mxu0 0.0
    %1211 = vmatprep.subr.mxu0 0.0
    %1212 = vmatpush1.msra.mxu0 0.0
    %1213 = vmatprep.subr.mxu0 0.0
    %1214 = vmatpush1.msra.mxu0 0.0
    %1215 = vmatprep.subr.mxu0 0.0
    %1216 = vmatpush1.msra.mxu0 0.0
    %1217 = vmatprep.subr.mxu0 0.0
    %1218 = vmatpush1.msra.mxu0 0.0
    %1219 = vmatprep.subr.mxu0 0.0
    %1220 = vmatpush1.msra.mxu0 0.0
    %1221 = vmatprep.subr.mxu0 0.0
    %1222 = vmatpush1.msra.mxu0 0.0
    %1223 = vmatprep.subr.mxu0 0.0
    %1224 = vmatpush1.msra.mxu0 0.0
    %1225 = vmatprep.subr.mxu0 0.0
    %1226 = vmatpush1.msra.mxu0 0.0
    %1227 = vmatprep.subr.mxu0 0.0
    %1228 = vmatpush1.msra.mxu0 0.0
    %1229 = vmatprep.subr.mxu0 0.0
    %1230 = vmatpush1.msra.mxu0 0.0
    %1231 = vmatprep.subr.mxu0 0.0
    %1232 = vmatpush1.msra.mxu0 0.0
    %1233 = vmatprep.subr.mxu0 0.0
    %1234 = vmatpush1.msra.mxu0 0.0
    %1235 = vmatprep.mubr.f32.mxu0 0.0
    %1236 = vmatmul.mubr.f32.gmra.mrb[0].mxu0 %v1169
    %v1237 = vpop.f32.mrb[0].mxu0
    %v1238 = vadd.f32 %v1165, %v1237
    %v1239 = vpop.f32.mrb[0].mxu0
    %1240 = vdwg.mxu0
    %v1241 = vadd.f32 %v1238, %v1080
    %v1242 = vtanh.pop %v1241
    %v1244 = vsel %vm153, %v1242, 0
    %1246 = vmatprep.subr.mxu0 0.0
    %1247 = vmatpush1.msra.mxu0 %v1081
    %1248 = vmatprep.subr.mxu0 0.0
    %1249 = vmatpush1.msra.mxu0 %v1082
    %1250 = vmatprep.subr.mxu0 0.0
    %1251 = vmatpush1.msra.mxu0 %v1083
    %1252 = vmatprep.subr.mxu0 0.0
    %1253 = vmatpush1.msra.mxu0 %v1084
    %1254 = vmatprep.subr.mxu0 0.0
    %1255 = vmatpush1.msra.mxu0 0.0
    %1256 = vmatprep.subr.mxu0 0.0
    %1257 = vmatpush1.msra.mxu0 0.0
    %1258 = vmatprep.subr.mxu0 0.0
    %1259 = vmatpush1.msra.mxu0 0.0
    %1260 = vmatprep.subr.mxu0 0.0
    %1261 = vmatpush1.msra.mxu0 0.0
    %1262 = vmatprep.subr.mxu0 0.0
    %1263 = vmatpush1.msra.mxu0 0.0
    %1264 = vmatprep.subr.mxu0 0.0
    %1265 = vmatpush1.msra.mxu0 0.0
    %1266 = vmatprep.subr.mxu0 0.0
    %1267 = vmatpush1.msra.mxu0 0.0
    %1268 = vmatprep.subr.mxu0 0.0
    %1269 = vmatpush1.msra.mxu0 0.0
    %1270 = vmatprep.subr.mxu0 0.0
    %1271 = vmatpush1.msra.mxu0 0.0
    %1272 = vmatprep.subr.mxu0 0.0
    %1273 = vmatpush1.msra.mxu0 0.0
    %1274 = vmatprep.subr.mxu0 0.0
    %1275 = vmatpush1.msra.mxu0 0.0
    %1276 = vmatprep.subr.mxu0 0.0
    %1277 = vmatpush1.msra.mxu0 0.0
    %1278 = vmatprep.subr.mxu0 0.0
    %1279 = vmatpush1.msra.mxu0 0.0
    %1280 = vmatprep.subr.mxu0 0.0
    %1281 = vmatpush1.msra.mxu0 0.0
    %1282 = vmatprep.subr.mxu0 0.0
    %1283 = vmatpush1.msra.mxu0 0.0
    %1284 = vmatprep.subr.mxu0 0.0
    %1285 = vmatpush1.msra.mxu0 0.0
    %1286 = vmatprep.subr.mxu0 0.0
    %1287 = vmatpush1.msra.mxu0 0.0
    %1288 = vmatprep.subr.mxu0 0.0
    %1289 = vmatpush1.msra.mxu0 0.0
    %1290 = vmatprep.subr.mxu0 0.0
    %1291 = vmatpush1.msra.mxu0 0.0
    %1292 = vmatprep.subr.mxu0 0.0
    %1293 = vmatpush1.msra.mxu0 0.0
    %1294 = vmatprep.subr.mxu0 0.0
    %1295 = vmatpush1.msra.mxu0 0.0
    %1296 = vmatprep.subr.mxu0 0.0
    %1297 = vmatpush1.msra.mxu0 0.0
    %1298 = vmatprep.subr.mxu0 0.0
    %1299 = vmatpush1.msra.mxu0 0.0
    %1300 = vmatprep.subr.mxu0 0.0
    %1301 = vmatpush1.msra.mxu0 0.0
    %1302 = vmatprep.subr.mxu0 0.0
    %1303 = vmatpush1.msra.mxu0 0.0
    %1304 = vmatprep.subr.mxu0 0.0
    %1305 = vmatpush1.msra.mxu0 0.0
    %1306 = vmatprep.subr.mxu0 0.0
    %1307 = vmatpush1.msra.mxu0 0.0
    %1308 = vmatprep.subr.mxu0 0.0
    %1309 = vmatpush1.msra.mxu0 0.0
    %1310 = vmatprep.mubr.f32.mxu0 0.0
    %1311 = vmatmul.mubr.f32.gmra.mrb[0].mxu0 %v1244
    %v1312 = vpop.f32.mrb[0].mxu0
    %v1313 = vadd.f32 %v1085, %v1312
    %v1314 = vpop.f32.mrb[0].mxu0
    %1315 = vdwg.mxu0
    %v1316 = vmax.f32 %v1313, 0.0
    %vm1317 = vcmask 1040384
    %v1318 = vsel %vm1317, %v1316, -inf
    %1319 = vmax.xlane.f32.xlu0 %v1318
    %v1320 = vpop.xlane.xlu0 %1319
    %vm1321 = vcmp.ge.f32.partialorder %v1316, %v1320
    %v1322 = vsel %vm1321, %v47, 128
    %v1323 = vsel %vm1317, %v1322, 2147483647
    %v1324 = vand.u32 %v1323, 65535
    %v1325 = vshra.s32 %v1323, 16
    %v1326 = vcvt.s32.f32 %v1324
    %v1327 = vcvt.s32.f32 %v1325
    %1328 = vmin.xlane.f32.xlu0 %v1327
    %v1329 = vpop.xlane.xlu0 %1328
    %vm1330 = vcmp.eq.f32.partialorder %v1327, %v1329
    %v1331 = vsel %vm1330, %v1326, inf
    %1332 = vmin.xlane.f32.xlu0 %v1331
    %v1333 = vpop.xlane.xlu0 %1332
    %v1334 = vcvt.f32.s32 %v1333
    %v1335 = vcvt.f32.s32 %v1329
    %v1336 = vshll.u32 %v1335, 16
    %v1337 = vadd.s32 %v1336, %v1334
    %s1338 = vtos %v1337
    %s1339 = scalar_lea.smem [#allocation3], 1
    %1340 = sst [smem:[%s1339]] %s1338
    %s1341 = sld [smem:[#allocation3 + $0x1]]
    %s1342 = scalar_lea.vmem %s2, %s1341
    %v1343 = vld [vmem:[%s1342] sm:$0x1]
    %1344 = vmatprep.subr.mxu0 0.0
    %1345 = vmatpush1.msra.mxu0 %v1076
    %1346 = vmatprep.subr.mxu0 0.0
    %1347 = vmatpush1.msra.mxu0 %v1077
    %1348 = vmatprep.subr.mxu0 0.0
    %1349 = vmatpush1.msra.mxu0 %v1078
    %1350 = vmatprep.subr.mxu0 0.0
    %1351 = vmatpush1.msra.mxu0 %v1079
    %1352 = vmatprep.subr.mxu0 0.0
    %1353 = vmatpush1.msra.mxu0 0.0
    %1354 = vmatprep.subr.mxu0 0.0
    %1355 = vmatpush1.msra.mxu0 0.0
    %1356 = vmatprep.subr.mxu0 0.0
    %1357 = vmatpush1.msra.mxu0 0.0
    %1358 = vmatprep.subr.mxu0 0.0
    %1359 = vmatpush1.msra.mxu0 0.0
    %1360 = vmatprep.subr.mxu0 0.0
    %1361 = vmatpush1.msra.mxu0 0.0
    %1362 = vmatprep.subr.mxu0 0.0
    %1363 = vmatpush1.msra.mxu0 0.0
    %1364 = vmatprep.subr.mxu0 0.0
    %1365 = vmatpush1.msra.mxu0 0.0
    %1366 = vmatprep.subr.mxu0 0.0
    %1367 = vmatpush1.msra.mxu0 0.0
    %1368 = vmatprep.subr.mxu0 0.0
    %1369 = vmatpush1.msra.mxu0 0.0
    %1370 = vmatprep.subr.mxu0 0.0
    %1371 = vmatpush1.msra.mxu0 0.0
    %1372 = vmatprep.subr.mxu0 0.0
    %1373 = vmatpush1.msra.mxu0 0.0
    %1374 = vmatprep.subr.mxu0 0.0
    %1375 = vmatpush1.msra.mxu0 0.0
    %1376 = vmatprep.subr.mxu0 0.0
    %1377 = vmatpush1.msra.mxu0 0.0
    %1378 = vmatprep.subr.mxu0 0.0
    %1379 = vmatpush1.msra.mxu0 0.0
    %1380 = vmatprep.subr.mxu0 0.0
    %1381 = vmatpush1.msra.mxu0 0.0
    %1382 = vmatprep.subr.mxu0 0.0
    %1383 = vmatpush1.msra.mxu0 0.0
    %1384 = vmatprep.subr.mxu0 0.0
    %1385 = vmatpush1.msra.mxu0 0.0
    %1386 = vmatprep.subr.mxu0 0.0
    %1387 = vmatpush1.msra.mxu0 0.0
    %1388 = vmatprep.subr.mxu0 0.0
    %1389 = vmatpush1.msra.mxu0 0.0
    %1390 = vmatprep.subr.mxu0 0.0
    %1391 = vmatpush1.msra.mxu0 0.0
    %1392 = vmatprep.subr.mxu0 0.0
    %1393 = vmatpush1.msra.mxu0 0.0
    %1394 = vmatprep.subr.mxu0 0.0
    %1395 = vmatpush1.msra.mxu0 0.0
    %1396 = vmatprep.subr.mxu0 0.0
    %1397 = vmatpush1.msra.mxu0 0.0
    %1398 = vmatprep.subr.mxu0 0.0
    %1399 = vmatpush1.msra.mxu0 0.0
    %1400 = vmatprep.subr.mxu0 0.0
    %1401 = vmatpush1.msra.mxu0 0.0
    %1402 = vmatprep.subr.mxu0 0.0
    %1403 = vmatpush1.msra.mxu0 0.0
    %1404 = vmatprep.subr.mxu0 0.0
    %1405 = vmatpush1.msra.mxu0 0.0
    %1406 = vmatprep.subr.mxu0 0.0
    %1407 = vmatpush1.msra.mxu0 0.0
    %1408 = vmatprep.mubr.f32.mxu0 0.0
    %1409 = vmatmul.mubr.f32.gmra.mrb[0].mxu0 %v1244
    %v1410 = vpop.f32.mrb[0].mxu0
    %v1411 = vadd.f32 0.0, %v1410
    %v1412 = vpop.f32.mrb[0].mxu0
    %1413 = vdwg.mxu0
    %v1415 = vsel %vm153, %v1343, 0
    %1417 = vmatprep.subr.mxu0 0.0
    %1418 = vmatpush1.msra.mxu0 %v1072
    %1419 = vmatprep.subr.mxu0 0.0
    %1420 = vmatpush1.msra.mxu0 %v1073
    %1421 = vmatprep.subr.mxu0 0.0
    %1422 = vmatpush1.msra.mxu0 %v1074
    %1423 = vmatprep.subr.mxu0 0.0
    %1424 = vmatpush1.msra.mxu0 %v1075
    %1425 = vmatprep.subr.mxu0 0.0
    %1426 = vmatpush1.msra.mxu0 0.0
    %1427 = vmatprep.subr.mxu0 0.0
    %1428 = vmatpush1.msra.mxu0 0.0
    %1429 = vmatprep.subr.mxu0 0.0
    %1430 = vmatpush1.msra.mxu0 0.0
    %1431 = vmatprep.subr.mxu0 0.0
    %1432 = vmatpush1.msra.mxu0 0.0
    %1433 = vmatprep.subr.mxu0 0.0
    %1434 = vmatpush1.msra.mxu0 0.0
    %1435 = vmatprep.subr.mxu0 0.0
    %1436 = vmatpush1.msra.mxu0 0.0
    %1437 = vmatprep.subr.mxu0 0.0
    %1438 = vmatpush1.msra.mxu0 0.0
    %1439 = vmatprep.subr.mxu0 0.0
    %1440 = vmatpush1.msra.mxu0 0.0
    %1441 = vmatprep.subr.mxu0 0.0
    %1442 = vmatpush1.msra.mxu0 0.0
    %1443 = vmatprep.subr.mxu0 0.0
    %1444 = vmatpush1.msra.mxu0 0.0
    %1445 = vmatprep.subr.mxu0 0.0
    %1446 = vmatpush1.msra.mxu0 0.0
    %1447 = vmatprep.subr.mxu0 0.0
    %1448 = vmatpush1.msra.mxu0 0.0
    %1449 = vmatprep.subr.mxu0 0.0
    %1450 = vmatpush1.msra.mxu0 0.0
    %1451 = vmatprep.subr.mxu0 0.0
    %1452 = vmatpush1.msra.mxu0 0.0
    %1453 = vmatprep.subr.mxu0 0.0
    %1454 = vmatpush1.msra.mxu0 0.0
    %1455 = vmatprep.subr.mxu0 0.0
    %1456 = vmatpush1.msra.mxu0 0.0
    %1457 = vmatprep.subr.mxu0 0.0
    %1458 = vmatpush1.msra.mxu0 0.0
    %1459 = vmatprep.subr.mxu0 0.0
    %1460 = vmatpush1.msra.mxu0 0.0
    %1461 = vmatprep.subr.mxu0 0.0
    %1462 = vmatpush1.msra.mxu0 0.0
    %1463 = vmatprep.subr.mxu0 0.0
    %1464 = vmatpush1.msra.mxu0 0.0
    %1465 = vmatprep.subr.mxu0 0.0
    %1466 = vmatpush1.msra.mxu0 0.0
    %1467 = vmatprep.subr.mxu0 0.0
    %1468 = vmatpush1.msra.mxu0 0.0
    %1469 = vmatprep.subr.mxu0 0.0
    %1470 = vmatpush1.msra.mxu0 0.0
    %1471 = vmatprep.subr.mxu0 0.0
    %1472 = vmatpush1.msra.mxu0 0.0
    %1473 = vmatprep.subr.mxu0 0.0
    %1474 = vmatpush1.msra.mxu0 0.0
    %1475 = vmatprep.subr.mxu0 0.0
    %1476 = vmatpush1.msra.mxu0 0.0
    %1477 = vmatprep.subr.mxu0 0.0
    %1478 = vmatpush1.msra.mxu0 0.0
    %1479 = vmatprep.subr.mxu0 0.0
    %1480 = vmatpush1.msra.mxu0 0.0
    %1481 = vmatprep.mubr.f32.mxu0 0.0
    %1482 = vmatmul.mubr.f32.gmra.mrb[0].mxu0 %v1415
    %v1483 = vpop.f32.mrb[0].mxu0
    %v1484 = vadd.f32 %v1411, %v1483
    %v1485 = vpop.f32.mrb[0].mxu0
    %1486 = vdwg.mxu0
    %v1487 = vadd.f32 %v1484, %v1080
    %v1488 = vtanh.pop %v1487
    %v1490 = vsel %vm153, %v1488, 0
    %1492 = vmatprep.subr.mxu0 0.0
    %1493 = vmatpush1.msra.mxu0 %v1081
    %1494 = vmatprep.subr.mxu0 0.0
    %1495 = vmatpush1.msra.mxu0 %v1082
    %1496 = vmatprep.subr.mxu0 0.0
    %1497 = vmatpush1.msra.mxu0 %v1083
    %1498 = vmatprep.subr.mxu0 0.0
    %1499 = vmatpush1.msra.mxu0 %v1084
    %1500 = vmatprep.subr.mxu0 0.0
    %1501 = vmatpush1.msra.mxu0 0.0
    %1502 = vmatprep.subr.mxu0 0.0
    %1503 = vmatpush1.msra.mxu0 0.0
    %1504 = vmatprep.subr.mxu0 0.0
    %1505 = vmatpush1.msra.mxu0 0.0
    %1506 = vmatprep.subr.mxu0 0.0
    %1507 = vmatpush1.msra.mxu0 0.0
    %1508 = vmatprep.subr.mxu0 0.0
    %1509 = vmatpush1.msra.mxu0 0.0
    %1510 = vmatprep.subr.mxu0 0.0
    %1511 = vmatpush1.msra.mxu0 0.0
    %1512 = vmatprep.subr.mxu0 0.0
    %1513 = vmatpush1.msra.mxu0 0.0
    %1514 = vmatprep.subr.mxu0 0.0
    %1515 = vmatpush1.msra.mxu0 0.0
    %1516 = vmatprep.subr.mxu0 0.0
    %1517 = vmatpush1.msra.mxu0 0.0
    %1518 = vmatprep.subr.mxu0 0.0
    %1519 = vmatpush1.msra.mxu0 0.0
    %1520 = vmatprep.subr.mxu0 0.0
    %1521 = vmatpush1.msra.mxu0 0.0
    %1522 = vmatprep.subr.mxu0 0.0
    %1523 = vmatpush1.msra.mxu0 0.0
    %1524 = vmatprep.subr.mxu0 0.0
    %1525 = vmatpush1.msra.mxu0 0.0
    %1526 = vmatprep.subr.mxu0 0.0
    %1527 = vmatpush1.msra.mxu0 0.0
    %1528 = vmatprep.subr.mxu0 0.0
    %1529 = vmatpush1.msra.mxu0 0.0
    %1530 = vmatprep.subr.mxu0 0.0
    %1531 = vmatpush1.msra.mxu0 0.0
    %1532 = vmatprep.subr.mxu0 0.0
    %1533 = vmatpush1.msra.mxu0 0.0
    %1534 = vmatprep.subr.mxu0 0.0
    %1535 = vmatpush1.msra.mxu0 0.0
    %1536 = vmatprep.subr.mxu0 0.0
    %1537 = vmatpush1.msra.mxu0 0.0
    %1538 = vmatprep.subr.mxu0 0.0
    %1539 = vmatpush1.msra.mxu0 0.0
    %1540 = vmatprep.subr.mxu0 0.0
    %1541 = vmatpush1.msra.mxu0 0.0
    %1542 = vmatprep.subr.mxu0 0.0
    %1543 = vmatpush1.msra.mxu0 0.0
    %1544 = vmatprep.subr.mxu0 0.0
    %1545 = vmatpush1.msra.mxu0 0.0
    %1546 = vmatprep.subr.mxu0 0.0
    %1547 = vmatpush1.msra.mxu0 0.0
    %1548 = vmatprep.subr.mxu0 0.0
    %1549 = vmatpush1.msra.mxu0 0.0
    %1550 = vmatprep.subr.mxu0 0.0
    %1551 = vmatpush1.msra.mxu0 0.0
    %1552 = vmatprep.subr.mxu0 0.0
    %1553 = vmatpush1.msra.mxu0 0.0
    %1554 = vmatprep.subr.mxu0 0.0
    %1555 = vmatpush1.msra.mxu0 0.0
    %1556 = vmatprep.mubr.f32.mxu0 0.0
    %1557 = vmatmul.mubr.f32.gmra.mrb[0].mxu0 %v1490
    %v1558 = vpop.f32.mrb[0].mxu0
    %v1559 = vadd.f32 %v1085, %v1558
    %v1560 = vpop.f32.mrb[0].mxu0
    %1561 = vdwg.mxu0
    %v1562 = vmax.f32 %v1559, 0.0
    %v1563 = vsel %vm1317, %v1562, -inf
    %1564 = vmax.xlane.f32.xlu0 %v1563
    %v1565 = vpop.xlane.xlu0 %1564
    %vm1566 = vcmp.ge.f32.partialorder %v1562, %v1565
    %v1567 = vsel %vm1566, %v47, 128
    %v1568 = vsel %vm1317, %v1567, 2147483647
    %v1569 = vand.u32 %v1568, 65535
    %v1570 = vshra.s32 %v1568, 16
    %v1571 = vcvt.s32.f32 %v1569
    %v1572 = vcvt.s32.f32 %v1570
    %1573 = vmin.xlane.f32.xlu0 %v1572
    %v1574 = vpop.xlane.xlu0 %1573
    %vm1575 = vcmp.eq.f32.partialorder %v1572, %v1574
    %v1576 = vsel %vm1575, %v1571, inf
    %1577 = vmin.xlane.f32.xlu0 %v1576
    %v1578 = vpop.xlane.xlu0 %1577
    %v1579 = vcvt.f32.s32 %v1578
    %v1580 = vcvt.f32.s32 %v1574
    %v1581 = vshll.u32 %v1580, 16
    %v1582 = vadd.s32 %v1581, %v1579
    %s1583 = vtos %v1582
    %s1584 = scalar_lea.smem [#allocation3], 2
    %1585 = sst [smem:[%s1584]] %s1583
    %s1586 = sld [smem:[#allocation3 + $0x2]]
    %s1587 = scalar_lea.vmem %s2, %s1586
    %v1588 = vld [vmem:[%s1587] sm:$0x1]
    %1589 = vmatprep.subr.mxu0 0.0
    %1590 = vmatpush1.msra.mxu0 %v1076
    %1591 = vmatprep.subr.mxu0 0.0
    %1592 = vmatpush1.msra.mxu0 %v1077
    %1593 = vmatprep.subr.mxu0 0.0
    %1594 = vmatpush1.msra.mxu0 %v1078
    %1595 = vmatprep.subr.mxu0 0.0
    %1596 = vmatpush1.msra.mxu0 %v1079
    %1597 = vmatprep.subr.mxu0 0.0
    %1598 = vmatpush1.msra.mxu0 0.0
    %1599 = vmatprep.subr.mxu0 0.0
    %1600 = vmatpush1.msra.mxu0 0.0
    %1601 = vmatprep.subr.mxu0 0.0
    %1602 = vmatpush1.msra.mxu0 0.0
    %1603 = vmatprep.subr.mxu0 0.0
    %1604 = vmatpush1.msra.mxu0 0.0
    %1605 = vmatprep.subr.mxu0 0.0
    %1606 = vmatpush1.msra.mxu0 0.0
    %1607 = vmatprep.subr.mxu0 0.0
    %1608 = vmatpush1.msra.mxu0 0.0
    %1609 = vmatprep.subr.mxu0 0.0
    %1610 = vmatpush1.msra.mxu0 0.0
    %1611 = vmatprep.subr.mxu0 0.0
    %1612 = vmatpush1.msra.mxu0 0.0
    %1613 = vmatprep.subr.mxu0 0.0
    %1614 = vmatpush1.msra.mxu0 0.0
    %1615 = vmatprep.subr.mxu0 0.0
    %1616 = vmatpush1.msra.mxu0 0.0
    %1617 = vmatprep.subr.mxu0 0.0
    %1618 = vmatpush1.msra.mxu0 0.0
    %1619 = vmatprep.subr.mxu0 0.0
    %1620 = vmatpush1.msra.mxu0 0.0
    %1621 = vmatprep.subr.mxu0 0.0
    %1622 = vmatpush1.msra.mxu0 0.0
    %1623 = vmatprep.subr.mxu0 0.0
    %1624 = vmatpush1.msra.mxu0 0.0
    %1625 = vmatprep.subr.mxu0 0.0
    %1626 = vmatpush1.msra.mxu0 0.0
    %1627 = vmatprep.subr.mxu0 0.0
    %1628 = vmatpush1.msra.mxu0 0.0
    %1629 = vmatprep.subr.mxu0 0.0
    %1630 = vmatpush1.msra.mxu0 0.0
    %1631 = vmatprep.subr.mxu0 0.0
    %1632 = vmatpush1.msra.mxu0 0.0
    %1633 = vmatprep.subr.mxu0 0.0
    %1634 = vmatpush1.msra.mxu0 0.0
    %1635 = vmatprep.subr.mxu0 0.0
    %1636 = vmatpush1.msra.mxu0 0.0
    %1637 = vmatprep.subr.mxu0 0.0
    %1638 = vmatpush1.msra.mxu0 0.0
    %1639 = vmatprep.subr.mxu0 0.0
    %1640 = vmatpush1.msra.mxu0 0.0
    %1641 = vmatprep.subr.mxu0 0.0
    %1642 = vmatpush1.msra.mxu0 0.0
    %1643 = vmatprep.subr.mxu0 0.0
    %1644 = vmatpush1.msra.mxu0 0.0
    %1645 = vmatprep.subr.mxu0 0.0
    %1646 = vmatpush1.msra.mxu0 0.0
    %1647 = vmatprep.subr.mxu0 0.0
    %1648 = vmatpush1.msra.mxu0 0.0
    %1649 = vmatprep.subr.mxu0 0.0
    %1650 = vmatpush1.msra.mxu0 0.0
    %1651 = vmatprep.subr.mxu0 0.0
    %1652 = vmatpush1.msra.mxu0 0.0
    %1653 = vmatprep.mubr.f32.mxu0 0.0
    %1654 = vmatmul.mubr.f32.gmra.mrb[0].mxu0 %v1490
    %v1655 = vpop.f32.mrb[0].mxu0
    %v1656 = vadd.f32 0.0, %v1655
    %v1657 = vpop.f32.mrb[0].mxu0
    %1658 = vdwg.mxu0
    %v1660 = vsel %vm153, %v1588, 0
    %1662 = vmatprep.subr.mxu0 0.0
    %1663 = vmatpush1.msra.mxu0 %v1072
    %1664 = vmatprep.subr.mxu0 0.0
    %1665 = vmatpush1.msra.mxu0 %v1073
    %1666 = vmatprep.subr.mxu0 0.0
    %1667 = vmatpush1.msra.mxu0 %v1074
    %1668 = vmatprep.subr.mxu0 0.0
    %1669 = vmatpush1.msra.mxu0 %v1075
    %1670 = vmatprep.subr.mxu0 0.0
    %1671 = vmatpush1.msra.mxu0 0.0
    %1672 = vmatprep.subr.mxu0 0.0
    %1673 = vmatpush1.msra.mxu0 0.0
    %1674 = vmatprep.subr.mxu0 0.0
    %1675 = vmatpush1.msra.mxu0 0.0
    %1676 = vmatprep.subr.mxu0 0.0
    %1677 = vmatpush1.msra.mxu0 0.0
    %1678 = vmatprep.subr.mxu0 0.0
    %1679 = vmatpush1.msra.mxu0 0.0
    %1680 = vmatprep.subr.mxu0 0.0
    %1681 = vmatpush1.msra.mxu0 0.0
    %1682 = vmatprep.subr.mxu0 0.0
    %1683 = vmatpush1.msra.mxu0 0.0
    %1684 = vmatprep.subr.mxu0 0.0
    %1685 = vmatpush1.msra.mxu0 0.0
    %1686 = vmatprep.subr.mxu0 0.0
    %1687 = vmatpush1.msra.mxu0 0.0
    %1688 = vmatprep.subr.mxu0 0.0
    %1689 = vmatpush1.msra.mxu0 0.0
    %1690 = vmatprep.subr.mxu0 0.0
    %1691 = vmatpush1.msra.mxu0 0.0
    %1692 = vmatprep.subr.mxu0 0.0
    %1693 = vmatpush1.msra.mxu0 0.0
    %1694 = vmatprep.subr.mxu0 0.0
    %1695 = vmatpush1.msra.mxu0 0.0
    %1696 = vmatprep.subr.mxu0 0.0
    %1697 = vmatpush1.msra.mxu0 0.0
    %1698 = vmatprep.subr.mxu0 0.0
    %1699 = vmatpush1.msra.mxu0 0.0
    %1700 = vmatprep.subr.mxu0 0.0
    %1701 = vmatpush1.msra.mxu0 0.0
    %1702 = vmatprep.subr.mxu0 0.0
    %1703 = vmatpush1.msra.mxu0 0.0
    %1704 = vmatprep.subr.mxu0 0.0
    %1705 = vmatpush1.msra.mxu0 0.0
    %1706 = vmatprep.subr.mxu0 0.0
    %1707 = vmatpush1.msra.mxu0 0.0
    %1708 = vmatprep.subr.mxu0 0.0
    %1709 = vmatpush1.msra.mxu0 0.0
    %1710 = vmatprep.subr.mxu0 0.0
    %1711 = vmatpush1.msra.mxu0 0.0
    %1712 = vmatprep.subr.mxu0 0.0
    %1713 = vmatpush1.msra.mxu0 0.0
    %1714 = vmatprep.subr.mxu0 0.0
    %1715 = vmatpush1.msra.mxu0 0.0
    %1716 = vmatprep.subr.mxu0 0.0
    %1717 = vmatpush1.msra.mxu0 0.0
    %1718 = vmatprep.subr.mxu0 0.0
    %1719 = vmatpush1.msra.mxu0 0.0
    %1720 = vmatprep.subr.mxu0 0.0
    %1721 = vmatpush1.msra.mxu0 0.0
    %1722 = vmatprep.subr.mxu0 0.0
    %1723 = vmatpush1.msra.mxu0 0.0
    %1724 = vmatprep.subr.mxu0 0.0
    %1725 = vmatpush1.msra.mxu0 0.0
    %1726 = vmatprep.mubr.f32.mxu0 0.0
    %1727 = vmatmul.mubr.f32.gmra.mrb[0].mxu0 %v1660
    %v1728 = vpop.f32.mrb[0].mxu0
    %v1729 = vadd.f32 %v1656, %v1728
    %v1730 = vpop.f32.mrb[0].mxu0
    %1731 = vdwg.mxu0
    %v1732 = vadd.f32 %v1729, %v1080
    %v1733 = vtanh.pop %v1732
    %v1735 = vsel %vm153, %v1733, 0
    %1737 = vmatprep.subr.mxu0 0.0
    %1738 = vmatpush1.msra.mxu0 %v1081
    %1739 = vmatprep.subr.mxu0 0.0
    %1740 = vmatpush1.msra.mxu0 %v1082
    %1741 = vmatprep.subr.mxu0 0.0
    %1742 = vmatpush1.msra.mxu0 %v1083
    %1743 = vmatprep.subr.mxu0 0.0
    %1744 = vmatpush1.msra.mxu0 %v1084
    %1745 = vmatprep.subr.mxu0 0.0
    %1746 = vmatpush1.msra.mxu0 0.0
    %1747 = vmatprep.subr.mxu0 0.0
    %1748 = vmatpush1.msra.mxu0 0.0
    %1749 = vmatprep.subr.mxu0 0.0
    %1750 = vmatpush1.msra.mxu0 0.0
    %1751 = vmatprep.subr.mxu0 0.0
    %1752 = vmatpush1.msra.mxu0 0.0
    %1753 = vmatprep.subr.mxu0 0.0
    %1754 = vmatpush1.msra.mxu0 0.0
    %1755 = vmatprep.subr.mxu0 0.0
    %1756 = vmatpush1.msra.mxu0 0.0
    %1757 = vmatprep.subr.mxu0 0.0
    %1758 = vmatpush1.msra.mxu0 0.0
    %1759 = vmatprep.subr.mxu0 0.0
    %1760 = vmatpush1.msra.mxu0 0.0
    %1761 = vmatprep.subr.mxu0 0.0
    %1762 = vmatpush1.msra.mxu0 0.0
    %1763 = vmatprep.subr.mxu0 0.0
    %1764 = vmatpush1.msra.mxu0 0.0
    %1765 = vmatprep.subr.mxu0 0.0
    %1766 = vmatpush1.msra.mxu0 0.0
    %1767 = vmatprep.subr.mxu0 0.0
    %1768 = vmatpush1.msra.mxu0 0.0
    %1769 = vmatprep.subr.mxu0 0.0
    %1770 = vmatpush1.msra.mxu0 0.0
    %1771 = vmatprep.subr.mxu0 0.0
    %1772 = vmatpush1.msra.mxu0 0.0
    %1773 = vmatprep.subr.mxu0 0.0
    %1774 = vmatpush1.msra.mxu0 0.0
    %1775 = vmatprep.subr.mxu0 0.0
    %1776 = vmatpush1.msra.mxu0 0.0
    %1777 = vmatprep.subr.mxu0 0.0
    %1778 = vmatpush1.msra.mxu0 0.0
    %1779 = vmatprep.subr.mxu0 0.0
    %1780 = vmatpush1.msra.mxu0 0.0
    %1781 = vmatprep.subr.mxu0 0.0
    %1782 = vmatpush1.msra.mxu0 0.0
    %1783 = vmatprep.subr.mxu0 0.0
    %1784 = vmatpush1.msra.mxu0 0.0
    %1785 = vmatprep.subr.mxu0 0.0
    %1786 = vmatpush1.msra.mxu0 0.0
    %1787 = vmatprep.subr.mxu0 0.0
    %1788 = vmatpush1.msra.mxu0 0.0
    %1789 = vmatprep.subr.mxu0 0.0
    %1790 = vmatpush1.msra.mxu0 0.0
    %1791 = vmatprep.subr.mxu0 0.0
    %1792 = vmatpush1.msra.mxu0 0.0
    %1793 = vmatprep.subr.mxu0 0.0
    %1794 = vmatpush1.msra.mxu0 0.0
    %1795 = vmatprep.subr.mxu0 0.0
    %1796 = vmatpush1.msra.mxu0 0.0
    %1797 = vmatprep.subr.mxu0 0.0
    %1798 = vmatpush1.msra.mxu0 0.0
    %1799 = vmatprep.subr.mxu0 0.0
    %1800 = vmatpush1.msra.mxu0 0.0
    %1801 = vmatprep.mubr.f32.mxu0 0.0
    %1802 = vmatmul.mubr.f32.gmra.mrb[0].mxu0 %v1735
    %v1803 = vpop.f32.mrb[0].mxu0
    %v1804 = vadd.f32 %v1085, %v1803
    %v1805 = vpop.f32.mrb[0].mxu0
    %1806 = vdwg.mxu0
    %v1807 = vmax.f32 %v1804, 0.0
    %v1808 = vsel %vm1317, %v1807, -inf
    %1809 = vmax.xlane.f32.xlu0 %v1808
    %v1810 = vpop.xlane.xlu0 %1809
    %vm1811 = vcmp.ge.f32.partialorder %v1807, %v1810
    %v1812 = vsel %vm1811, %v47, 128
    %v1813 = vsel %vm1317, %v1812, 2147483647
    %v1814 = vand.u32 %v1813, 65535
    %v1815 = vshra.s32 %v1813, 16
    %v1816 = vcvt.s32.f32 %v1814
    %v1817 = vcvt.s32.f32 %v1815
    %1818 = vmin.xlane.f32.xlu0 %v1817
    %v1819 = vpop.xlane.xlu0 %1818
    %vm1820 = vcmp.eq.f32.partialorder %v1817, %v1819
    %v1821 = vsel %vm1820, %v1816, inf
    %1822 = vmin.xlane.f32.xlu0 %v1821
    %v1823 = vpop.xlane.xlu0 %1822
    %v1824 = vcvt.f32.s32 %v1823
    %v1825 = vcvt.f32.s32 %v1819
    %v1826 = vshll.u32 %v1825, 16
    %v1827 = vadd.s32 %v1826, %v1824
    %s1828 = vtos %v1827
    %s1829 = scalar_lea.smem [#allocation3], 3
    %1830 = sst [smem:[%s1829]] %s1828
    %s1831 = sld [smem:[#allocation3 + $0x3]]
    %s1832 = scalar_lea.vmem %s2, %s1831
    %v1833 = vld [vmem:[%s1832] sm:$0x1]
    %1834 = vmatprep.subr.mxu0 0.0
    %1835 = vmatpush1.msra.mxu0 %v1076
    %1836 = vmatprep.subr.mxu0 0.0
    %1837 = vmatpush1.msra.mxu0 %v1077
    %1838 = vmatprep.subr.mxu0 0.0
    %1839 = vmatpush1.msra.mxu0 %v1078
    %1840 = vmatprep.subr.mxu0 0.0
    %1841 = vmatpush1.msra.mxu0 %v1079
    %1842 = vmatprep.subr.mxu0 0.0
    %1843 = vmatpush1.msra.mxu0 0.0
    %1844 = vmatprep.subr.mxu0 0.0
    %1845 = vmatpush1.msra.mxu0 0.0
    %1846 = vmatprep.subr.mxu0 0.0
    %1847 = vmatpush1.msra.mxu0 0.0
    %1848 = vmatprep.subr.mxu0 0.0
    %1849 = vmatpush1.msra.mxu0 0.0
    %1850 = vmatprep.subr.mxu0 0.0
    %1851 = vmatpush1.msra.mxu0 0.0
    %1852 = vmatprep.subr.mxu0 0.0
    %1853 = vmatpush1.msra.mxu0 0.0
    %1854 = vmatprep.subr.mxu0 0.0
    %1855 = vmatpush1.msra.mxu0 0.0
    %1856 = vmatprep.subr.mxu0 0.0
    %1857 = vmatpush1.msra.mxu0 0.0
    %1858 = vmatprep.subr.mxu0 0.0
    %1859 = vmatpush1.msra.mxu0 0.0
    %1860 = vmatprep.subr.mxu0 0.0
    %1861 = vmatpush1.msra.mxu0 0.0
    %1862 = vmatprep.subr.mxu0 0.0
    %1863 = vmatpush1.msra.mxu0 0.0
    %1864 = vmatprep.subr.mxu0 0.0
    %1865 = vmatpush1.msra.mxu0 0.0
    %1866 = vmatprep.subr.mxu0 0.0
    %1867 = vmatpush1.msra.mxu0 0.0
    %1868 = vmatprep.subr.mxu0 0.0
    %1869 = vmatpush1.msra.mxu0 0.0
    %1870 = vmatprep.subr.mxu0 0.0
    %1871 = vmatpush1.msra.mxu0 0.0
    %1872 = vmatprep.subr.mxu0 0.0
    %1873 = vmatpush1.msra.mxu0 0.0
    %1874 = vmatprep.subr.mxu0 0.0
    %1875 = vmatpush1.msra.mxu0 0.0
    %1876 = vmatprep.subr.mxu0 0.0
    %1877 = vmatpush1.msra.mxu0 0.0
    %1878 = vmatprep.subr.mxu0 0.0
    %1879 = vmatpush1.msra.mxu0 0.0
    %1880 = vmatprep.subr.mxu0 0.0
    %1881 = vmatpush1.msra.mxu0 0.0
    %1882 = vmatprep.subr.mxu0 0.0
    %1883 = vmatpush1.msra.mxu0 0.0
    %1884 = vmatprep.subr.mxu0 0.0
    %1885 = vmatpush1.msra.mxu0 0.0
    %1886 = vmatprep.subr.mxu0 0.0
    %1887 = vmatpush1.msra.mxu0 0.0
    %1888 = vmatprep.subr.mxu0 0.0
    %1889 = vmatpush1.msra.mxu0 0.0
    %1890 = vmatprep.subr.mxu0 0.0
    %1891 = vmatpush1.msra.mxu0 0.0
    %1892 = vmatprep.subr.mxu0 0.0
    %1893 = vmatpush1.msra.mxu0 0.0
    %1894 = vmatprep.subr.mxu0 0.0
    %1895 = vmatpush1.msra.mxu0 0.0
    %1896 = vmatprep.subr.mxu0 0.0
    %1897 = vmatpush1.msra.mxu0 0.0
    %1898 = vmatprep.mubr.f32.mxu0 0.0
    %1899 = vmatmul.mubr.f32.gmra.mrb[0].mxu0 %v1735
    %v1900 = vpop.f32.mrb[0].mxu0
    %v1901 = vadd.f32 0.0, %v1900
    %v1902 = vpop.f32.mrb[0].mxu0
    %1903 = vdwg.mxu0
    %v1905 = vsel %vm153, %v1833, 0
    %1907 = vmatprep.subr.mxu0 0.0
    %1908 = vmatpush1.msra.mxu0 %v1072
    %1909 = vmatprep.subr.mxu0 0.0
    %1910 = vmatpush1.msra.mxu0 %v1073
    %1911 = vmatprep.subr.mxu0 0.0
    %1912 = vmatpush1.msra.mxu0 %v1074
    %1913 = vmatprep.subr.mxu0 0.0
    %1914 = vmatpush1.msra.mxu0 %v1075
    %1915 = vmatprep.subr.mxu0 0.0
    %1916 = vmatpush1.msra.mxu0 0.0
    %1917 = vmatprep.subr.mxu0 0.0
    %1918 = vmatpush1.msra.mxu0 0.0
    %1919 = vmatprep.subr.mxu0 0.0
    %1920 = vmatpush1.msra.mxu0 0.0
    %1921 = vmatprep.subr.mxu0 0.0
    %1922 = vmatpush1.msra.mxu0 0.0
    %1923 = vmatprep.subr.mxu0 0.0
    %1924 = vmatpush1.msra.mxu0 0.0
    %1925 = vmatprep.subr.mxu0 0.0
    %1926 = vmatpush1.msra.mxu0 0.0
    %1927 = vmatprep.subr.mxu0 0.0
    %1928 = vmatpush1.msra.mxu0 0.0
    %1929 = vmatprep.subr.mxu0 0.0
    %1930 = vmatpush1.msra.mxu0 0.0
    %1931 = vmatprep.subr.mxu0 0.0
    %1932 = vmatpush1.msra.mxu0 0.0
    %1933 = vmatprep.subr.mxu0 0.0
    %1934 = vmatpush1.msra.mxu0 0.0
    %1935 = vmatprep.subr.mxu0 0.0
    %1936 = vmatpush1.msra.mxu0 0.0
    %1937 = vmatprep.subr.mxu0 0.0
    %1938 = vmatpush1.msra.mxu0 0.0
    %1939 = vmatprep.subr.mxu0 0.0
    %1940 = vmatpush1.msra.mxu0 0.0
    %1941 = vmatprep.subr.mxu0 0.0
    %1942 = vmatpush1.msra.mxu0 0.0
    %1943 = vmatprep.subr.mxu0 0.0
    %1944 = vmatpush1.msra.mxu0 0.0
    %1945 = vmatprep.subr.mxu0 0.0
    %1946 = vmatpush1.msra.mxu0 0.0
    %1947 = vmatprep.subr.mxu0 0.0
    %1948 = vmatpush1.msra.mxu0 0.0
    %1949 = vmatprep.subr.mxu0 0.0
    %1950 = vmatpush1.msra.mxu0 0.0
    %1951 = vmatprep.subr.mxu0 0.0
    %1952 = vmatpush1.msra.mxu0 0.0
    %1953 = vmatprep.subr.mxu0 0.0
    %1954 = vmatpush1.msra.mxu0 0.0
    %1955 = vmatprep.subr.mxu0 0.0
    %1956 = vmatpush1.msra.mxu0 0.0
    %1957 = vmatprep.subr.mxu0 0.0
    %1958 = vmatpush1.msra.mxu0 0.0
    %1959 = vmatprep.subr.mxu0 0.0
    %1960 = vmatpush1.msra.mxu0 0.0
    %1961 = vmatprep.subr.mxu0 0.0
    %1962 = vmatpush1.msra.mxu0 0.0
    %1963 = vmatprep.subr.mxu0 0.0
    %1964 = vmatpush1.msra.mxu0 0.0
    %1965 = vmatprep.subr.mxu0 0.0
    %1966 = vmatpush1.msra.mxu0 0.0
    %1967 = vmatprep.subr.mxu0 0.0
    %1968 = vmatpush1.msra.mxu0 0.0
    %1969 = vmatprep.subr.mxu0 0.0
    %1970 = vmatpush1.msra.mxu0 0.0
    %1971 = vmatprep.mubr.f32.mxu0 0.0
    %1972 = vmatmul.mubr.f32.gmra.mrb[0].mxu0 %v1905
    %v1973 = vpop.f32.mrb[0].mxu0
    %v1974 = vadd.f32 %v1901, %v1973
    %v1975 = vpop.f32.mrb[0].mxu0
    %1976 = vdwg.mxu0
    %v1977 = vadd.f32 %v1974, %v1080
    %v1978 = vtanh.pop %v1977
    %v1980 = vsel %vm153, %v1978, 0
    %1982 = vmatprep.subr.mxu0 0.0
    %1983 = vmatpush1.msra.mxu0 %v1081
    %1984 = vmatprep.subr.mxu0 0.0
    %1985 = vmatpush1.msra.mxu0 %v1082
    %1986 = vmatprep.subr.mxu0 0.0
    %1987 = vmatpush1.msra.mxu0 %v1083
    %1988 = vmatprep.subr.mxu0 0.0
    %1989 = vmatpush1.msra.mxu0 %v1084
    %1990 = vmatprep.subr.mxu0 0.0
    %1991 = vmatpush1.msra.mxu0 0.0
    %1992 = vmatprep.subr.mxu0 0.0
    %1993 = vmatpush1.msra.mxu0 0.0
    %1994 = vmatprep.subr.mxu0 0.0
    %1995 = vmatpush1.msra.mxu0 0.0
    %1996 = vmatprep.subr.mxu0 0.0
    %1997 = vmatpush1.msra.mxu0 0.0
    %1998 = vmatprep.subr.mxu0 0.0
    %1999 = vmatpush1.msra.mxu0 0.0
    %2000 = vmatprep.subr.mxu0 0.0
    %2001 = vmatpush1.msra.mxu0 0.0
    %2002 = vmatprep.subr.mxu0 0.0
    %2003 = vmatpush1.msra.mxu0 0.0
    %2004 = vmatprep.subr.mxu0 0.0
    %2005 = vmatpush1.msra.mxu0 0.0
    %2006 = vmatprep.subr.mxu0 0.0
    %2007 = vmatpush1.msra.mxu0 0.0
    %2008 = vmatprep.subr.mxu0 0.0
    %2009 = vmatpush1.msra.mxu0 0.0
    %2010 = vmatprep.subr.mxu0 0.0
    %2011 = vmatpush1.msra.mxu0 0.0
    %2012 = vmatprep.subr.mxu0 0.0
    %2013 = vmatpush1.msra.mxu0 0.0
    %2014 = vmatprep.subr.mxu0 0.0
    %2015 = vmatpush1.msra.mxu0 0.0
    %2016 = vmatprep.subr.mxu0 0.0
    %2017 = vmatpush1.msra.mxu0 0.0
    %2018 = vmatprep.subr.mxu0 0.0
    %2019 = vmatpush1.msra.mxu0 0.0
    %2020 = vmatprep.subr.mxu0 0.0
    %2021 = vmatpush1.msra.mxu0 0.0
    %2022 = vmatprep.subr.mxu0 0.0
    %2023 = vmatpush1.msra.mxu0 0.0
    %2024 = vmatprep.subr.mxu0 0.0
    %2025 = vmatpush1.msra.mxu0 0.0
    %2026 = vmatprep.subr.mxu0 0.0
    %2027 = vmatpush1.msra.mxu0 0.0
    %2028 = vmatprep.subr.mxu0 0.0
    %2029 = vmatpush1.msra.mxu0 0.0
    %2030 = vmatprep.subr.mxu0 0.0
    %2031 = vmatpush1.msra.mxu0 0.0
    %2032 = vmatprep.subr.mxu0 0.0
    %2033 = vmatpush1.msra.mxu0 0.0
    %2034 = vmatprep.subr.mxu0 0.0
    %2035 = vmatpush1.msra.mxu0 0.0
    %2036 = vmatprep.subr.mxu0 0.0
    %2037 = vmatpush1.msra.mxu0 0.0
    %2038 = vmatprep.subr.mxu0 0.0
    %2039 = vmatpush1.msra.mxu0 0.0
    %2040 = vmatprep.subr.mxu0 0.0
    %2041 = vmatpush1.msra.mxu0 0.0
    %2042 = vmatprep.subr.mxu0 0.0
    %2043 = vmatpush1.msra.mxu0 0.0
    %2044 = vmatprep.subr.mxu0 0.0
    %2045 = vmatpush1.msra.mxu0 0.0
    %2046 = vmatprep.mubr.f32.mxu0 0.0
    %2047 = vmatmul.mubr.f32.gmra.mrb[0].mxu0 %v1980
    %v2048 = vpop.f32.mrb[0].mxu0
    %v2049 = vadd.f32 %v1085, %v2048
    %v2050 = vpop.f32.mrb[0].mxu0
    %2051 = vdwg.mxu0
    %v2052 = vmax.f32 %v2049, 0.0
    %v2053 = vsel %vm1317, %v2052, -inf
    %2054 = vmax.xlane.f32.xlu0 %v2053
    %v2055 = vpop.xlane.xlu0 %2054
    %vm2056 = vcmp.ge.f32.partialorder %v2052, %v2055
    %v2057 = vsel %vm2056, %v47, 128
    %v2058 = vsel %vm1317, %v2057, 2147483647
    %v2059 = vand.u32 %v2058, 65535
    %v2060 = vshra.s32 %v2058, 16
    %v2061 = vcvt.s32.f32 %v2059
    %v2062 = vcvt.s32.f32 %v2060
    %2063 = vmin.xlane.f32.xlu0 %v2062
    %v2064 = vpop.xlane.xlu0 %2063
    %vm2065 = vcmp.eq.f32.partialorder %v2062, %v2064
    %v2066 = vsel %vm2065, %v2061, inf
    %2067 = vmin.xlane.f32.xlu0 %v2066
    %v2068 = vpop.xlane.xlu0 %2067
    %v2069 = vcvt.f32.s32 %v2068
    %v2070 = vcvt.f32.s32 %v2064
    %v2071 = vshll.u32 %v2070, 16
    %v2072 = vadd.s32 %v2071, %v2069
    %s2073 = vtos %v2072
    %s2074 = scalar_lea.smem [#allocation3], 4
    %2075 = sst [smem:[%s2074]] %s2073
    %s2076 = sld [smem:[#allocation3 + $0x4]]
    %s2077 = scalar_lea.vmem %s2, %s2076
    %v2078 = vld [vmem:[%s2077] sm:$0x1]
    %2079 = vmatprep.subr.mxu0 0.0
    %2080 = vmatpush1.msra.mxu0 %v1076
    %2081 = vmatprep.subr.mxu0 0.0
    %2082 = vmatpush1.msra.mxu0 %v1077
    %2083 = vmatprep.subr.mxu0 0.0
    %2084 = vmatpush1.msra.mxu0 %v1078
    %2085 = vmatprep.subr.mxu0 0.0
    %2086 = vmatpush1.msra.mxu0 %v1079
    %2087 = vmatprep.subr.mxu0 0.0
    %2088 = vmatpush1.msra.mxu0 0.0
    %2089 = vmatprep.subr.mxu0 0.0
    %2090 = vmatpush1.msra.mxu0 0.0
    %2091 = vmatprep.subr.mxu0 0.0
    %2092 = vmatpush1.msra.mxu0 0.0
    %2093 = vmatprep.subr.mxu0 0.0
    %2094 = vmatpush1.msra.mxu0 0.0
    %2095 = vmatprep.subr.mxu0 0.0
    %2096 = vmatpush1.msra.mxu0 0.0
    %2097 = vmatprep.subr.mxu0 0.0
    %2098 = vmatpush1.msra.mxu0 0.0
    %2099 = vmatprep.subr.mxu0 0.0
    %2100 = vmatpush1.msra.mxu0 0.0
    %2101 = vmatprep.subr.mxu0 0.0
    %2102 = vmatpush1.msra.mxu0 0.0
    %2103 = vmatprep.subr.mxu0 0.0
    %2104 = vmatpush1.msra.mxu0 0.0
    %2105 = vmatprep.subr.mxu0 0.0
    %2106 = vmatpush1.msra.mxu0 0.0
    %2107 = vmatprep.subr.mxu0 0.0
    %2108 = vmatpush1.msra.mxu0 0.0
    %2109 = vmatprep.subr.mxu0 0.0
    %2110 = vmatpush1.msra.mxu0 0.0
    %2111 = vmatprep.subr.mxu0 0.0
    %2112 = vmatpush1.msra.mxu0 0.0
    %2113 = vmatprep.subr.mxu0 0.0
    %2114 = vmatpush1.msra.mxu0 0.0
    %2115 = vmatprep.subr.mxu0 0.0
    %2116 = vmatpush1.msra.mxu0 0.0
    %2117 = vmatprep.subr.mxu0 0.0
    %2118 = vmatpush1.msra.mxu0 0.0
    %2119 = vmatprep.subr.mxu0 0.0
    %2120 = vmatpush1.msra.mxu0 0.0
    %2121 = vmatprep.subr.mxu0 0.0
    %2122 = vmatpush1.msra.mxu0 0.0
    %2123 = vmatprep.subr.mxu0 0.0
    %2124 = vmatpush1.msra.mxu0 0.0
    %2125 = vmatprep.subr.mxu0 0.0
    %2126 = vmatpush1.msra.mxu0 0.0
    %2127 = vmatprep.subr.mxu0 0.0
    %2128 = vmatpush1.msra.mxu0 0.0
    %2129 = vmatprep.subr.mxu0 0.0
    %2130 = vmatpush1.msra.mxu0 0.0
    %2131 = vmatprep.subr.mxu0 0.0
    %2132 = vmatpush1.msra.mxu0 0.0
    %2133 = vmatprep.subr.mxu0 0.0
    %2134 = vmatpush1.msra.mxu0 0.0
    %2135 = vmatprep.subr.mxu0 0.0
    %2136 = vmatpush1.msra.mxu0 0.0
    %2137 = vmatprep.subr.mxu0 0.0
    %2138 = vmatpush1.msra.mxu0 0.0
    %2139 = vmatprep.subr.mxu0 0.0
    %2140 = vmatpush1.msra.mxu0 0.0
    %2141 = vmatprep.subr.mxu0 0.0
    %2142 = vmatpush1.msra.mxu0 0.0
    %2143 = vmatprep.mubr.f32.mxu0 0.0
    %2144 = vmatmul.mubr.f32.gmra.mrb[0].mxu0 %v1980
    %v2145 = vpop.f32.mrb[0].mxu0
    %v2146 = vadd.f32 0.0, %v2145
    %v2147 = vpop.f32.mrb[0].mxu0
    %2148 = vdwg.mxu0
    %v2150 = vsel %vm153, %v2078, 0
    %2152 = vmatprep.subr.mxu0 0.0
    %2153 = vmatpush1.msra.mxu0 %v1072
    %2154 = vmatprep.subr.mxu0 0.0
    %2155 = vmatpush1.msra.mxu0 %v1073
    %2156 = vmatprep.subr.mxu0 0.0
    %2157 = vmatpush1.msra.mxu0 %v1074
    %2158 = vmatprep.subr.mxu0 0.0
    %2159 = vmatpush1.msra.mxu0 %v1075
    %2160 = vmatprep.subr.mxu0 0.0
    %2161 = vmatpush1.msra.mxu0 0.0
    %2162 = vmatprep.subr.mxu0 0.0
    %2163 = vmatpush1.msra.mxu0 0.0
    %2164 = vmatprep.subr.mxu0 0.0
    %2165 = vmatpush1.msra.mxu0 0.0
    %2166 = vmatprep.subr.mxu0 0.0
    %2167 = vmatpush1.msra.mxu0 0.0
    %2168 = vmatprep.subr.mxu0 0.0
    %2169 = vmatpush1.msra.mxu0 0.0
    %2170 = vmatprep.subr.mxu0 0.0
    %2171 = vmatpush1.msra.mxu0 0.0
    %2172 = vmatprep.subr.mxu0 0.0
    %2173 = vmatpush1.msra.mxu0 0.0
    %2174 = vmatprep.subr.mxu0 0.0
    %2175 = vmatpush1.msra.mxu0 0.0
    %2176 = vmatprep.subr.mxu0 0.0
    %2177 = vmatpush1.msra.mxu0 0.0
    %2178 = vmatprep.subr.mxu0 0.0
    %2179 = vmatpush1.msra.mxu0 0.0
    %2180 = vmatprep.subr.mxu0 0.0
    %2181 = vmatpush1.msra.mxu0 0.0
    %2182 = vmatprep.subr.mxu0 0.0
    %2183 = vmatpush1.msra.mxu0 0.0
    %2184 = vmatprep.subr.mxu0 0.0
    %2185 = vmatpush1.msra.mxu0 0.0
    %2186 = vmatprep.subr.mxu0 0.0
    %2187 = vmatpush1.msra.mxu0 0.0
    %2188 = vmatprep.subr.mxu0 0.0
    %2189 = vmatpush1.msra.mxu0 0.0
    %2190 = vmatprep.subr.mxu0 0.0
    %2191 = vmatpush1.msra.mxu0 0.0
    %2192 = vmatprep.subr.mxu0 0.0
    %2193 = vmatpush1.msra.mxu0 0.0
    %2194 = vmatprep.subr.mxu0 0.0
    %2195 = vmatpush1.msra.mxu0 0.0
    %2196 = vmatprep.subr.mxu0 0.0
    %2197 = vmatpush1.msra.mxu0 0.0
    %2198 = vmatprep.subr.mxu0 0.0
    %2199 = vmatpush1.msra.mxu0 0.0
    %2200 = vmatprep.subr.mxu0 0.0
    %2201 = vmatpush1.msra.mxu0 0.0
    %2202 = vmatprep.subr.mxu0 0.0
    %2203 = vmatpush1.msra.mxu0 0.0
    %2204 = vmatprep.subr.mxu0 0.0
    %2205 = vmatpush1.msra.mxu0 0.0
    %2206 = vmatprep.subr.mxu0 0.0
    %2207 = vmatpush1.msra.mxu0 0.0
    %2208 = vmatprep.subr.mxu0 0.0
    %2209 = vmatpush1.msra.mxu0 0.0
    %2210 = vmatprep.subr.mxu0 0.0
    %2211 = vmatpush1.msra.mxu0 0.0
    %2212 = vmatprep.subr.mxu0 0.0
    %2213 = vmatpush1.msra.mxu0 0.0
    %2214 = vmatprep.subr.mxu0 0.0
    %2215 = vmatpush1.msra.mxu0 0.0
    %2216 = vmatprep.mubr.f32.mxu0 0.0
    %2217 = vmatmul.mubr.f32.gmra.mrb[0].mxu0 %v2150
    %v2218 = vpop.f32.mrb[0].mxu0
    %v2219 = vadd.f32 %v2146, %v2218
    %v2220 = vpop.f32.mrb[0].mxu0
    %2221 = vdwg.mxu0
    %v2222 = vadd.f32 %v2219, %v1080
    %v2223 = vtanh.pop %v2222
    %v2225 = vsel %vm153, %v2223, 0
    %2227 = vmatprep.subr.mxu0 0.0
    %2228 = vmatpush1.msra.mxu0 %v1081
    %2229 = vmatprep.subr.mxu0 0.0
    %2230 = vmatpush1.msra.mxu0 %v1082
    %2231 = vmatprep.subr.mxu0 0.0
    %2232 = vmatpush1.msra.mxu0 %v1083
    %2233 = vmatprep.subr.mxu0 0.0
    %2234 = vmatpush1.msra.mxu0 %v1084
    %2235 = vmatprep.subr.mxu0 0.0
    %2236 = vmatpush1.msra.mxu0 0.0
    %2237 = vmatprep.subr.mxu0 0.0
    %2238 = vmatpush1.msra.mxu0 0.0
    %2239 = vmatprep.subr.mxu0 0.0
    %2240 = vmatpush1.msra.mxu0 0.0
    %2241 = vmatprep.subr.mxu0 0.0
    %2242 = vmatpush1.msra.mxu0 0.0
    %2243 = vmatprep.subr.mxu0 0.0
    %2244 = vmatpush1.msra.mxu0 0.0
    %2245 = vmatprep.subr.mxu0 0.0
    %2246 = vmatpush1.msra.mxu0 0.0
    %2247 = vmatprep.subr.mxu0 0.0
    %2248 = vmatpush1.msra.mxu0 0.0
    %2249 = vmatprep.subr.mxu0 0.0
    %2250 = vmatpush1.msra.mxu0 0.0
    %2251 = vmatprep.subr.mxu0 0.0
    %2252 = vmatpush1.msra.mxu0 0.0
    %2253 = vmatprep.subr.mxu0 0.0
    %2254 = vmatpush1.msra.mxu0 0.0
    %2255 = vmatprep.subr.mxu0 0.0
    %2256 = vmatpush1.msra.mxu0 0.0
    %2257 = vmatprep.subr.mxu0 0.0
    %2258 = vmatpush1.msra.mxu0 0.0
    %2259 = vmatprep.subr.mxu0 0.0
    %2260 = vmatpush1.msra.mxu0 0.0
    %2261 = vmatprep.subr.mxu0 0.0
    %2262 = vmatpush1.msra.mxu0 0.0
    %2263 = vmatprep.subr.mxu0 0.0
    %2264 = vmatpush1.msra.mxu0 0.0
    %2265 = vmatprep.subr.mxu0 0.0
    %2266 = vmatpush1.msra.mxu0 0.0
    %2267 = vmatprep.subr.mxu0 0.0
    %2268 = vmatpush1.msra.mxu0 0.0
    %2269 = vmatprep.subr.mxu0 0.0
    %2270 = vmatpush1.msra.mxu0 0.0
    %2271 = vmatprep.subr.mxu0 0.0
    %2272 = vmatpush1.msra.mxu0 0.0
    %2273 = vmatprep.subr.mxu0 0.0
    %2274 = vmatpush1.msra.mxu0 0.0
    %2275 = vmatprep.subr.mxu0 0.0
    %2276 = vmatpush1.msra.mxu0 0.0
    %2277 = vmatprep.subr.mxu0 0.0
    %2278 = vmatpush1.msra.mxu0 0.0
    %2279 = vmatprep.subr.mxu0 0.0
    %2280 = vmatpush1.msra.mxu0 0.0
    %2281 = vmatprep.subr.mxu0 0.0
    %2282 = vmatpush1.msra.mxu0 0.0
    %2283 = vmatprep.subr.mxu0 0.0
    %2284 = vmatpush1.msra.mxu0 0.0
    %2285 = vmatprep.subr.mxu0 0.0
    %2286 = vmatpush1.msra.mxu0 0.0
    %2287 = vmatprep.subr.mxu0 0.0
    %2288 = vmatpush1.msra.mxu0 0.0
    %2289 = vmatprep.subr.mxu0 0.0
    %2290 = vmatpush1.msra.mxu0 0.0
    %2291 = vmatprep.mubr.f32.mxu0 0.0
    %2292 = vmatmul.mubr.f32.gmra.mrb[0].mxu0 %v2225
    %v2293 = vpop.f32.mrb[0].mxu0
    %v2294 = vadd.f32 %v1085, %v2293
    %v2295 = vpop.f32.mrb[0].mxu0
    %2296 = vdwg.mxu0
    %v2297 = vmax.f32 %v2294, 0.0
    %v2298 = vsel %vm1317, %v2297, -inf
    %2299 = vmax.xlane.f32.xlu0 %v2298
    %v2300 = vpop.xlane.xlu0 %2299
    %vm2301 = vcmp.ge.f32.partialorder %v2297, %v2300
    %v2302 = vsel %vm2301, %v47, 128
    %v2303 = vsel %vm1317, %v2302, 2147483647
    %v2304 = vand.u32 %v2303, 65535
    %v2305 = vshra.s32 %v2303, 16
    %v2306 = vcvt.s32.f32 %v2304
    %v2307 = vcvt.s32.f32 %v2305
    %2308 = vmin.xlane.f32.xlu0 %v2307
    %v2309 = vpop.xlane.xlu0 %2308
    %vm2310 = vcmp.eq.f32.partialorder %v2307, %v2309
    %v2311 = vsel %vm2310, %v2306, inf
    %2312 = vmin.xlane.f32.xlu0 %v2311
    %v2313 = vpop.xlane.xlu0 %2312
    %v2314 = vcvt.f32.s32 %v2313
    %v2315 = vcvt.f32.s32 %v2309
    %v2316 = vshll.u32 %v2315, 16
    %v2317 = vadd.s32 %v2316, %v2314
    %s2318 = vtos %v2317
    %s2319 = scalar_lea.smem [#allocation3], 5
    %2320 = sst [smem:[%s2319]] %s2318
    %s2321 = sld [smem:[#allocation3 + $0x5]]
    %s2322 = scalar_lea.vmem %s2, %s2321
    %v2323 = vld [vmem:[%s2322] sm:$0x1]
    %2324 = vmatprep.subr.mxu0 0.0
    %2325 = vmatpush1.msra.mxu0 %v1076
    %2326 = vmatprep.subr.mxu0 0.0
    %2327 = vmatpush1.msra.mxu0 %v1077
    %2328 = vmatprep.subr.mxu0 0.0
    %2329 = vmatpush1.msra.mxu0 %v1078
    %2330 = vmatprep.subr.mxu0 0.0
    %2331 = vmatpush1.msra.mxu0 %v1079
    %2332 = vmatprep.subr.mxu0 0.0
    %2333 = vmatpush1.msra.mxu0 0.0
    %2334 = vmatprep.subr.mxu0 0.0
    %2335 = vmatpush1.msra.mxu0 0.0
    %2336 = vmatprep.subr.mxu0 0.0
    %2337 = vmatpush1.msra.mxu0 0.0
    %2338 = vmatprep.subr.mxu0 0.0
    %2339 = vmatpush1.msra.mxu0 0.0
    %2340 = vmatprep.subr.mxu0 0.0
    %2341 = vmatpush1.msra.mxu0 0.0
    %2342 = vmatprep.subr.mxu0 0.0
    %2343 = vmatpush1.msra.mxu0 0.0
    %2344 = vmatprep.subr.mxu0 0.0
    %2345 = vmatpush1.msra.mxu0 0.0
    %2346 = vmatprep.subr.mxu0 0.0
    %2347 = vmatpush1.msra.mxu0 0.0
    %2348 = vmatprep.subr.mxu0 0.0
    %2349 = vmatpush1.msra.mxu0 0.0
    %2350 = vmatprep.subr.mxu0 0.0
    %2351 = vmatpush1.msra.mxu0 0.0
    %2352 = vmatprep.subr.mxu0 0.0
    %2353 = vmatpush1.msra.mxu0 0.0
    %2354 = vmatprep.subr.mxu0 0.0
    %2355 = vmatpush1.msra.mxu0 0.0
    %2356 = vmatprep.subr.mxu0 0.0
    %2357 = vmatpush1.msra.mxu0 0.0
    %2358 = vmatprep.subr.mxu0 0.0
    %2359 = vmatpush1.msra.mxu0 0.0
    %2360 = vmatprep.subr.mxu0 0.0
    %2361 = vmatpush1.msra.mxu0 0.0
    %2362 = vmatprep.subr.mxu0 0.0
    %2363 = vmatpush1.msra.mxu0 0.0
    %2364 = vmatprep.subr.mxu0 0.0
    %2365 = vmatpush1.msra.mxu0 0.0
    %2366 = vmatprep.subr.mxu0 0.0
    %2367 = vmatpush1.msra.mxu0 0.0
    %2368 = vmatprep.subr.mxu0 0.0
    %2369 = vmatpush1.msra.mxu0 0.0
    %2370 = vmatprep.subr.mxu0 0.0
    %2371 = vmatpush1.msra.mxu0 0.0
    %2372 = vmatprep.subr.mxu0 0.0
    %2373 = vmatpush1.msra.mxu0 0.0
    %2374 = vmatprep.subr.mxu0 0.0
    %2375 = vmatpush1.msra.mxu0 0.0
    %2376 = vmatprep.subr.mxu0 0.0
    %2377 = vmatpush1.msra.mxu0 0.0
    %2378 = vmatprep.subr.mxu0 0.0
    %2379 = vmatpush1.msra.mxu0 0.0
    %2380 = vmatprep.subr.mxu0 0.0
    %2381 = vmatpush1.msra.mxu0 0.0
    %2382 = vmatprep.subr.mxu0 0.0
    %2383 = vmatpush1.msra.mxu0 0.0
    %2384 = vmatprep.subr.mxu0 0.0
    %2385 = vmatpush1.msra.mxu0 0.0
    %2386 = vmatprep.subr.mxu0 0.0
    %2387 = vmatpush1.msra.mxu0 0.0
    %2388 = vmatprep.mubr.f32.mxu0 0.0
    %2389 = vmatmul.mubr.f32.gmra.mrb[0].mxu0 %v2225
    %v2390 = vpop.f32.mrb[0].mxu0
    %v2391 = vadd.f32 0.0, %v2390
    %v2392 = vpop.f32.mrb[0].mxu0
    %2393 = vdwg.mxu0
    %v2395 = vsel %vm153, %v2323, 0
    %2397 = vmatprep.subr.mxu0 0.0
    %2398 = vmatpush1.msra.mxu0 %v1072
    %2399 = vmatprep.subr.mxu0 0.0
    %2400 = vmatpush1.msra.mxu0 %v1073
    %2401 = vmatprep.subr.mxu0 0.0
    %2402 = vmatpush1.msra.mxu0 %v1074
    %2403 = vmatprep.subr.mxu0 0.0
    %2404 = vmatpush1.msra.mxu0 %v1075
    %2405 = vmatprep.subr.mxu0 0.0
    %2406 = vmatpush1.msra.mxu0 0.0
    %2407 = vmatprep.subr.mxu0 0.0
    %2408 = vmatpush1.msra.mxu0 0.0
    %2409 = vmatprep.subr.mxu0 0.0
    %2410 = vmatpush1.msra.mxu0 0.0
    %2411 = vmatprep.subr.mxu0 0.0
    %2412 = vmatpush1.msra.mxu0 0.0
    %2413 = vmatprep.subr.mxu0 0.0
    %2414 = vmatpush1.msra.mxu0 0.0
    %2415 = vmatprep.subr.mxu0 0.0
    %2416 = vmatpush1.msra.mxu0 0.0
    %2417 = vmatprep.subr.mxu0 0.0
    %2418 = vmatpush1.msra.mxu0 0.0
    %2419 = vmatprep.subr.mxu0 0.0
    %2420 = vmatpush1.msra.mxu0 0.0
    %2421 = vmatprep.subr.mxu0 0.0
    %2422 = vmatpush1.msra.mxu0 0.0
    %2423 = vmatprep.subr.mxu0 0.0
    %2424 = vmatpush1.msra.mxu0 0.0
    %2425 = vmatprep.subr.mxu0 0.0
    %2426 = vmatpush1.msra.mxu0 0.0
    %2427 = vmatprep.subr.mxu0 0.0
    %2428 = vmatpush1.msra.mxu0 0.0
    %2429 = vmatprep.subr.mxu0 0.0
    %2430 = vmatpush1.msra.mxu0 0.0
    %2431 = vmatprep.subr.mxu0 0.0
    %2432 = vmatpush1.msra.mxu0 0.0
    %2433 = vmatprep.subr.mxu0 0.0
    %2434 = vmatpush1.msra.mxu0 0.0
    %2435 = vmatprep.subr.mxu0 0.0
    %2436 = vmatpush1.msra.mxu0 0.0
    %2437 = vmatprep.subr.mxu0 0.0
    %2438 = vmatpush1.msra.mxu0 0.0
    %2439 = vmatprep.subr.mxu0 0.0
    %2440 = vmatpush1.msra.mxu0 0.0
    %2441 = vmatprep.subr.mxu0 0.0
    %2442 = vmatpush1.msra.mxu0 0.0
    %2443 = vmatprep.subr.mxu0 0.0
    %2444 = vmatpush1.msra.mxu0 0.0
    %2445 = vmatprep.subr.mxu0 0.0
    %2446 = vmatpush1.msra.mxu0 0.0
    %2447 = vmatprep.subr.mxu0 0.0
    %2448 = vmatpush1.msra.mxu0 0.0
    %2449 = vmatprep.subr.mxu0 0.0
    %2450 = vmatpush1.msra.mxu0 0.0
    %2451 = vmatprep.subr.mxu0 0.0
    %2452 = vmatpush1.msra.mxu0 0.0
    %2453 = vmatprep.subr.mxu0 0.0
    %2454 = vmatpush1.msra.mxu0 0.0
    %2455 = vmatprep.subr.mxu0 0.0
    %2456 = vmatpush1.msra.mxu0 0.0
    %2457 = vmatprep.subr.mxu0 0.0
    %2458 = vmatpush1.msra.mxu0 0.0
    %2459 = vmatprep.subr.mxu0 0.0
    %2460 = vmatpush1.msra.mxu0 0.0
    %2461 = vmatprep.mubr.f32.mxu0 0.0
    %2462 = vmatmul.mubr.f32.gmra.mrb[0].mxu0 %v2395
    %v2463 = vpop.f32.mrb[0].mxu0
    %v2464 = vadd.f32 %v2391, %v2463
    %v2465 = vpop.f32.mrb[0].mxu0
    %2466 = vdwg.mxu0
    %v2467 = vadd.f32 %v2464, %v1080
    %v2468 = vtanh.pop %v2467
    %v2470 = vsel %vm153, %v2468, 0
    %2472 = vmatprep.subr.mxu0 0.0
    %2473 = vmatpush1.msra.mxu0 %v1081
    %2474 = vmatprep.subr.mxu0 0.0
    %2475 = vmatpush1.msra.mxu0 %v1082
    %2476 = vmatprep.subr.mxu0 0.0
    %2477 = vmatpush1.msra.mxu0 %v1083
    %2478 = vmatprep.subr.mxu0 0.0
    %2479 = vmatpush1.msra.mxu0 %v1084
    %2480 = vmatprep.subr.mxu0 0.0
    %2481 = vmatpush1.msra.mxu0 0.0
    %2482 = vmatprep.subr.mxu0 0.0
    %2483 = vmatpush1.msra.mxu0 0.0
    %2484 = vmatprep.subr.mxu0 0.0
    %2485 = vmatpush1.msra.mxu0 0.0
    %2486 = vmatprep.subr.mxu0 0.0
    %2487 = vmatpush1.msra.mxu0 0.0
    %2488 = vmatprep.subr.mxu0 0.0
    %2489 = vmatpush1.msra.mxu0 0.0
    %2490 = vmatprep.subr.mxu0 0.0
    %2491 = vmatpush1.msra.mxu0 0.0
    %2492 = vmatprep.subr.mxu0 0.0
    %2493 = vmatpush1.msra.mxu0 0.0
    %2494 = vmatprep.subr.mxu0 0.0
    %2495 = vmatpush1.msra.mxu0 0.0
    %2496 = vmatprep.subr.mxu0 0.0
    %2497 = vmatpush1.msra.mxu0 0.0
    %2498 = vmatprep.subr.mxu0 0.0
    %2499 = vmatpush1.msra.mxu0 0.0
    %2500 = vmatprep.subr.mxu0 0.0
    %2501 = vmatpush1.msra.mxu0 0.0
    %2502 = vmatprep.subr.mxu0 0.0
    %2503 = vmatpush1.msra.mxu0 0.0
    %2504 = vmatprep.subr.mxu0 0.0
    %2505 = vmatpush1.msra.mxu0 0.0
    %2506 = vmatprep.subr.mxu0 0.0
    %2507 = vmatpush1.msra.mxu0 0.0
    %2508 = vmatprep.subr.mxu0 0.0
    %2509 = vmatpush1.msra.mxu0 0.0
    %2510 = vmatprep.subr.mxu0 0.0
    %2511 = vmatpush1.msra.mxu0 0.0
    %2512 = vmatprep.subr.mxu0 0.0
    %2513 = vmatpush1.msra.mxu0 0.0
    %2514 = vmatprep.subr.mxu0 0.0
    %2515 = vmatpush1.msra.mxu0 0.0
    %2516 = vmatprep.subr.mxu0 0.0
    %2517 = vmatpush1.msra.mxu0 0.0
    %2518 = vmatprep.subr.mxu0 0.0
    %2519 = vmatpush1.msra.mxu0 0.0
    %2520 = vmatprep.subr.mxu0 0.0
    %2521 = vmatpush1.msra.mxu0 0.0
    %2522 = vmatprep.subr.mxu0 0.0
    %2523 = vmatpush1.msra.mxu0 0.0
    %2524 = vmatprep.subr.mxu0 0.0
    %2525 = vmatpush1.msra.mxu0 0.0
    %2526 = vmatprep.subr.mxu0 0.0
    %2527 = vmatpush1.msra.mxu0 0.0
    %2528 = vmatprep.subr.mxu0 0.0
    %2529 = vmatpush1.msra.mxu0 0.0
    %2530 = vmatprep.subr.mxu0 0.0
    %2531 = vmatpush1.msra.mxu0 0.0
    %2532 = vmatprep.subr.mxu0 0.0
    %2533 = vmatpush1.msra.mxu0 0.0
    %2534 = vmatprep.subr.mxu0 0.0
    %2535 = vmatpush1.msra.mxu0 0.0
    %2536 = vmatprep.mubr.f32.mxu0 0.0
    %2537 = vmatmul.mubr.f32.gmra.mrb[0].mxu0 %v2470
    %v2538 = vpop.f32.mrb[0].mxu0
    %v2539 = vadd.f32 %v1085, %v2538
    %v2540 = vpop.f32.mrb[0].mxu0
    %2541 = vdwg.mxu0
    %v2542 = vmax.f32 %v2539, 0.0
    %v2543 = vsel %vm1317, %v2542, -inf
    %2544 = vmax.xlane.f32.xlu0 %v2543
    %v2545 = vpop.xlane.xlu0 %2544
    %vm2546 = vcmp.ge.f32.partialorder %v2542, %v2545
    %v2547 = vsel %vm2546, %v47, 128
    %v2548 = vsel %vm1317, %v2547, 2147483647
    %v2549 = vand.u32 %v2548, 65535
    %v2550 = vshra.s32 %v2548, 16
    %v2551 = vcvt.s32.f32 %v2549
    %v2552 = vcvt.s32.f32 %v2550
    %2553 = vmin.xlane.f32.xlu0 %v2552
    %v2554 = vpop.xlane.xlu0 %2553
    %vm2555 = vcmp.eq.f32.partialorder %v2552, %v2554
    %v2556 = vsel %vm2555, %v2551, inf
    %2557 = vmin.xlane.f32.xlu0 %v2556
    %v2558 = vpop.xlane.xlu0 %2557
    %v2559 = vcvt.f32.s32 %v2558
    %v2560 = vcvt.f32.s32 %v2554
    %v2561 = vshll.u32 %v2560, 16
    %v2562 = vadd.s32 %v2561, %v2559
    %s2563 = vtos %v2562
    %s2564 = scalar_lea.smem [#allocation3], 6
    %2565 = sst [smem:[%s2564]] %s2563
    %s2566 = sld [smem:[#allocation3 + $0x6]]
    %s2567 = scalar_lea.vmem %s2, %s2566
    %v2568 = vld [vmem:[%s2567] sm:$0x1]
    %2569 = vmatprep.subr.mxu0 0.0
    %2570 = vmatpush1.msra.mxu0 %v1076
    %2571 = vmatprep.subr.mxu0 0.0
    %2572 = vmatpush1.msra.mxu0 %v1077
    %2573 = vmatprep.subr.mxu0 0.0
    %2574 = vmatpush1.msra.mxu0 %v1078
    %2575 = vmatprep.subr.mxu0 0.0
    %2576 = vmatpush1.msra.mxu0 %v1079
    %2577 = vmatprep.subr.mxu0 0.0
    %2578 = vmatpush1.msra.mxu0 0.0
    %2579 = vmatprep.subr.mxu0 0.0
    %2580 = vmatpush1.msra.mxu0 0.0
    %2581 = vmatprep.subr.mxu0 0.0
    %2582 = vmatpush1.msra.mxu0 0.0
    %2583 = vmatprep.subr.mxu0 0.0
    %2584 = vmatpush1.msra.mxu0 0.0
    %2585 = vmatprep.subr.mxu0 0.0
    %2586 = vmatpush1.msra.mxu0 0.0
    %2587 = vmatprep.subr.mxu0 0.0
    %2588 = vmatpush1.msra.mxu0 0.0
    %2589 = vmatprep.subr.mxu0 0.0
    %2590 = vmatpush1.msra.mxu0 0.0
    %2591 = vmatprep.subr.mxu0 0.0
    %2592 = vmatpush1.msra.mxu0 0.0
    %2593 = vmatprep.subr.mxu0 0.0
    %2594 = vmatpush1.msra.mxu0 0.0
    %2595 = vmatprep.subr.mxu0 0.0
    %2596 = vmatpush1.msra.mxu0 0.0
    %2597 = vmatprep.subr.mxu0 0.0
    %2598 = vmatpush1.msra.mxu0 0.0
    %2599 = vmatprep.subr.mxu0 0.0
    %2600 = vmatpush1.msra.mxu0 0.0
    %2601 = vmatprep.subr.mxu0 0.0
    %2602 = vmatpush1.msra.mxu0 0.0
    %2603 = vmatprep.subr.mxu0 0.0
    %2604 = vmatpush1.msra.mxu0 0.0
    %2605 = vmatprep.subr.mxu0 0.0
    %2606 = vmatpush1.msra.mxu0 0.0
    %2607 = vmatprep.subr.mxu0 0.0
    %2608 = vmatpush1.msra.mxu0 0.0
    %2609 = vmatprep.subr.mxu0 0.0
    %2610 = vmatpush1.msra.mxu0 0.0
    %2611 = vmatprep.subr.mxu0 0.0
    %2612 = vmatpush1.msra.mxu0 0.0
    %2613 = vmatprep.subr.mxu0 0.0
    %2614 = vmatpush1.msra.mxu0 0.0
    %2615 = vmatprep.subr.mxu0 0.0
    %2616 = vmatpush1.msra.mxu0 0.0
    %2617 = vmatprep.subr.mxu0 0.0
    %2618 = vmatpush1.msra.mxu0 0.0
    %2619 = vmatprep.subr.mxu0 0.0
    %2620 = vmatpush1.msra.mxu0 0.0
    %2621 = vmatprep.subr.mxu0 0.0
    %2622 = vmatpush1.msra.mxu0 0.0
    %2623 = vmatprep.subr.mxu0 0.0
    %2624 = vmatpush1.msra.mxu0 0.0
    %2625 = vmatprep.subr.mxu0 0.0
    %2626 = vmatpush1.msra.mxu0 0.0
    %2627 = vmatprep.subr.mxu0 0.0
    %2628 = vmatpush1.msra.mxu0 0.0
    %2629 = vmatprep.subr.mxu0 0.0
    %2630 = vmatpush1.msra.mxu0 0.0
    %2631 = vmatprep.subr.mxu0 0.0
    %2632 = vmatpush1.msra.mxu0 0.0
    %2633 = vmatprep.mubr.f32.mxu0 0.0
    %2634 = vmatmul.mubr.f32.gmra.mrb[0].mxu0 %v2470
    %v2635 = vpop.f32.mrb[0].mxu0
    %v2636 = vadd.f32 0.0, %v2635
    %v2637 = vpop.f32.mrb[0].mxu0
    %2638 = vdwg.mxu0
    %v2640 = vsel %vm153, %v2568, 0
    %2642 = vmatprep.subr.mxu0 0.0
    %2643 = vmatpush1.msra.mxu0 %v1072
    %2644 = vmatprep.subr.mxu0 0.0
    %2645 = vmatpush1.msra.mxu0 %v1073
    %2646 = vmatprep.subr.mxu0 0.0
    %2647 = vmatpush1.msra.mxu0 %v1074
    %2648 = vmatprep.subr.mxu0 0.0
    %2649 = vmatpush1.msra.mxu0 %v1075
    %2650 = vmatprep.subr.mxu0 0.0
    %2651 = vmatpush1.msra.mxu0 0.0
    %2652 = vmatprep.subr.mxu0 0.0
    %2653 = vmatpush1.msra.mxu0 0.0
    %2654 = vmatprep.subr.mxu0 0.0
    %2655 = vmatpush1.msra.mxu0 0.0
    %2656 = vmatprep.subr.mxu0 0.0
    %2657 = vmatpush1.msra.mxu0 0.0
    %2658 = vmatprep.subr.mxu0 0.0
    %2659 = vmatpush1.msra.mxu0 0.0
    %2660 = vmatprep.subr.mxu0 0.0
    %2661 = vmatpush1.msra.mxu0 0.0
    %2662 = vmatprep.subr.mxu0 0.0
    %2663 = vmatpush1.msra.mxu0 0.0
    %2664 = vmatprep.subr.mxu0 0.0
    %2665 = vmatpush1.msra.mxu0 0.0
    %2666 = vmatprep.subr.mxu0 0.0
    %2667 = vmatpush1.msra.mxu0 0.0
    %2668 = vmatprep.subr.mxu0 0.0
    %2669 = vmatpush1.msra.mxu0 0.0
    %2670 = vmatprep.subr.mxu0 0.0
    %2671 = vmatpush1.msra.mxu0 0.0
    %2672 = vmatprep.subr.mxu0 0.0
    %2673 = vmatpush1.msra.mxu0 0.0
    %2674 = vmatprep.subr.mxu0 0.0
    %2675 = vmatpush1.msra.mxu0 0.0
    %2676 = vmatprep.subr.mxu0 0.0
    %2677 = vmatpush1.msra.mxu0 0.0
    %2678 = vmatprep.subr.mxu0 0.0
    %2679 = vmatpush1.msra.mxu0 0.0
    %2680 = vmatprep.subr.mxu0 0.0
    %2681 = vmatpush1.msra.mxu0 0.0
    %2682 = vmatprep.subr.mxu0 0.0
    %2683 = vmatpush1.msra.mxu0 0.0
    %2684 = vmatprep.subr.mxu0 0.0
    %2685 = vmatpush1.msra.mxu0 0.0
    %2686 = vmatprep.subr.mxu0 0.0
    %2687 = vmatpush1.msra.mxu0 0.0
    %2688 = vmatprep.subr.mxu0 0.0
    %2689 = vmatpush1.msra.mxu0 0.0
    %2690 = vmatprep.subr.mxu0 0.0
    %2691 = vmatpush1.msra.mxu0 0.0
    %2692 = vmatprep.subr.mxu0 0.0
    %2693 = vmatpush1.msra.mxu0 0.0
    %2694 = vmatprep.subr.mxu0 0.0
    %2695 = vmatpush1.msra.mxu0 0.0
    %2696 = vmatprep.subr.mxu0 0.0
    %2697 = vmatpush1.msra.mxu0 0.0
    %2698 = vmatprep.subr.mxu0 0.0
    %2699 = vmatpush1.msra.mxu0 0.0
    %2700 = vmatprep.subr.mxu0 0.0
    %2701 = vmatpush1.msra.mxu0 0.0
    %2702 = vmatprep.subr.mxu0 0.0
    %2703 = vmatpush1.msra.mxu0 0.0
    %2704 = vmatprep.subr.mxu0 0.0
    %2705 = vmatpush1.msra.mxu0 0.0
    %2706 = vmatprep.mubr.f32.mxu0 0.0
    %2707 = vmatmul.mubr.f32.gmra.mrb[0].mxu0 %v2640
    %v2708 = vpop.f32.mrb[0].mxu0
    %v2709 = vadd.f32 %v2636, %v2708
    %v2710 = vpop.f32.mrb[0].mxu0
    %2711 = vdwg.mxu0
    %v2712 = vadd.f32 %v2709, %v1080
    %v2713 = vtanh.pop %v2712
    %v2715 = vsel %vm153, %v2713, 0
    %2717 = vmatprep.subr.mxu0 0.0
    %2718 = vmatpush1.msra.mxu0 %v1081
    %2719 = vmatprep.subr.mxu0 0.0
    %2720 = vmatpush1.msra.mxu0 %v1082
    %2721 = vmatprep.subr.mxu0 0.0
    %2722 = vmatpush1.msra.mxu0 %v1083
    %2723 = vmatprep.subr.mxu0 0.0
    %2724 = vmatpush1.msra.mxu0 %v1084
    %2725 = vmatprep.subr.mxu0 0.0
    %2726 = vmatpush1.msra.mxu0 0.0
    %2727 = vmatprep.subr.mxu0 0.0
    %2728 = vmatpush1.msra.mxu0 0.0
    %2729 = vmatprep.subr.mxu0 0.0
    %2730 = vmatpush1.msra.mxu0 0.0
    %2731 = vmatprep.subr.mxu0 0.0
    %2732 = vmatpush1.msra.mxu0 0.0
    %2733 = vmatprep.subr.mxu0 0.0
    %2734 = vmatpush1.msra.mxu0 0.0
    %2735 = vmatprep.subr.mxu0 0.0
    %2736 = vmatpush1.msra.mxu0 0.0
    %2737 = vmatprep.subr.mxu0 0.0
    %2738 = vmatpush1.msra.mxu0 0.0
    %2739 = vmatprep.subr.mxu0 0.0
    %2740 = vmatpush1.msra.mxu0 0.0
    %2741 = vmatprep.subr.mxu0 0.0
    %2742 = vmatpush1.msra.mxu0 0.0
    %2743 = vmatprep.subr.mxu0 0.0
    %2744 = vmatpush1.msra.mxu0 0.0
    %2745 = vmatprep.subr.mxu0 0.0
    %2746 = vmatpush1.msra.mxu0 0.0
    %2747 = vmatprep.subr.mxu0 0.0
    %2748 = vmatpush1.msra.mxu0 0.0
    %2749 = vmatprep.subr.mxu0 0.0
    %2750 = vmatpush1.msra.mxu0 0.0
    %2751 = vmatprep.subr.mxu0 0.0
    %2752 = vmatpush1.msra.mxu0 0.0
    %2753 = vmatprep.subr.mxu0 0.0
    %2754 = vmatpush1.msra.mxu0 0.0
    %2755 = vmatprep.subr.mxu0 0.0
    %2756 = vmatpush1.msra.mxu0 0.0
    %2757 = vmatprep.subr.mxu0 0.0
    %2758 = vmatpush1.msra.mxu0 0.0
    %2759 = vmatprep.subr.mxu0 0.0
    %2760 = vmatpush1.msra.mxu0 0.0
    %2761 = vmatprep.subr.mxu0 0.0
    %2762 = vmatpush1.msra.mxu0 0.0
    %2763 = vmatprep.subr.mxu0 0.0
    %2764 = vmatpush1.msra.mxu0 0.0
    %2765 = vmatprep.subr.mxu0 0.0
    %2766 = vmatpush1.msra.mxu0 0.0
    %2767 = vmatprep.subr.mxu0 0.0
    %2768 = vmatpush1.msra.mxu0 0.0
    %2769 = vmatprep.subr.mxu0 0.0
    %2770 = vmatpush1.msra.mxu0 0.0
    %2771 = vmatprep.subr.mxu0 0.0
    %2772 = vmatpush1.msra.mxu0 0.0
    %2773 = vmatprep.subr.mxu0 0.0
    %2774 = vmatpush1.msra.mxu0 0.0
    %2775 = vmatprep.subr.mxu0 0.0
    %2776 = vmatpush1.msra.mxu0 0.0
    %2777 = vmatprep.subr.mxu0 0.0
    %2778 = vmatpush1.msra.mxu0 0.0
    %2779 = vmatprep.subr.mxu0 0.0
    %2780 = vmatpush1.msra.mxu0 0.0
    %2781 = vmatprep.mubr.f32.mxu0 0.0
    %2782 = vmatmul.mubr.f32.gmra.mrb[0].mxu0 %v2715
    %v2783 = vpop.f32.mrb[0].mxu0
    %v2784 = vadd.f32 %v1085, %v2783
    %v2785 = vpop.f32.mrb[0].mxu0
    %2786 = vdwg.mxu0
    %v2787 = vmax.f32 %v2784, 0.0
    %v2788 = vsel %vm1317, %v2787, -inf
    %2789 = vmax.xlane.f32.xlu0 %v2788
    %v2790 = vpop.xlane.xlu0 %2789
    %vm2791 = vcmp.ge.f32.partialorder %v2787, %v2790
    %v2792 = vsel %vm2791, %v47, 128
    %v2793 = vsel %vm1317, %v2792, 2147483647
    %v2794 = vand.u32 %v2793, 65535
    %v2795 = vshra.s32 %v2793, 16
    %v2796 = vcvt.s32.f32 %v2794
    %v2797 = vcvt.s32.f32 %v2795
    %2798 = vmin.xlane.f32.xlu0 %v2797
    %v2799 = vpop.xlane.xlu0 %2798
    %vm2800 = vcmp.eq.f32.partialorder %v2797, %v2799
    %v2801 = vsel %vm2800, %v2796, inf
    %2802 = vmin.xlane.f32.xlu0 %v2801
    %v2803 = vpop.xlane.xlu0 %2802
    %v2804 = vcvt.f32.s32 %v2803
    %v2805 = vcvt.f32.s32 %v2799
    %v2806 = vshll.u32 %v2805, 16
    %v2807 = vadd.s32 %v2806, %v2804
    %s2808 = vtos %v2807
    %s2809 = scalar_lea.smem [#allocation3], 7
    %2810 = sst [smem:[%s2809]] %s2808
    %s2811 = sld [smem:[#allocation3 + $0x7]]
    %s2812 = scalar_lea.vmem %s2, %s2811
    %v2813 = vld [vmem:[%s2812] sm:$0x1]
    %2814 = vmatprep.subr.mxu0 0.0
    %2815 = vmatpush1.msra.mxu0 %v1076
    %2816 = vmatprep.subr.mxu0 0.0
    %2817 = vmatpush1.msra.mxu0 %v1077
    %2818 = vmatprep.subr.mxu0 0.0
    %2819 = vmatpush1.msra.mxu0 %v1078
    %2820 = vmatprep.subr.mxu0 0.0
    %2821 = vmatpush1.msra.mxu0 %v1079
    %2822 = vmatprep.subr.mxu0 0.0
    %2823 = vmatpush1.msra.mxu0 0.0
    %2824 = vmatprep.subr.mxu0 0.0
    %2825 = vmatpush1.msra.mxu0 0.0
    %2826 = vmatprep.subr.mxu0 0.0
    %2827 = vmatpush1.msra.mxu0 0.0
    %2828 = vmatprep.subr.mxu0 0.0
    %2829 = vmatpush1.msra.mxu0 0.0
    %2830 = vmatprep.subr.mxu0 0.0
    %2831 = vmatpush1.msra.mxu0 0.0
    %2832 = vmatprep.subr.mxu0 0.0
    %2833 = vmatpush1.msra.mxu0 0.0
    %2834 = vmatprep.subr.mxu0 0.0
    %2835 = vmatpush1.msra.mxu0 0.0
    %2836 = vmatprep.subr.mxu0 0.0
    %2837 = vmatpush1.msra.mxu0 0.0
    %2838 = vmatprep.subr.mxu0 0.0
    %2839 = vmatpush1.msra.mxu0 0.0
    %2840 = vmatprep.subr.mxu0 0.0
    %2841 = vmatpush1.msra.mxu0 0.0
    %2842 = vmatprep.subr.mxu0 0.0
    %2843 = vmatpush1.msra.mxu0 0.0
    %2844 = vmatprep.subr.mxu0 0.0
    %2845 = vmatpush1.msra.mxu0 0.0
    %2846 = vmatprep.subr.mxu0 0.0
    %2847 = vmatpush1.msra.mxu0 0.0
    %2848 = vmatprep.subr.mxu0 0.0
    %2849 = vmatpush1.msra.mxu0 0.0
    %2850 = vmatprep.subr.mxu0 0.0
    %2851 = vmatpush1.msra.mxu0 0.0
    %2852 = vmatprep.subr.mxu0 0.0
    %2853 = vmatpush1.msra.mxu0 0.0
    %2854 = vmatprep.subr.mxu0 0.0
    %2855 = vmatpush1.msra.mxu0 0.0
    %2856 = vmatprep.subr.mxu0 0.0
    %2857 = vmatpush1.msra.mxu0 0.0
    %2858 = vmatprep.subr.mxu0 0.0
    %2859 = vmatpush1.msra.mxu0 0.0
    %2860 = vmatprep.subr.mxu0 0.0
    %2861 = vmatpush1.msra.mxu0 0.0
    %2862 = vmatprep.subr.mxu0 0.0
    %2863 = vmatpush1.msra.mxu0 0.0
    %2864 = vmatprep.subr.mxu0 0.0
    %2865 = vmatpush1.msra.mxu0 0.0
    %2866 = vmatprep.subr.mxu0 0.0
    %2867 = vmatpush1.msra.mxu0 0.0
    %2868 = vmatprep.subr.mxu0 0.0
    %2869 = vmatpush1.msra.mxu0 0.0
    %2870 = vmatprep.subr.mxu0 0.0
    %2871 = vmatpush1.msra.mxu0 0.0
    %2872 = vmatprep.subr.mxu0 0.0
    %2873 = vmatpush1.msra.mxu0 0.0
    %2874 = vmatprep.subr.mxu0 0.0
    %2875 = vmatpush1.msra.mxu0 0.0
    %2876 = vmatprep.subr.mxu0 0.0
    %2877 = vmatpush1.msra.mxu0 0.0
    %2878 = vmatprep.mubr.f32.mxu0 0.0
    %2879 = vmatmul.mubr.f32.gmra.mrb[0].mxu0 %v2715
    %v2880 = vpop.f32.mrb[0].mxu0
    %v2881 = vadd.f32 0.0, %v2880
    %v2882 = vpop.f32.mrb[0].mxu0
    %2883 = vdwg.mxu0
    %v2885 = vsel %vm153, %v2813, 0
    %2887 = vmatprep.subr.mxu0 0.0
    %2888 = vmatpush1.msra.mxu0 %v1072
    %2889 = vmatprep.subr.mxu0 0.0
    %2890 = vmatpush1.msra.mxu0 %v1073
    %2891 = vmatprep.subr.mxu0 0.0
    %2892 = vmatpush1.msra.mxu0 %v1074
    %2893 = vmatprep.subr.mxu0 0.0
    %2894 = vmatpush1.msra.mxu0 %v1075
    %2895 = vmatprep.subr.mxu0 0.0
    %2896 = vmatpush1.msra.mxu0 0.0
    %2897 = vmatprep.subr.mxu0 0.0
    %2898 = vmatpush1.msra.mxu0 0.0
    %2899 = vmatprep.subr.mxu0 0.0
    %2900 = vmatpush1.msra.mxu0 0.0
    %2901 = vmatprep.subr.mxu0 0.0
    %2902 = vmatpush1.msra.mxu0 0.0
    %2903 = vmatprep.subr.mxu0 0.0
    %2904 = vmatpush1.msra.mxu0 0.0
    %2905 = vmatprep.subr.mxu0 0.0
    %2906 = vmatpush1.msra.mxu0 0.0
    %2907 = vmatprep.subr.mxu0 0.0
    %2908 = vmatpush1.msra.mxu0 0.0
    %2909 = vmatprep.subr.mxu0 0.0
    %2910 = vmatpush1.msra.mxu0 0.0
    %2911 = vmatprep.subr.mxu0 0.0
    %2912 = vmatpush1.msra.mxu0 0.0
    %2913 = vmatprep.subr.mxu0 0.0
    %2914 = vmatpush1.msra.mxu0 0.0
    %2915 = vmatprep.subr.mxu0 0.0
    %2916 = vmatpush1.msra.mxu0 0.0
    %2917 = vmatprep.subr.mxu0 0.0
    %2918 = vmatpush1.msra.mxu0 0.0
    %2919 = vmatprep.subr.mxu0 0.0
    %2920 = vmatpush1.msra.mxu0 0.0
    %2921 = vmatprep.subr.mxu0 0.0
    %2922 = vmatpush1.msra.mxu0 0.0
    %2923 = vmatprep.subr.mxu0 0.0
    %2924 = vmatpush1.msra.mxu0 0.0
    %2925 = vmatprep.subr.mxu0 0.0
    %2926 = vmatpush1.msra.mxu0 0.0
    %2927 = vmatprep.subr.mxu0 0.0
    %2928 = vmatpush1.msra.mxu0 0.0
    %2929 = vmatprep.subr.mxu0 0.0
    %2930 = vmatpush1.msra.mxu0 0.0
    %2931 = vmatprep.subr.mxu0 0.0
    %2932 = vmatpush1.msra.mxu0 0.0
    %2933 = vmatprep.subr.mxu0 0.0
    %2934 = vmatpush1.msra.mxu0 0.0
    %2935 = vmatprep.subr.mxu0 0.0
    %2936 = vmatpush1.msra.mxu0 0.0
    %2937 = vmatprep.subr.mxu0 0.0
    %2938 = vmatpush1.msra.mxu0 0.0
    %2939 = vmatprep.subr.mxu0 0.0
    %2940 = vmatpush1.msra.mxu0 0.0
    %2941 = vmatprep.subr.mxu0 0.0
    %2942 = vmatpush1.msra.mxu0 0.0
    %2943 = vmatprep.subr.mxu0 0.0
    %2944 = vmatpush1.msra.mxu0 0.0
    %2945 = vmatprep.subr.mxu0 0.0
    %2946 = vmatpush1.msra.mxu0 0.0
    %2947 = vmatprep.subr.mxu0 0.0
    %2948 = vmatpush1.msra.mxu0 0.0
    %2949 = vmatprep.subr.mxu0 0.0
    %2950 = vmatpush1.msra.mxu0 0.0
    %2951 = vmatprep.mubr.f32.mxu0 0.0
    %2952 = vmatmul.mubr.f32.gmra.mrb[0].mxu0 %v2885
    %v2953 = vpop.f32.mrb[0].mxu0
    %v2954 = vadd.f32 %v2881, %v2953
    %v2955 = vpop.f32.mrb[0].mxu0
    %2956 = vdwg.mxu0
    %v2957 = vadd.f32 %v2954, %v1080
    %v2958 = vtanh.pop %v2957
    %v2960 = vsel %vm153, %v2958, 0
    %2962 = vmatprep.subr.mxu0 0.0
    %2963 = vmatpush1.msra.mxu0 %v1081
    %2964 = vmatprep.subr.mxu0 0.0
    %2965 = vmatpush1.msra.mxu0 %v1082
    %2966 = vmatprep.subr.mxu0 0.0
    %2967 = vmatpush1.msra.mxu0 %v1083
    %2968 = vmatprep.subr.mxu0 0.0
    %2969 = vmatpush1.msra.mxu0 %v1084
    %2970 = vmatprep.subr.mxu0 0.0
    %2971 = vmatpush1.msra.mxu0 0.0
    %2972 = vmatprep.subr.mxu0 0.0
    %2973 = vmatpush1.msra.mxu0 0.0
    %2974 = vmatprep.subr.mxu0 0.0
    %2975 = vmatpush1.msra.mxu0 0.0
    %2976 = vmatprep.subr.mxu0 0.0
    %2977 = vmatpush1.msra.mxu0 0.0
    %2978 = vmatprep.subr.mxu0 0.0
    %2979 = vmatpush1.msra.mxu0 0.0
    %2980 = vmatprep.subr.mxu0 0.0
    %2981 = vmatpush1.msra.mxu0 0.0
    %2982 = vmatprep.subr.mxu0 0.0
    %2983 = vmatpush1.msra.mxu0 0.0
    %2984 = vmatprep.subr.mxu0 0.0
    %2985 = vmatpush1.msra.mxu0 0.0
    %2986 = vmatprep.subr.mxu0 0.0
    %2987 = vmatpush1.msra.mxu0 0.0
    %2988 = vmatprep.subr.mxu0 0.0
    %2989 = vmatpush1.msra.mxu0 0.0
    %2990 = vmatprep.subr.mxu0 0.0
    %2991 = vmatpush1.msra.mxu0 0.0
    %2992 = vmatprep.subr.mxu0 0.0
    %2993 = vmatpush1.msra.mxu0 0.0
    %2994 = vmatprep.subr.mxu0 0.0
    %2995 = vmatpush1.msra.mxu0 0.0
    %2996 = vmatprep.subr.mxu0 0.0
    %2997 = vmatpush1.msra.mxu0 0.0
    %2998 = vmatprep.subr.mxu0 0.0
    %2999 = vmatpush1.msra.mxu0 0.0
    %3000 = vmatprep.subr.mxu0 0.0
    %3001 = vmatpush1.msra.mxu0 0.0
    %3002 = vmatprep.subr.mxu0 0.0
    %3003 = vmatpush1.msra.mxu0 0.0
    %3004 = vmatprep.subr.mxu0 0.0
    %3005 = vmatpush1.msra.mxu0 0.0
    %3006 = vmatprep.subr.mxu0 0.0
    %3007 = vmatpush1.msra.mxu0 0.0
    %3008 = vmatprep.subr.mxu0 0.0
    %3009 = vmatpush1.msra.mxu0 0.0
    %3010 = vmatprep.subr.mxu0 0.0
    %3011 = vmatpush1.msra.mxu0 0.0
    %3012 = vmatprep.subr.mxu0 0.0
    %3013 = vmatpush1.msra.mxu0 0.0
    %3014 = vmatprep.subr.mxu0 0.0
    %3015 = vmatpush1.msra.mxu0 0.0
    %3016 = vmatprep.subr.mxu0 0.0
    %3017 = vmatpush1.msra.mxu0 0.0
    %3018 = vmatprep.subr.mxu0 0.0
    %3019 = vmatpush1.msra.mxu0 0.0
    %3020 = vmatprep.subr.mxu0 0.0
    %3021 = vmatpush1.msra.mxu0 0.0
    %3022 = vmatprep.subr.mxu0 0.0
    %3023 = vmatpush1.msra.mxu0 0.0
    %3024 = vmatprep.subr.mxu0 0.0
    %3025 = vmatpush1.msra.mxu0 0.0
    %3026 = vmatprep.mubr.f32.mxu0 0.0
    %3027 = vmatmul.mubr.f32.gmra.mrb[0].mxu0 %v2960
    %v3028 = vpop.f32.mrb[0].mxu0
    %v3029 = vadd.f32 %v1085, %v3028
    %v3030 = vpop.f32.mrb[0].mxu0
    %3031 = vdwg.mxu0
    %v3032 = vmax.f32 %v3029, 0.0
    %v3033 = vsel %vm1317, %v3032, -inf
    %3034 = vmax.xlane.f32.xlu0 %v3033
    %v3035 = vpop.xlane.xlu0 %3034
    %vm3036 = vcmp.ge.f32.partialorder %v3032, %v3035
    %v3037 = vsel %vm3036, %v47, 128
    %v3038 = vsel %vm1317, %v3037, 2147483647
    %v3039 = vand.u32 %v3038, 65535
    %v3040 = vshra.s32 %v3038, 16
    %v3041 = vcvt.s32.f32 %v3039
    %v3042 = vcvt.s32.f32 %v3040
    %3043 = vmin.xlane.f32.xlu0 %v3042
    %v3044 = vpop.xlane.xlu0 %3043
    %vm3045 = vcmp.eq.f32.partialorder %v3042, %v3044
    %v3046 = vsel %vm3045, %v3041, inf
    %3047 = vmin.xlane.f32.xlu0 %v3046
    %v3048 = vpop.xlane.xlu0 %3047
    %v3049 = vcvt.f32.s32 %v3048
    %v3050 = vcvt.f32.s32 %v3044
    %v3051 = vshll.u32 %v3050, 16
    %v3052 = vadd.s32 %v3051, %v3049
    %s3053 = vtos %v3052
    %s3054 = scalar_lea.smem [#allocation3], 8
    %3055 = sst [smem:[%s3054]] %s3053
    %v3057 = vrot.slane %v1562, 7
    %v3060 = vrot.slane %v1807, 6
    %v3063 = vrot.slane %v2052, 5
    %v3066 = vrot.slane %v2297, 4
    %v3069 = vrot.slane %v2542, 3
    %v3072 = vrot.slane %v2787, 2
    %v3075 = vrot.slane %v3032, 1
    %v3077 = vsel %vm1317, %v1316, %v3057
    %vm3078 = vcmask 1041408
    %v3079 = vsel %vm3078, %v3077, %v3060
    %vm3080 = vcmask 1042432
    %v3081 = vsel %vm3080, %v3079, %v3063
    %vm3082 = vcmask 1043456
    %v3083 = vsel %vm3082, %v3081, %v3066
    %vm3084 = vcmask 1044480
    %v3085 = vsel %vm3084, %v3083, %v3069
    %vm3086 = vcmask 1045504
    %v3087 = vsel %vm3086, %v3085, %v3072
    %vm3088 = vcmask 1046528
    %v3089 = vsel %vm3088, %v3087, %v3075
    %3090 = vst [vmem:[#allocation6] sm:$0xff] %v3089
    // Predicated region
    $region50: #{tpu_custom_call.1} parent=1 // pred_check
      _
    $region51: #{tpu_custom_call.1} parent=1 // pred_check_branch
      %3092 = sbr.rel (0) target = $region53
    $region52: #{tpu_custom_call.1} parent=1 // pred_region
      %s3094 = ssub.s32 16, 16
      %3095 = vsyncadd [#allocation5], %s3094
      %3098 = dma.smem_to_hbm [#allocation3], 16, %s12, [#allocation5]
    $region53: #{tpu_custom_call.1} parent=1 // pred_fallthru
      _
    // Predicated region
    $region54: #{tpu_custom_call.1} parent=1 // pred_check
      _
    $region55: #{tpu_custom_call.1} parent=1 // pred_check_branch
      %3100 = sbr.rel (0) target = $region57
    $region56: #{tpu_custom_call.1} parent=1 // pred_region
      %s3102 = ssub.s32 128, 128
      %3103 = vsyncadd [#allocation4], %s3102
      %s3105 = sshll.u32 [#allocation6], 4
      %s3106 = int_to_ptr.vmem [resolvable:$true] %s3105
      %3108 = dma.vmem_to_hbm [thread:$0]  %s3106, 128, %s13, [#allocation4]
    $region57: #{tpu_custom_call.1} parent=1 // pred_fallthru
      _
    // Predicated region
    $region58: #{tpu_custom_call.1} parent=1 // pred_check
      _
    $region59: #{tpu_custom_call.1} parent=1 // pred_check_branch
      %3110 = sbr.rel (0) target = $region61
    $region60: #{tpu_custom_call.1} parent=1 // pred_region
      %3111 = dma.done [#allocation5], 16
    $region61: #{tpu_custom_call.1} parent=1 // pred_fallthru
      _
    // Predicated region
    $region62: #{tpu_custom_call.1} parent=1 // pred_check
      _
    $region63: #{tpu_custom_call.1} parent=1 // pred_check_branch
      %3113 = sbr.rel (0) target = $region65
    $region64: #{tpu_custom_call.1} parent=1 // pred_region
      %3114 = dma.done [#allocation4], 128
    $region65: #{tpu_custom_call.1} parent=1 // pred_fallthru
      _
    %3115 = sfence
    %3116 = vsyncpa [#allocation4], 1
    %3117 = vsyncpa [#allocation5], 1

</llo_original>
